<compile_context>
chip_gen: v5e
topology: v5e:2x2
jax: 0.10.0
libtpu: 0.0.40
codegen_flags: <defaults>
</compile_context>

<pallas_src>
import functools

import jax
import jax.numpy as jnp
from jax.experimental import pallas as pl
from jax.experimental.pallas import tpu as pltpu


def _encoder_kernel(x_ref, w1_ref, b1_ref, w2_ref, b2_ref, out_ref):
    """One batch tile: Linear(D_in->H)+ReLU, Linear(H->D_out)+ReLU (dropout=id)."""
    x = x_ref[...]                       # [TILE_B, D_IN]   (D_IN tiny, e.g. 3)
    w1 = w1_ref[...]                     # [D_IN, H]
    d_in = x.shape[1]

    # Layer 1: contraction dim far too small for the MXU -> D_IN broadcast FMAs
    # on the VPU (outer-product accumulate), statically unrolled.
    # NOTE: fine for D_IN ~ 3; if D_IN grows toward 32+, switch to the MXU.
    h = x[:, 0:1] * w1[0:1, :]                       # [TILE_B, H]
    for j in range(1, d_in):
        h = h + x[:, j:j + 1] * w1[j:j + 1, :]
    h = jnp.maximum(h + b1_ref[...], 0.0)            # bias + ReLU (f32 on VPU)

    # Layer 2: [TILE_B, H] @ [H, D_OUT] on the MXU. HIGHEST precision (3-pass
    # bf16) gives exact-ish f32 parity with the PyTorch forward; MXU has slack.
    o = jnp.dot(h, w2_ref[...],
                preferred_element_type=jnp.float32,
                precision=jax.lax.Precision.HIGHEST)
    o = jnp.maximum(o + b2_ref[...], 0.0)
    out_ref[...] = o.astype(out_ref.dtype)           # D_OUT % 128 == 0 -> lane-dense stores


def _round_up(n, m):
    return ((n + m - 1) // m) * m


@functools.partial(jax.jit, static_argnames=("tile_b",))
def clinical_feature_encoder(x, w1, b1, w2, b2, *, tile_b=1024):
    """x: [B, D_in]; w1: [D_in, H]; b1: [H]; w2: [H, D_out]; b2: [D_out]."""
    B, d_in = x.shape
    H = w1.shape[1]
    D_out = w2.shape[1]
    b1 = b1.reshape(1, H)
    b2 = b2.reshape(1, D_out)

    # Effective batch tile: as large as requested, but never bigger than the
    # 8-row-aligned batch (one grid step for small problems). The output keeps
    # its true batch size; a partial final block is read-padded / write-masked
    # by Pallas, so no post-kernel slice (= no extra HBM copy) is needed.
    tile = min(tile_b, _round_up(B, 8))
    grid = pl.cdiv(B, tile)

    out = pl.pallas_call(
        _encoder_kernel,
        out_shape=jax.ShapeDtypeStruct((B, D_out), jnp.float32),
        grid=(grid,),
        in_specs=[
            pl.BlockSpec((tile, d_in), lambda i: (i, 0)),   # batch-tiled activations
            pl.BlockSpec((d_in, H), lambda i: (0, 0)),      # weights: VMEM-resident
            pl.BlockSpec((1, H), lambda i: (0, 0)),
            pl.BlockSpec((H, D_out), lambda i: (0, 0)),
            pl.BlockSpec((1, D_out), lambda i: (0, 0)),
        ],
        out_specs=pl.BlockSpec((tile, D_out), lambda i: (i, 0)),
        compiler_params=pltpu.CompilerParams(
            # Batch tiles are independent. ("parallel" is safe on all chips;
            # for an explicit 2-TC split on v7x, a leading size-2 grid axis or
            # CORE_PARALLEL could be used when grid length is even.)
            dimension_semantics=("parallel",)),
    )(x, w1, b1, w2, b2)
    return out


def _reference(x, w1, b1, w2, b2):
    hi = jax.lax.Precision.HIGHEST
    h = jnp.maximum(jnp.dot(x, w1, precision=hi) + b1.reshape(1, -1), 0.0)
    return jnp.maximum(jnp.dot(h, w2, precision=hi) + b2.reshape(1, -1), 0.0)


if __name__ == "__main__":
    # Module defaults: input_dim=3, hidden_dim=128, output_dim=256.
    D_IN, D_HID, D_OUT = 3, 128, 256

    key = jax.random.PRNGKey(0)
    kx, k1, k2, k3, k4 = jax.random.split(key, 5)

    # Deterministic synthetic parameters, shapes matching nn.Linear(3,128)/(128,256)
    # (stored transposed so the kernel computes plain x @ W + b).
    w1 = jax.random.normal(k1, (D_IN, D_HID), dtype=jnp.float32) * 0.1
    b1 = jax.random.normal(k2, (D_HID,), dtype=jnp.float32) * 0.01
    w2 = jax.random.normal(k3, (D_HID, D_OUT), dtype=jnp.float32) * 0.1
    b2 = jax.random.normal(k4, (D_OUT,), dtype=jnp.float32) * 0.01

    # (B, tile_b) cases: single big tile, multi-step grid, and a ragged batch
    # that exercises the masked partial final block (no out[:B] slice needed).
    cases = [(512, 1024), (512, 128), (77, 1024)]
    for B, tb in cases:
        x = jax.random.normal(jax.random.fold_in(kx, B * 7 + tb),
                              (B, D_IN), dtype=jnp.float32)
        out = jax.block_until_ready(
            clinical_feature_encoder(x, w1, b1, w2, b2, tile_b=tb))
        ref = _reference(x, w1, b1, w2, b2)
        assert out.shape == (B, D_OUT)
        err = float(jnp.max(jnp.abs(out - ref)))
        assert jnp.allclose(out, ref, atol=1e-3, rtol=1e-3), \
            f"B={B} tile_b={tb} max abs err = {err}"

    print("KERNEL_OK")
</pallas_src>

<mosaic_0001>
module attributes {stable_mosaic.version = 11 : i64} {
  func.func @_encoder_kernel(%arg0: i32, %arg1: memref<512x3xf32, #tpu.memory_space<vmem>>, %arg2: memref<3x128xf32, #tpu.memory_space<vmem>>, %arg3: memref<1x128xf32, #tpu.memory_space<vmem>>, %arg4: memref<128x256xf32, #tpu.memory_space<vmem>>, %arg5: memref<1x256xf32, #tpu.memory_space<vmem>>, %arg6: memref<512x256xf32, #tpu.memory_space<vmem>>) attributes {dimension_semantics = [#tpu.dimension_semantics<parallel>], iteration_bounds = array<i64: 1>, scalar_prefetch = 0 : i64, scratch_operands = 0 : i64, tpu.core_type = #tpu.core_type<tc>, window_params = [{transform_indices = @transform_0, window_bounds = array<i64: 512, 3>}, {pipeline_mode = #tpu.pipeline_mode<synchronous>, transform_indices = @transform_1, window_bounds = array<i64: 3, 128>}, {pipeline_mode = #tpu.pipeline_mode<synchronous>, transform_indices = @transform_2, window_bounds = array<i64: 1, 128>}, {pipeline_mode = #tpu.pipeline_mode<synchronous>, transform_indices = @transform_3, window_bounds = array<i64: 128, 256>}, {pipeline_mode = #tpu.pipeline_mode<synchronous>, transform_indices = @transform_4, window_bounds = array<i64: 1, 256>}, {transform_indices = @transform_5, window_bounds = array<i64: 512, 256>}]} {
    %c0 = arith.constant 0 : index
    %c0_0 = arith.constant 0 : index
    %0 = vector.load %arg1[%c0, %c0_0] : memref<512x3xf32, #tpu.memory_space<vmem>>, vector<512x3xf32>
    %c0_1 = arith.constant 0 : index
    %c0_2 = arith.constant 0 : index
    %1 = vector.load %arg2[%c0_1, %c0_2] : memref<3x128xf32, #tpu.memory_space<vmem>>, vector<3x128xf32>
    %2 = vector.extract_strided_slice %0 {offsets = [0, 0], sizes = [512, 1], strides = [1, 1]} : vector<512x3xf32> to vector<512x1xf32>
    %3 = vector.extract_strided_slice %1 {offsets = [0, 0], sizes = [1, 128], strides = [1, 1]} : vector<3x128xf32> to vector<1x128xf32>
    %4 = vector.broadcast %2 : vector<512x1xf32> to vector<512x128xf32>
    %5 = vector.broadcast %3 : vector<1x128xf32> to vector<512x128xf32>
    %6 = arith.mulf %4, %5 : vector<512x128xf32>
    %7 = vector.extract_strided_slice %0 {offsets = [0, 1], sizes = [512, 1], strides = [1, 1]} : vector<512x3xf32> to vector<512x1xf32>
    %8 = vector.extract_strided_slice %1 {offsets = [1, 0], sizes = [1, 128], strides = [1, 1]} : vector<3x128xf32> to vector<1x128xf32>
    %9 = vector.broadcast %7 : vector<512x1xf32> to vector<512x128xf32>
    %10 = vector.broadcast %8 : vector<1x128xf32> to vector<512x128xf32>
    %11 = arith.mulf %9, %10 : vector<512x128xf32>
    %12 = arith.addf %6, %11 : vector<512x128xf32>
    %13 = vector.extract_strided_slice %0 {offsets = [0, 2], sizes = [512, 1], strides = [1, 1]} : vector<512x3xf32> to vector<512x1xf32>
    %14 = vector.extract_strided_slice %1 {offsets = [2, 0], sizes = [1, 128], strides = [1, 1]} : vector<3x128xf32> to vector<1x128xf32>
    %15 = vector.broadcast %13 : vector<512x1xf32> to vector<512x128xf32>
    %16 = vector.broadcast %14 : vector<1x128xf32> to vector<512x128xf32>
    %17 = arith.mulf %15, %16 : vector<512x128xf32>
    %18 = arith.addf %12, %17 : vector<512x128xf32>
    %c0_3 = arith.constant 0 : index
    %c0_4 = arith.constant 0 : index
    %19 = vector.load %arg3[%c0_3, %c0_4] : memref<1x128xf32, #tpu.memory_space<vmem>>, vector<1x128xf32>
    %20 = vector.broadcast %19 : vector<1x128xf32> to vector<512x128xf32>
    %21 = arith.addf %18, %20 : vector<512x128xf32>
    %cst = arith.constant 0.000000e+00 : f32
    %22 = vector.broadcast %cst : f32 to vector<512x128xf32>
    %23 = arith.maximumf %21, %22 : vector<512x128xf32>
    %c0_5 = arith.constant 0 : index
    %c0_6 = arith.constant 0 : index
    %24 = vector.load %arg4[%c0_5, %c0_6] : memref<128x256xf32, #tpu.memory_space<vmem>>, vector<128x256xf32>
    %cst_7 = arith.constant dense<0.000000e+00> : vector<512x256xf32>
    %25 = tpu.matmul %23, %24, %cst_7 {dimension_numbers = #tpu.dot_dimension_numbers<[1], [0], [0], [1], [0, 0, 1, 1], [], []>, precision = #tpu.contract_precision<fp32>} : vector<512x128xf32>, vector<128x256xf32>, vector<512x256xf32> -> vector<512x256xf32>
    %c0_8 = arith.constant 0 : index
    %c0_9 = arith.constant 0 : index
    %26 = vector.load %arg5[%c0_8, %c0_9] : memref<1x256xf32, #tpu.memory_space<vmem>>, vector<1x256xf32>
    %27 = vector.broadcast %26 : vector<1x256xf32> to vector<512x256xf32>
    %28 = arith.addf %25, %27 : vector<512x256xf32>
    %cst_10 = arith.constant 0.000000e+00 : f32
    %29 = vector.broadcast %cst_10 : f32 to vector<512x256xf32>
    %30 = arith.maximumf %28, %29 : vector<512x256xf32>
    %c0_11 = arith.constant 0 : index
    %c0_12 = arith.constant 0 : index
    %31 = vector.load %arg6[%c0_11, %c0_12] : memref<512x256xf32, #tpu.memory_space<vmem>>, vector<512x256xf32>
    tpu.vector_store %arg6[%c0_11, %c0_12], %30 {strides = array<i32>} : memref<512x256xf32, #tpu.memory_space<vmem>>, vector<512x256xf32>,
    return
  }
  func.func @transform_0(%arg0: i32) -> (i32, i32) {
    %c0_i32 = arith.constant 0 : i32
    %c0_i32_0 = arith.constant 0 : i32
    return %arg0, %c0_i32 : i32, i32
  }
  func.func @transform_1(%arg0: i32) -> (i32, i32) {
    %c0_i32 = arith.constant 0 : i32
    %c0_i32_0 = arith.constant 0 : i32
    %c0_i32_1 = arith.constant 0 : i32
    return %c0_i32, %c0_i32_0 : i32, i32
  }
  func.func @transform_2(%arg0: i32) -> (i32, i32) {
    %c0_i32 = arith.constant 0 : i32
    %c0_i32_0 = arith.constant 0 : i32
    %c0_i32_1 = arith.constant 0 : i32
    return %c0_i32, %c0_i32_0 : i32, i32
  }
  func.func @transform_3(%arg0: i32) -> (i32, i32) {
    %c0_i32 = arith.constant 0 : i32
    %c0_i32_0 = arith.constant 0 : i32
    %c0_i32_1 = arith.constant 0 : i32
    return %c0_i32, %c0_i32_0 : i32, i32
  }
  func.func @transform_4(%arg0: i32) -> (i32, i32) {
    %c0_i32 = arith.constant 0 : i32
    %c0_i32_0 = arith.constant 0 : i32
    %c0_i32_1 = arith.constant 0 : i32
    return %c0_i32, %c0_i32_0 : i32, i32
  }
  func.func @transform_5(%arg0: i32) -> (i32, i32) {
    %c0_i32 = arith.constant 0 : i32
    %c0_i32_0 = arith.constant 0 : i32
    return %arg0, %c0_i32 : i32, i32
  }
}

</mosaic_0001>

<llo_original>
// kernel: clinical_feature_encoder.1
$region0: #{clinical_feature_encoder.1}
  #allocation0 [shape = 'u32[]', space=smem, size = 0x4, offset = 0x4, fixed_abs, tag = 'smem constant byte address 0x4 - core index']
  #allocation1 [shape = 'u32[72,128]{1,0:T(1,128)}', space=vmem, size = 0x9000, scoped, tag = 'internal scratch']
  %s0 = inlined_call_operand.vmem [shape: f32[512,3], index: 0, kind: input, shape index: {}]
  %s1 = inlined_call_operand.vmem [shape: f32[3,128], index: 1, kind: input, shape index: {}]
  %s2 = inlined_call_operand.vmem [shape: f32[1,128], index: 2, kind: input, shape index: {}]
  %s3 = inlined_call_operand.vmem [shape: f32[128,256], index: 3, kind: input, shape index: {}]
  %s4 = inlined_call_operand.vmem [shape: f32[1,256], index: 4, kind: input, shape index: {}]
  %s5 = inlined_call_operand.hbm [shape: f32[512,256], index: 5, kind: output, shape index: {}]
  %s6 = sld [smem:[#allocation0]]
  $region30: #{clinical_feature_encoder.1} parent=0
    _
  %s8 = ssub.s32 1, %s6
  %s9 = scalar_select 0, %s8, %s6
  $region1: #{clinical_feature_encoder.1} parent=0
    #allocation2 [shape = 'u8[524288]{0}', space=vmem, size = 0x80000, scoped, tag = 'output window, operand 0, single buffered']
    #allocation3 [shape = 's32[1]{0}', space=sflag, size = 0x4, scoped, tag = 'scoped memory for clinical_feature_encoder.1']
    %10 = vsyncpa [#allocation3], 0
    // Predicated region
    $region2: #{clinical_feature_encoder.1} parent=1 // pred_check
      _
    $region3: #{clinical_feature_encoder.1} parent=1 // pred_check_branch
      %12 = sbr.rel (0) target = $region5
    $region4: #{clinical_feature_encoder.1} parent=1 // pred_region
      _
    $region5: #{clinical_feature_encoder.1} parent=1 // pred_fallthru
      _
    // Predicated region
    $region6: #{clinical_feature_encoder.1} parent=1 // pred_check
      _
    $region7: #{clinical_feature_encoder.1} parent=1 // pred_check_branch
      %14 = sbr.rel (0) target = $region9
    $region8: #{clinical_feature_encoder.1} parent=1 // pred_region
      _
    $region9: #{clinical_feature_encoder.1} parent=1 // pred_fallthru
      _
    // Predicated region
    $region10: #{clinical_feature_encoder.1} parent=1 // pred_check
      _
    $region11: #{clinical_feature_encoder.1} parent=1 // pred_check_branch
      %16 = sbr.rel (0) target = $region13
    $region12: #{clinical_feature_encoder.1} parent=1 // pred_region
      _
    $region13: #{clinical_feature_encoder.1} parent=1 // pred_fallthru
      _
    // Predicated region
    $region14: #{clinical_feature_encoder.1} parent=1 // pred_check
      _
    $region15: #{clinical_feature_encoder.1} parent=1 // pred_check_branch
      %18 = sbr.rel (0) target = $region17
    $region16: #{clinical_feature_encoder.1} parent=1 // pred_region
      _
    $region17: #{clinical_feature_encoder.1} parent=1 // pred_fallthru
      _
    // Predicated region
    $region18: #{clinical_feature_encoder.1} parent=1 // pred_check
      _
    $region19: #{clinical_feature_encoder.1} parent=1 // pred_check_branch
      %20 = sbr.rel (0) target = $region21
    $region20: #{clinical_feature_encoder.1} parent=1 // pred_region
      _
    $region21: #{clinical_feature_encoder.1} parent=1 // pred_fallthru
      _
    %v21 = vld [vmem:[%s0] sm:$0xff]
    %v22 = vld [vmem:[%s0 + $0x8] sm:$0xff]
    %v23 = vld [vmem:[%s0 + $0x10] sm:$0xff]
    %v24 = vld [vmem:[%s0 + $0x18] sm:$0xff]
    %v25 = vld [vmem:[%s0 + $0x20] sm:$0xff]
    %v26 = vld [vmem:[%s0 + $0x28] sm:$0xff]
    %v27 = vld [vmem:[%s0 + $0x30] sm:$0xff]
    %v28 = vld [vmem:[%s0 + $0x38] sm:$0xff]
    %v29 = vld [vmem:[%s0 + $0x40] sm:$0xff]
    %v30 = vld [vmem:[%s0 + $0x48] sm:$0xff]
    %v31 = vld [vmem:[%s0 + $0x50] sm:$0xff]
    %v32 = vld [vmem:[%s0 + $0x58] sm:$0xff]
    %v33 = vld [vmem:[%s0 + $0x60] sm:$0xff]
    %v34 = vld [vmem:[%s0 + $0x68] sm:$0xff]
    %v35 = vld [vmem:[%s0 + $0x70] sm:$0xff]
    %v36 = vld [vmem:[%s0 + $0x78] sm:$0xff]
    %v37 = vld [vmem:[%s0 + $0x80] sm:$0xff]
    %v38 = vld [vmem:[%s0 + $0x88] sm:$0xff]
    %v39 = vld [vmem:[%s0 + $0x90] sm:$0xff]
    %v40 = vld [vmem:[%s0 + $0x98] sm:$0xff]
    %v41 = vld [vmem:[%s0 + $0xa0] sm:$0xff]
    %v42 = vld [vmem:[%s0 + $0xa8] sm:$0xff]
    %v43 = vld [vmem:[%s0 + $0xb0] sm:$0xff]
    %v44 = vld [vmem:[%s0 + $0xb8] sm:$0xff]
    %v45 = vld [vmem:[%s0 + $0xc0] sm:$0xff]
    %v46 = vld [vmem:[%s0 + $0xc8] sm:$0xff]
    %v47 = vld [vmem:[%s0 + $0xd0] sm:$0xff]
    %v48 = vld [vmem:[%s0 + $0xd8] sm:$0xff]
    %v49 = vld [vmem:[%s0 + $0xe0] sm:$0xff]
    %v50 = vld [vmem:[%s0 + $0xe8] sm:$0xff]
    %v51 = vld [vmem:[%s0 + $0xf0] sm:$0xff]
    %v52 = vld [vmem:[%s0 + $0xf8] sm:$0xff]
    %v53 = vld [vmem:[%s0 + $0x100] sm:$0xff]
    %v54 = vld [vmem:[%s0 + $0x108] sm:$0xff]
    %v55 = vld [vmem:[%s0 + $0x110] sm:$0xff]
    %v56 = vld [vmem:[%s0 + $0x118] sm:$0xff]
    %v57 = vld [vmem:[%s0 + $0x120] sm:$0xff]
    %v58 = vld [vmem:[%s0 + $0x128] sm:$0xff]
    %v59 = vld [vmem:[%s0 + $0x130] sm:$0xff]
    %v60 = vld [vmem:[%s0 + $0x138] sm:$0xff]
    %v61 = vld [vmem:[%s0 + $0x140] sm:$0xff]
    %v62 = vld [vmem:[%s0 + $0x148] sm:$0xff]
    %v63 = vld [vmem:[%s0 + $0x150] sm:$0xff]
    %v64 = vld [vmem:[%s0 + $0x158] sm:$0xff]
    %v65 = vld [vmem:[%s0 + $0x160] sm:$0xff]
    %v66 = vld [vmem:[%s0 + $0x168] sm:$0xff]
    %v67 = vld [vmem:[%s0 + $0x170] sm:$0xff]
    %v68 = vld [vmem:[%s0 + $0x178] sm:$0xff]
    %v69 = vld [vmem:[%s0 + $0x180] sm:$0xff]
    %v70 = vld [vmem:[%s0 + $0x188] sm:$0xff]
    %v71 = vld [vmem:[%s0 + $0x190] sm:$0xff]
    %v72 = vld [vmem:[%s0 + $0x198] sm:$0xff]
    %v73 = vld [vmem:[%s0 + $0x1a0] sm:$0xff]
    %v74 = vld [vmem:[%s0 + $0x1a8] sm:$0xff]
    %v75 = vld [vmem:[%s0 + $0x1b0] sm:$0xff]
    %v76 = vld [vmem:[%s0 + $0x1b8] sm:$0xff]
    %v77 = vld [vmem:[%s0 + $0x1c0] sm:$0xff]
    %v78 = vld [vmem:[%s0 + $0x1c8] sm:$0xff]
    %v79 = vld [vmem:[%s0 + $0x1d0] sm:$0xff]
    %v80 = vld [vmem:[%s0 + $0x1d8] sm:$0xff]
    %v81 = vld [vmem:[%s0 + $0x1e0] sm:$0xff]
    %v82 = vld [vmem:[%s0 + $0x1e8] sm:$0xff]
    %v83 = vld [vmem:[%s0 + $0x1f0] sm:$0xff]
    %v84 = vld [vmem:[%s0 + $0x1f8] sm:$0xff]
    %v85 = vld [vmem:[%s1] sm:$0x7]
    %87 = vset.pattern.permute.xlu0 0
    %88 = vperm.xlu0 %87, %v21
    %v89 = vpop.permute.xlu0 %88
    %92 = vset.pattern.permute.xlu0 0
    %93 = vperm.xlu0 %92, %v22
    %v94 = vpop.permute.xlu0 %93
    %97 = vset.pattern.permute.xlu0 0
    %98 = vperm.xlu0 %97, %v23
    %v99 = vpop.permute.xlu0 %98
    %102 = vset.pattern.permute.xlu0 0
    %103 = vperm.xlu0 %102, %v24
    %v104 = vpop.permute.xlu0 %103
    %107 = vset.pattern.permute.xlu0 0
    %108 = vperm.xlu0 %107, %v25
    %v109 = vpop.permute.xlu0 %108
    %112 = vset.pattern.permute.xlu0 0
    %113 = vperm.xlu0 %112, %v26
    %v114 = vpop.permute.xlu0 %113
    %117 = vset.pattern.permute.xlu0 0
    %118 = vperm.xlu0 %117, %v27
    %v119 = vpop.permute.xlu0 %118
    %122 = vset.pattern.permute.xlu0 0
    %123 = vperm.xlu0 %122, %v28
    %v124 = vpop.permute.xlu0 %123
    %127 = vset.pattern.permute.xlu0 0
    %128 = vperm.xlu0 %127, %v29
    %v129 = vpop.permute.xlu0 %128
    %132 = vset.pattern.permute.xlu0 0
    %133 = vperm.xlu0 %132, %v30
    %v134 = vpop.permute.xlu0 %133
    %137 = vset.pattern.permute.xlu0 0
    %138 = vperm.xlu0 %137, %v31
    %v139 = vpop.permute.xlu0 %138
    %142 = vset.pattern.permute.xlu0 0
    %143 = vperm.xlu0 %142, %v32
    %v144 = vpop.permute.xlu0 %143
    %147 = vset.pattern.permute.xlu0 0
    %148 = vperm.xlu0 %147, %v33
    %v149 = vpop.permute.xlu0 %148
    %152 = vset.pattern.permute.xlu0 0
    %153 = vperm.xlu0 %152, %v34
    %v154 = vpop.permute.xlu0 %153
    %157 = vset.pattern.permute.xlu0 0
    %158 = vperm.xlu0 %157, %v35
    %v159 = vpop.permute.xlu0 %158
    %162 = vset.pattern.permute.xlu0 0
    %163 = vperm.xlu0 %162, %v36
    %v164 = vpop.permute.xlu0 %163
    %167 = vset.pattern.permute.xlu0 0
    %168 = vperm.xlu0 %167, %v37
    %v169 = vpop.permute.xlu0 %168
    %172 = vset.pattern.permute.xlu0 0
    %173 = vperm.xlu0 %172, %v38
    %v174 = vpop.permute.xlu0 %173
    %177 = vset.pattern.permute.xlu0 0
    %178 = vperm.xlu0 %177, %v39
    %v179 = vpop.permute.xlu0 %178
    %182 = vset.pattern.permute.xlu0 0
    %183 = vperm.xlu0 %182, %v40
    %v184 = vpop.permute.xlu0 %183
    %187 = vset.pattern.permute.xlu0 0
    %188 = vperm.xlu0 %187, %v41
    %v189 = vpop.permute.xlu0 %188
    %192 = vset.pattern.permute.xlu0 0
    %193 = vperm.xlu0 %192, %v42
    %v194 = vpop.permute.xlu0 %193
    %197 = vset.pattern.permute.xlu0 0
    %198 = vperm.xlu0 %197, %v43
    %v199 = vpop.permute.xlu0 %198
    %202 = vset.pattern.permute.xlu0 0
    %203 = vperm.xlu0 %202, %v44
    %v204 = vpop.permute.xlu0 %203
    %207 = vset.pattern.permute.xlu0 0
    %208 = vperm.xlu0 %207, %v45
    %v209 = vpop.permute.xlu0 %208
    %212 = vset.pattern.permute.xlu0 0
    %213 = vperm.xlu0 %212, %v46
    %v214 = vpop.permute.xlu0 %213
    %217 = vset.pattern.permute.xlu0 0
    %218 = vperm.xlu0 %217, %v47
    %v219 = vpop.permute.xlu0 %218
    %222 = vset.pattern.permute.xlu0 0
    %223 = vperm.xlu0 %222, %v48
    %v224 = vpop.permute.xlu0 %223
    %227 = vset.pattern.permute.xlu0 0
    %228 = vperm.xlu0 %227, %v49
    %v229 = vpop.permute.xlu0 %228
    %232 = vset.pattern.permute.xlu0 0
    %233 = vperm.xlu0 %232, %v50
    %v234 = vpop.permute.xlu0 %233
    %237 = vset.pattern.permute.xlu0 0
    %238 = vperm.xlu0 %237, %v51
    %v239 = vpop.permute.xlu0 %238
    %242 = vset.pattern.permute.xlu0 0
    %243 = vperm.xlu0 %242, %v52
    %v244 = vpop.permute.xlu0 %243
    %247 = vset.pattern.permute.xlu0 0
    %248 = vperm.xlu0 %247, %v53
    %v249 = vpop.permute.xlu0 %248
    %252 = vset.pattern.permute.xlu0 0
    %253 = vperm.xlu0 %252, %v54
    %v254 = vpop.permute.xlu0 %253
    %257 = vset.pattern.permute.xlu0 0
    %258 = vperm.xlu0 %257, %v55
    %v259 = vpop.permute.xlu0 %258
    %262 = vset.pattern.permute.xlu0 0
    %263 = vperm.xlu0 %262, %v56
    %v264 = vpop.permute.xlu0 %263
    %267 = vset.pattern.permute.xlu0 0
    %268 = vperm.xlu0 %267, %v57
    %v269 = vpop.permute.xlu0 %268
    %272 = vset.pattern.permute.xlu0 0
    %273 = vperm.xlu0 %272, %v58
    %v274 = vpop.permute.xlu0 %273
    %277 = vset.pattern.permute.xlu0 0
    %278 = vperm.xlu0 %277, %v59
    %v279 = vpop.permute.xlu0 %278
    %282 = vset.pattern.permute.xlu0 0
    %283 = vperm.xlu0 %282, %v60
    %v284 = vpop.permute.xlu0 %283
    %287 = vset.pattern.permute.xlu0 0
    %288 = vperm.xlu0 %287, %v61
    %v289 = vpop.permute.xlu0 %288
    %292 = vset.pattern.permute.xlu0 0
    %293 = vperm.xlu0 %292, %v62
    %v294 = vpop.permute.xlu0 %293
    %297 = vset.pattern.permute.xlu0 0
    %298 = vperm.xlu0 %297, %v63
    %v299 = vpop.permute.xlu0 %298
    %302 = vset.pattern.permute.xlu0 0
    %303 = vperm.xlu0 %302, %v64
    %v304 = vpop.permute.xlu0 %303
    %307 = vset.pattern.permute.xlu0 0
    %308 = vperm.xlu0 %307, %v65
    %v309 = vpop.permute.xlu0 %308
    %312 = vset.pattern.permute.xlu0 0
    %313 = vperm.xlu0 %312, %v66
    %v314 = vpop.permute.xlu0 %313
    %317 = vset.pattern.permute.xlu0 0
    %318 = vperm.xlu0 %317, %v67
    %v319 = vpop.permute.xlu0 %318
    %322 = vset.pattern.permute.xlu0 0
    %323 = vperm.xlu0 %322, %v68
    %v324 = vpop.permute.xlu0 %323
    %327 = vset.pattern.permute.xlu0 0
    %328 = vperm.xlu0 %327, %v69
    %v329 = vpop.permute.xlu0 %328
    %332 = vset.pattern.permute.xlu0 0
    %333 = vperm.xlu0 %332, %v70
    %v334 = vpop.permute.xlu0 %333
    %337 = vset.pattern.permute.xlu0 0
    %338 = vperm.xlu0 %337, %v71
    %v339 = vpop.permute.xlu0 %338
    %342 = vset.pattern.permute.xlu0 0
    %343 = vperm.xlu0 %342, %v72
    %v344 = vpop.permute.xlu0 %343
    %347 = vset.pattern.permute.xlu0 0
    %348 = vperm.xlu0 %347, %v73
    %v349 = vpop.permute.xlu0 %348
    %352 = vset.pattern.permute.xlu0 0
    %353 = vperm.xlu0 %352, %v74
    %v354 = vpop.permute.xlu0 %353
    %357 = vset.pattern.permute.xlu0 0
    %358 = vperm.xlu0 %357, %v75
    %v359 = vpop.permute.xlu0 %358
    %362 = vset.pattern.permute.xlu0 0
    %363 = vperm.xlu0 %362, %v76
    %v364 = vpop.permute.xlu0 %363
    %367 = vset.pattern.permute.xlu0 0
    %368 = vperm.xlu0 %367, %v77
    %v369 = vpop.permute.xlu0 %368
    %372 = vset.pattern.permute.xlu0 0
    %373 = vperm.xlu0 %372, %v78
    %v374 = vpop.permute.xlu0 %373
    %377 = vset.pattern.permute.xlu0 0
    %378 = vperm.xlu0 %377, %v79
    %v379 = vpop.permute.xlu0 %378
    %382 = vset.pattern.permute.xlu0 0
    %383 = vperm.xlu0 %382, %v80
    %v384 = vpop.permute.xlu0 %383
    %387 = vset.pattern.permute.xlu0 0
    %388 = vperm.xlu0 %387, %v81
    %v389 = vpop.permute.xlu0 %388
    %392 = vset.pattern.permute.xlu0 0
    %393 = vperm.xlu0 %392, %v82
    %v394 = vpop.permute.xlu0 %393
    %397 = vset.pattern.permute.xlu0 0
    %398 = vperm.xlu0 %397, %v83
    %v399 = vpop.permute.xlu0 %398
    %402 = vset.pattern.permute.xlu0 0
    %403 = vperm.xlu0 %402, %v84
    %v404 = vpop.permute.xlu0 %403
    %v406 = vperm.slane %v85, 0
    %v407 = vmul.f32 %v89, %v406
    %v408 = vmul.f32 %v94, %v406
    %v409 = vmul.f32 %v99, %v406
    %v410 = vmul.f32 %v104, %v406
    %v411 = vmul.f32 %v109, %v406
    %v412 = vmul.f32 %v114, %v406
    %v413 = vmul.f32 %v119, %v406
    %v414 = vmul.f32 %v124, %v406
    %v415 = vmul.f32 %v129, %v406
    %v416 = vmul.f32 %v134, %v406
    %v417 = vmul.f32 %v139, %v406
    %v418 = vmul.f32 %v144, %v406
    %v419 = vmul.f32 %v149, %v406
    %v420 = vmul.f32 %v154, %v406
    %v421 = vmul.f32 %v159, %v406
    %v422 = vmul.f32 %v164, %v406
    %v423 = vmul.f32 %v169, %v406
    %v424 = vmul.f32 %v174, %v406
    %v425 = vmul.f32 %v179, %v406
    %v426 = vmul.f32 %v184, %v406
    %v427 = vmul.f32 %v189, %v406
    %v428 = vmul.f32 %v194, %v406
    %v429 = vmul.f32 %v199, %v406
    %v430 = vmul.f32 %v204, %v406
    %v431 = vmul.f32 %v209, %v406
    %v432 = vmul.f32 %v214, %v406
    %v433 = vmul.f32 %v219, %v406
    %v434 = vmul.f32 %v224, %v406
    %v435 = vmul.f32 %v229, %v406
    %v436 = vmul.f32 %v234, %v406
    %v437 = vmul.f32 %v239, %v406
    %v438 = vmul.f32 %v244, %v406
    %v439 = vmul.f32 %v249, %v406
    %v440 = vmul.f32 %v254, %v406
    %v441 = vmul.f32 %v259, %v406
    %v442 = vmul.f32 %v264, %v406
    %v443 = vmul.f32 %v269, %v406
    %v444 = vmul.f32 %v274, %v406
    %v445 = vmul.f32 %v279, %v406
    %v446 = vmul.f32 %v284, %v406
    %v447 = vmul.f32 %v289, %v406
    %v448 = vmul.f32 %v294, %v406
    %v449 = vmul.f32 %v299, %v406
    %v450 = vmul.f32 %v304, %v406
    %v451 = vmul.f32 %v309, %v406
    %v452 = vmul.f32 %v314, %v406
    %v453 = vmul.f32 %v319, %v406
    %v454 = vmul.f32 %v324, %v406
    %v455 = vmul.f32 %v329, %v406
    %v456 = vmul.f32 %v334, %v406
    %v457 = vmul.f32 %v339, %v406
    %v458 = vmul.f32 %v344, %v406
    %v459 = vmul.f32 %v349, %v406
    %v460 = vmul.f32 %v354, %v406
    %v461 = vmul.f32 %v359, %v406
    %v462 = vmul.f32 %v364, %v406
    %v463 = vmul.f32 %v369, %v406
    %v464 = vmul.f32 %v374, %v406
    %v465 = vmul.f32 %v379, %v406
    %v466 = vmul.f32 %v384, %v406
    %v467 = vmul.f32 %v389, %v406
    %v468 = vmul.f32 %v394, %v406
    %v469 = vmul.f32 %v399, %v406
    %v470 = vmul.f32 %v404, %v406
    %471 = vset.pattern.permute.xlu0 1
    %472 = vperm.xlu0 %471, %v21
    %v473 = vpop.permute.xlu0 %472
    %475 = vset.pattern.permute.xlu0 1
    %476 = vperm.xlu0 %475, %v22
    %v477 = vpop.permute.xlu0 %476
    %479 = vset.pattern.permute.xlu0 1
    %480 = vperm.xlu0 %479, %v23
    %v481 = vpop.permute.xlu0 %480
    %483 = vset.pattern.permute.xlu0 1
    %484 = vperm.xlu0 %483, %v24
    %v485 = vpop.permute.xlu0 %484
    %487 = vset.pattern.permute.xlu0 1
    %488 = vperm.xlu0 %487, %v25
    %v489 = vpop.permute.xlu0 %488
    %491 = vset.pattern.permute.xlu0 1
    %492 = vperm.xlu0 %491, %v26
    %v493 = vpop.permute.xlu0 %492
    %495 = vset.pattern.permute.xlu0 1
    %496 = vperm.xlu0 %495, %v27
    %v497 = vpop.permute.xlu0 %496
    %499 = vset.pattern.permute.xlu0 1
    %500 = vperm.xlu0 %499, %v28
    %v501 = vpop.permute.xlu0 %500
    %503 = vset.pattern.permute.xlu0 1
    %504 = vperm.xlu0 %503, %v29
    %v505 = vpop.permute.xlu0 %504
    %507 = vset.pattern.permute.xlu0 1
    %508 = vperm.xlu0 %507, %v30
    %v509 = vpop.permute.xlu0 %508
    %511 = vset.pattern.permute.xlu0 1
    %512 = vperm.xlu0 %511, %v31
    %v513 = vpop.permute.xlu0 %512
    %515 = vset.pattern.permute.xlu0 1
    %516 = vperm.xlu0 %515, %v32
    %v517 = vpop.permute.xlu0 %516
    %519 = vset.pattern.permute.xlu0 1
    %520 = vperm.xlu0 %519, %v33
    %v521 = vpop.permute.xlu0 %520
    %523 = vset.pattern.permute.xlu0 1
    %524 = vperm.xlu0 %523, %v34
    %v525 = vpop.permute.xlu0 %524
    %527 = vset.pattern.permute.xlu0 1
    %528 = vperm.xlu0 %527, %v35
    %v529 = vpop.permute.xlu0 %528
    %531 = vset.pattern.permute.xlu0 1
    %532 = vperm.xlu0 %531, %v36
    %v533 = vpop.permute.xlu0 %532
    %535 = vset.pattern.permute.xlu0 1
    %536 = vperm.xlu0 %535, %v37
    %v537 = vpop.permute.xlu0 %536
    %539 = vset.pattern.permute.xlu0 1
    %540 = vperm.xlu0 %539, %v38
    %v541 = vpop.permute.xlu0 %540
    %543 = vset.pattern.permute.xlu0 1
    %544 = vperm.xlu0 %543, %v39
    %v545 = vpop.permute.xlu0 %544
    %547 = vset.pattern.permute.xlu0 1
    %548 = vperm.xlu0 %547, %v40
    %v549 = vpop.permute.xlu0 %548
    %551 = vset.pattern.permute.xlu0 1
    %552 = vperm.xlu0 %551, %v41
    %v553 = vpop.permute.xlu0 %552
    %555 = vset.pattern.permute.xlu0 1
    %556 = vperm.xlu0 %555, %v42
    %v557 = vpop.permute.xlu0 %556
    %559 = vset.pattern.permute.xlu0 1
    %560 = vperm.xlu0 %559, %v43
    %v561 = vpop.permute.xlu0 %560
    %563 = vset.pattern.permute.xlu0 1
    %564 = vperm.xlu0 %563, %v44
    %v565 = vpop.permute.xlu0 %564
    %567 = vset.pattern.permute.xlu0 1
    %568 = vperm.xlu0 %567, %v45
    %v569 = vpop.permute.xlu0 %568
    %571 = vset.pattern.permute.xlu0 1
    %572 = vperm.xlu0 %571, %v46
    %v573 = vpop.permute.xlu0 %572
    %575 = vset.pattern.permute.xlu0 1
    %576 = vperm.xlu0 %575, %v47
    %v577 = vpop.permute.xlu0 %576
    %579 = vset.pattern.permute.xlu0 1
    %580 = vperm.xlu0 %579, %v48
    %v581 = vpop.permute.xlu0 %580
    %583 = vset.pattern.permute.xlu0 1
    %584 = vperm.xlu0 %583, %v49
    %v585 = vpop.permute.xlu0 %584
    %587 = vset.pattern.permute.xlu0 1
    %588 = vperm.xlu0 %587, %v50
    %v589 = vpop.permute.xlu0 %588
    %591 = vset.pattern.permute.xlu0 1
    %592 = vperm.xlu0 %591, %v51
    %v593 = vpop.permute.xlu0 %592
    %595 = vset.pattern.permute.xlu0 1
    %596 = vperm.xlu0 %595, %v52
    %v597 = vpop.permute.xlu0 %596
    %599 = vset.pattern.permute.xlu0 1
    %600 = vperm.xlu0 %599, %v53
    %v601 = vpop.permute.xlu0 %600
    %603 = vset.pattern.permute.xlu0 1
    %604 = vperm.xlu0 %603, %v54
    %v605 = vpop.permute.xlu0 %604
    %607 = vset.pattern.permute.xlu0 1
    %608 = vperm.xlu0 %607, %v55
    %v609 = vpop.permute.xlu0 %608
    %611 = vset.pattern.permute.xlu0 1
    %612 = vperm.xlu0 %611, %v56
    %v613 = vpop.permute.xlu0 %612
    %615 = vset.pattern.permute.xlu0 1
    %616 = vperm.xlu0 %615, %v57
    %v617 = vpop.permute.xlu0 %616
    %619 = vset.pattern.permute.xlu0 1
    %620 = vperm.xlu0 %619, %v58
    %v621 = vpop.permute.xlu0 %620
    %623 = vset.pattern.permute.xlu0 1
    %624 = vperm.xlu0 %623, %v59
    %v625 = vpop.permute.xlu0 %624
    %627 = vset.pattern.permute.xlu0 1
    %628 = vperm.xlu0 %627, %v60
    %v629 = vpop.permute.xlu0 %628
    %631 = vset.pattern.permute.xlu0 1
    %632 = vperm.xlu0 %631, %v61
    %v633 = vpop.permute.xlu0 %632
    %635 = vset.pattern.permute.xlu0 1
    %636 = vperm.xlu0 %635, %v62
    %v637 = vpop.permute.xlu0 %636
    %639 = vset.pattern.permute.xlu0 1
    %640 = vperm.xlu0 %639, %v63
    %v641 = vpop.permute.xlu0 %640
    %643 = vset.pattern.permute.xlu0 1
    %644 = vperm.xlu0 %643, %v64
    %v645 = vpop.permute.xlu0 %644
    %647 = vset.pattern.permute.xlu0 1
    %648 = vperm.xlu0 %647, %v65
    %v649 = vpop.permute.xlu0 %648
    %651 = vset.pattern.permute.xlu0 1
    %652 = vperm.xlu0 %651, %v66
    %v653 = vpop.permute.xlu0 %652
    %655 = vset.pattern.permute.xlu0 1
    %656 = vperm.xlu0 %655, %v67
    %v657 = vpop.permute.xlu0 %656
    %659 = vset.pattern.permute.xlu0 1
    %660 = vperm.xlu0 %659, %v68
    %v661 = vpop.permute.xlu0 %660
    %663 = vset.pattern.permute.xlu0 1
    %664 = vperm.xlu0 %663, %v69
    %v665 = vpop.permute.xlu0 %664
    %667 = vset.pattern.permute.xlu0 1
    %668 = vperm.xlu0 %667, %v70
    %v669 = vpop.permute.xlu0 %668
    %671 = vset.pattern.permute.xlu0 1
    %672 = vperm.xlu0 %671, %v71
    %v673 = vpop.permute.xlu0 %672
    %675 = vset.pattern.permute.xlu0 1
    %676 = vperm.xlu0 %675, %v72
    %v677 = vpop.permute.xlu0 %676
    %679 = vset.pattern.permute.xlu0 1
    %680 = vperm.xlu0 %679, %v73
    %v681 = vpop.permute.xlu0 %680
    %683 = vset.pattern.permute.xlu0 1
    %684 = vperm.xlu0 %683, %v74
    %v685 = vpop.permute.xlu0 %684
    %687 = vset.pattern.permute.xlu0 1
    %688 = vperm.xlu0 %687, %v75
    %v689 = vpop.permute.xlu0 %688
    %691 = vset.pattern.permute.xlu0 1
    %692 = vperm.xlu0 %691, %v76
    %v693 = vpop.permute.xlu0 %692
    %695 = vset.pattern.permute.xlu0 1
    %696 = vperm.xlu0 %695, %v77
    %v697 = vpop.permute.xlu0 %696
    %699 = vset.pattern.permute.xlu0 1
    %700 = vperm.xlu0 %699, %v78
    %v701 = vpop.permute.xlu0 %700
    %703 = vset.pattern.permute.xlu0 1
    %704 = vperm.xlu0 %703, %v79
    %v705 = vpop.permute.xlu0 %704
    %707 = vset.pattern.permute.xlu0 1
    %708 = vperm.xlu0 %707, %v80
    %v709 = vpop.permute.xlu0 %708
    %711 = vset.pattern.permute.xlu0 1
    %712 = vperm.xlu0 %711, %v81
    %v713 = vpop.permute.xlu0 %712
    %715 = vset.pattern.permute.xlu0 1
    %716 = vperm.xlu0 %715, %v82
    %v717 = vpop.permute.xlu0 %716
    %719 = vset.pattern.permute.xlu0 1
    %720 = vperm.xlu0 %719, %v83
    %v721 = vpop.permute.xlu0 %720
    %723 = vset.pattern.permute.xlu0 1
    %724 = vperm.xlu0 %723, %v84
    %v725 = vpop.permute.xlu0 %724
    %v727 = vperm.slane %v85, 1
    %v728 = vmul.f32 %v473, %v727
    %v729 = vmul.f32 %v477, %v727
    %v730 = vmul.f32 %v481, %v727
    %v731 = vmul.f32 %v485, %v727
    %v732 = vmul.f32 %v489, %v727
    %v733 = vmul.f32 %v493, %v727
    %v734 = vmul.f32 %v497, %v727
    %v735 = vmul.f32 %v501, %v727
    %v736 = vmul.f32 %v505, %v727
    %v737 = vmul.f32 %v509, %v727
    %v738 = vmul.f32 %v513, %v727
    %v739 = vmul.f32 %v517, %v727
    %v740 = vmul.f32 %v521, %v727
    %v741 = vmul.f32 %v525, %v727
    %v742 = vmul.f32 %v529, %v727
    %v743 = vmul.f32 %v533, %v727
    %v744 = vmul.f32 %v537, %v727
    %v745 = vmul.f32 %v541, %v727
    %v746 = vmul.f32 %v545, %v727
    %v747 = vmul.f32 %v549, %v727
    %v748 = vmul.f32 %v553, %v727
    %v749 = vmul.f32 %v557, %v727
    %v750 = vmul.f32 %v561, %v727
    %v751 = vmul.f32 %v565, %v727
    %v752 = vmul.f32 %v569, %v727
    %v753 = vmul.f32 %v573, %v727
    %v754 = vmul.f32 %v577, %v727
    %v755 = vmul.f32 %v581, %v727
    %v756 = vmul.f32 %v585, %v727
    %v757 = vmul.f32 %v589, %v727
    %v758 = vmul.f32 %v593, %v727
    %v759 = vmul.f32 %v597, %v727
    %v760 = vmul.f32 %v601, %v727
    %v761 = vmul.f32 %v605, %v727
    %v762 = vmul.f32 %v609, %v727
    %v763 = vmul.f32 %v613, %v727
    %v764 = vmul.f32 %v617, %v727
    %v765 = vmul.f32 %v621, %v727
    %v766 = vmul.f32 %v625, %v727
    %v767 = vmul.f32 %v629, %v727
    %v768 = vmul.f32 %v633, %v727
    %v769 = vmul.f32 %v637, %v727
    %v770 = vmul.f32 %v641, %v727
    %v771 = vmul.f32 %v645, %v727
    %v772 = vmul.f32 %v649, %v727
    %v773 = vmul.f32 %v653, %v727
    %v774 = vmul.f32 %v657, %v727
    %v775 = vmul.f32 %v661, %v727
    %v776 = vmul.f32 %v665, %v727
    %v777 = vmul.f32 %v669, %v727
    %v778 = vmul.f32 %v673, %v727
    %v779 = vmul.f32 %v677, %v727
    %v780 = vmul.f32 %v681, %v727
    %v781 = vmul.f32 %v685, %v727
    %v782 = vmul.f32 %v689, %v727
    %v783 = vmul.f32 %v693, %v727
    %v784 = vmul.f32 %v697, %v727
    %v785 = vmul.f32 %v701, %v727
    %v786 = vmul.f32 %v705, %v727
    %v787 = vmul.f32 %v709, %v727
    %v788 = vmul.f32 %v713, %v727
    %v789 = vmul.f32 %v717, %v727
    %v790 = vmul.f32 %v721, %v727
    %v791 = vmul.f32 %v725, %v727
    %v792 = vadd.f32 %v407, %v728
    %v793 = vadd.f32 %v408, %v729
    %v794 = vadd.f32 %v409, %v730
    %v795 = vadd.f32 %v410, %v731
    %v796 = vadd.f32 %v411, %v732
    %v797 = vadd.f32 %v412, %v733
    %v798 = vadd.f32 %v413, %v734
    %v799 = vadd.f32 %v414, %v735
    %v800 = vadd.f32 %v415, %v736
    %v801 = vadd.f32 %v416, %v737
    %v802 = vadd.f32 %v417, %v738
    %v803 = vadd.f32 %v418, %v739
    %v804 = vadd.f32 %v419, %v740
    %v805 = vadd.f32 %v420, %v741
    %v806 = vadd.f32 %v421, %v742
    %v807 = vadd.f32 %v422, %v743
    %v808 = vadd.f32 %v423, %v744
    %v809 = vadd.f32 %v424, %v745
    %v810 = vadd.f32 %v425, %v746
    %v811 = vadd.f32 %v426, %v747
    %v812 = vadd.f32 %v427, %v748
    %v813 = vadd.f32 %v428, %v749
    %v814 = vadd.f32 %v429, %v750
    %v815 = vadd.f32 %v430, %v751
    %v816 = vadd.f32 %v431, %v752
    %v817 = vadd.f32 %v432, %v753
    %v818 = vadd.f32 %v433, %v754
    %v819 = vadd.f32 %v434, %v755
    %v820 = vadd.f32 %v435, %v756
    %v821 = vadd.f32 %v436, %v757
    %v822 = vadd.f32 %v437, %v758
    %v823 = vadd.f32 %v438, %v759
    %v824 = vadd.f32 %v439, %v760
    %v825 = vadd.f32 %v440, %v761
    %v826 = vadd.f32 %v441, %v762
    %v827 = vadd.f32 %v442, %v763
    %v828 = vadd.f32 %v443, %v764
    %v829 = vadd.f32 %v444, %v765
    %v830 = vadd.f32 %v445, %v766
    %v831 = vadd.f32 %v446, %v767
    %v832 = vadd.f32 %v447, %v768
    %v833 = vadd.f32 %v448, %v769
    %v834 = vadd.f32 %v449, %v770
    %v835 = vadd.f32 %v450, %v771
    %v836 = vadd.f32 %v451, %v772
    %v837 = vadd.f32 %v452, %v773
    %v838 = vadd.f32 %v453, %v774
    %v839 = vadd.f32 %v454, %v775
    %v840 = vadd.f32 %v455, %v776
    %v841 = vadd.f32 %v456, %v777
    %v842 = vadd.f32 %v457, %v778
    %v843 = vadd.f32 %v458, %v779
    %v844 = vadd.f32 %v459, %v780
    %v845 = vadd.f32 %v460, %v781
    %v846 = vadd.f32 %v461, %v782
    %v847 = vadd.f32 %v462, %v783
    %v848 = vadd.f32 %v463, %v784
    %v849 = vadd.f32 %v464, %v785
    %v850 = vadd.f32 %v465, %v786
    %v851 = vadd.f32 %v466, %v787
    %v852 = vadd.f32 %v467, %v788
    %v853 = vadd.f32 %v468, %v789
    %v854 = vadd.f32 %v469, %v790
    %v855 = vadd.f32 %v470, %v791
    %856 = vset.pattern.permute.xlu0 2
    %857 = vperm.xlu0 %856, %v21
    %v858 = vpop.permute.xlu0 %857
    %860 = vset.pattern.permute.xlu0 2
    %861 = vperm.xlu0 %860, %v22
    %v862 = vpop.permute.xlu0 %861
    %864 = vset.pattern.permute.xlu0 2
    %865 = vperm.xlu0 %864, %v23
    %v866 = vpop.permute.xlu0 %865
    %868 = vset.pattern.permute.xlu0 2
    %869 = vperm.xlu0 %868, %v24
    %v870 = vpop.permute.xlu0 %869
    %872 = vset.pattern.permute.xlu0 2
    %873 = vperm.xlu0 %872, %v25
    %v874 = vpop.permute.xlu0 %873
    %876 = vset.pattern.permute.xlu0 2
    %877 = vperm.xlu0 %876, %v26
    %v878 = vpop.permute.xlu0 %877
    %880 = vset.pattern.permute.xlu0 2
    %881 = vperm.xlu0 %880, %v27
    %v882 = vpop.permute.xlu0 %881
    %884 = vset.pattern.permute.xlu0 2
    %885 = vperm.xlu0 %884, %v28
    %v886 = vpop.permute.xlu0 %885
    %888 = vset.pattern.permute.xlu0 2
    %889 = vperm.xlu0 %888, %v29
    %v890 = vpop.permute.xlu0 %889
    %892 = vset.pattern.permute.xlu0 2
    %893 = vperm.xlu0 %892, %v30
    %v894 = vpop.permute.xlu0 %893
    %896 = vset.pattern.permute.xlu0 2
    %897 = vperm.xlu0 %896, %v31
    %v898 = vpop.permute.xlu0 %897
    %900 = vset.pattern.permute.xlu0 2
    %901 = vperm.xlu0 %900, %v32
    %v902 = vpop.permute.xlu0 %901
    %904 = vset.pattern.permute.xlu0 2
    %905 = vperm.xlu0 %904, %v33
    %v906 = vpop.permute.xlu0 %905
    %908 = vset.pattern.permute.xlu0 2
    %909 = vperm.xlu0 %908, %v34
    %v910 = vpop.permute.xlu0 %909
    %912 = vset.pattern.permute.xlu0 2
    %913 = vperm.xlu0 %912, %v35
    %v914 = vpop.permute.xlu0 %913
    %916 = vset.pattern.permute.xlu0 2
    %917 = vperm.xlu0 %916, %v36
    %v918 = vpop.permute.xlu0 %917
    %920 = vset.pattern.permute.xlu0 2
    %921 = vperm.xlu0 %920, %v37
    %v922 = vpop.permute.xlu0 %921
    %924 = vset.pattern.permute.xlu0 2
    %925 = vperm.xlu0 %924, %v38
    %v926 = vpop.permute.xlu0 %925
    %928 = vset.pattern.permute.xlu0 2
    %929 = vperm.xlu0 %928, %v39
    %v930 = vpop.permute.xlu0 %929
    %932 = vset.pattern.permute.xlu0 2
    %933 = vperm.xlu0 %932, %v40
    %v934 = vpop.permute.xlu0 %933
    %936 = vset.pattern.permute.xlu0 2
    %937 = vperm.xlu0 %936, %v41
    %v938 = vpop.permute.xlu0 %937
    %940 = vset.pattern.permute.xlu0 2
    %941 = vperm.xlu0 %940, %v42
    %v942 = vpop.permute.xlu0 %941
    %944 = vset.pattern.permute.xlu0 2
    %945 = vperm.xlu0 %944, %v43
    %v946 = vpop.permute.xlu0 %945
    %948 = vset.pattern.permute.xlu0 2
    %949 = vperm.xlu0 %948, %v44
    %v950 = vpop.permute.xlu0 %949
    %952 = vset.pattern.permute.xlu0 2
    %953 = vperm.xlu0 %952, %v45
    %v954 = vpop.permute.xlu0 %953
    %956 = vset.pattern.permute.xlu0 2
    %957 = vperm.xlu0 %956, %v46
    %v958 = vpop.permute.xlu0 %957
    %960 = vset.pattern.permute.xlu0 2
    %961 = vperm.xlu0 %960, %v47
    %v962 = vpop.permute.xlu0 %961
    %964 = vset.pattern.permute.xlu0 2
    %965 = vperm.xlu0 %964, %v48
    %v966 = vpop.permute.xlu0 %965
    %968 = vset.pattern.permute.xlu0 2
    %969 = vperm.xlu0 %968, %v49
    %v970 = vpop.permute.xlu0 %969
    %972 = vset.pattern.permute.xlu0 2
    %973 = vperm.xlu0 %972, %v50
    %v974 = vpop.permute.xlu0 %973
    %976 = vset.pattern.permute.xlu0 2
    %977 = vperm.xlu0 %976, %v51
    %v978 = vpop.permute.xlu0 %977
    %980 = vset.pattern.permute.xlu0 2
    %981 = vperm.xlu0 %980, %v52
    %v982 = vpop.permute.xlu0 %981
    %984 = vset.pattern.permute.xlu0 2
    %985 = vperm.xlu0 %984, %v53
    %v986 = vpop.permute.xlu0 %985
    %988 = vset.pattern.permute.xlu0 2
    %989 = vperm.xlu0 %988, %v54
    %v990 = vpop.permute.xlu0 %989
    %992 = vset.pattern.permute.xlu0 2
    %993 = vperm.xlu0 %992, %v55
    %v994 = vpop.permute.xlu0 %993
    %996 = vset.pattern.permute.xlu0 2
    %997 = vperm.xlu0 %996, %v56
    %v998 = vpop.permute.xlu0 %997
    %1000 = vset.pattern.permute.xlu0 2
    %1001 = vperm.xlu0 %1000, %v57
    %v1002 = vpop.permute.xlu0 %1001
    %1004 = vset.pattern.permute.xlu0 2
    %1005 = vperm.xlu0 %1004, %v58
    %v1006 = vpop.permute.xlu0 %1005
    %1008 = vset.pattern.permute.xlu0 2
    %1009 = vperm.xlu0 %1008, %v59
    %v1010 = vpop.permute.xlu0 %1009
    %1012 = vset.pattern.permute.xlu0 2
    %1013 = vperm.xlu0 %1012, %v60
    %v1014 = vpop.permute.xlu0 %1013
    %1016 = vset.pattern.permute.xlu0 2
    %1017 = vperm.xlu0 %1016, %v61
    %v1018 = vpop.permute.xlu0 %1017
    %1020 = vset.pattern.permute.xlu0 2
    %1021 = vperm.xlu0 %1020, %v62
    %v1022 = vpop.permute.xlu0 %1021
    %1024 = vset.pattern.permute.xlu0 2
    %1025 = vperm.xlu0 %1024, %v63
    %v1026 = vpop.permute.xlu0 %1025
    %1028 = vset.pattern.permute.xlu0 2
    %1029 = vperm.xlu0 %1028, %v64
    %v1030 = vpop.permute.xlu0 %1029
    %1032 = vset.pattern.permute.xlu0 2
    %1033 = vperm.xlu0 %1032, %v65
    %v1034 = vpop.permute.xlu0 %1033
    %1036 = vset.pattern.permute.xlu0 2
    %1037 = vperm.xlu0 %1036, %v66
    %v1038 = vpop.permute.xlu0 %1037
    %1040 = vset.pattern.permute.xlu0 2
    %1041 = vperm.xlu0 %1040, %v67
    %v1042 = vpop.permute.xlu0 %1041
    %1044 = vset.pattern.permute.xlu0 2
    %1045 = vperm.xlu0 %1044, %v68
    %v1046 = vpop.permute.xlu0 %1045
    %1048 = vset.pattern.permute.xlu0 2
    %1049 = vperm.xlu0 %1048, %v69
    %v1050 = vpop.permute.xlu0 %1049
    %1052 = vset.pattern.permute.xlu0 2
    %1053 = vperm.xlu0 %1052, %v70
    %v1054 = vpop.permute.xlu0 %1053
    %1056 = vset.pattern.permute.xlu0 2
    %1057 = vperm.xlu0 %1056, %v71
    %v1058 = vpop.permute.xlu0 %1057
    %1060 = vset.pattern.permute.xlu0 2
    %1061 = vperm.xlu0 %1060, %v72
    %v1062 = vpop.permute.xlu0 %1061
    %1064 = vset.pattern.permute.xlu0 2
    %1065 = vperm.xlu0 %1064, %v73
    %v1066 = vpop.permute.xlu0 %1065
    %1068 = vset.pattern.permute.xlu0 2
    %1069 = vperm.xlu0 %1068, %v74
    %v1070 = vpop.permute.xlu0 %1069
    %1072 = vset.pattern.permute.xlu0 2
    %1073 = vperm.xlu0 %1072, %v75
    %v1074 = vpop.permute.xlu0 %1073
    %1076 = vset.pattern.permute.xlu0 2
    %1077 = vperm.xlu0 %1076, %v76
    %v1078 = vpop.permute.xlu0 %1077
    %1080 = vset.pattern.permute.xlu0 2
    %1081 = vperm.xlu0 %1080, %v77
    %v1082 = vpop.permute.xlu0 %1081
    %1084 = vset.pattern.permute.xlu0 2
    %1085 = vperm.xlu0 %1084, %v78
    %v1086 = vpop.permute.xlu0 %1085
    %1088 = vset.pattern.permute.xlu0 2
    %1089 = vperm.xlu0 %1088, %v79
    %v1090 = vpop.permute.xlu0 %1089
    %1092 = vset.pattern.permute.xlu0 2
    %1093 = vperm.xlu0 %1092, %v80
    %v1094 = vpop.permute.xlu0 %1093
    %1096 = vset.pattern.permute.xlu0 2
    %1097 = vperm.xlu0 %1096, %v81
    %v1098 = vpop.permute.xlu0 %1097
    %1100 = vset.pattern.permute.xlu0 2
    %1101 = vperm.xlu0 %1100, %v82
    %v1102 = vpop.permute.xlu0 %1101
    %1104 = vset.pattern.permute.xlu0 2
    %1105 = vperm.xlu0 %1104, %v83
    %v1106 = vpop.permute.xlu0 %1105
    %1108 = vset.pattern.permute.xlu0 2
    %1109 = vperm.xlu0 %1108, %v84
    %v1110 = vpop.permute.xlu0 %1109
    %v1112 = vperm.slane %v85, 2
    %v1113 = vmul.f32 %v858, %v1112
    %v1114 = vmul.f32 %v862, %v1112
    %v1115 = vmul.f32 %v866, %v1112
    %v1116 = vmul.f32 %v870, %v1112
    %v1117 = vmul.f32 %v874, %v1112
    %v1118 = vmul.f32 %v878, %v1112
    %v1119 = vmul.f32 %v882, %v1112
    %v1120 = vmul.f32 %v886, %v1112
    %v1121 = vmul.f32 %v890, %v1112
    %v1122 = vmul.f32 %v894, %v1112
    %v1123 = vmul.f32 %v898, %v1112
    %v1124 = vmul.f32 %v902, %v1112
    %v1125 = vmul.f32 %v906, %v1112
    %v1126 = vmul.f32 %v910, %v1112
    %v1127 = vmul.f32 %v914, %v1112
    %v1128 = vmul.f32 %v918, %v1112
    %v1129 = vmul.f32 %v922, %v1112
    %v1130 = vmul.f32 %v926, %v1112
    %v1131 = vmul.f32 %v930, %v1112
    %v1132 = vmul.f32 %v934, %v1112
    %v1133 = vmul.f32 %v938, %v1112
    %v1134 = vmul.f32 %v942, %v1112
    %v1135 = vmul.f32 %v946, %v1112
    %v1136 = vmul.f32 %v950, %v1112
    %v1137 = vmul.f32 %v954, %v1112
    %v1138 = vmul.f32 %v958, %v1112
    %v1139 = vmul.f32 %v962, %v1112
    %v1140 = vmul.f32 %v966, %v1112
    %v1141 = vmul.f32 %v970, %v1112
    %v1142 = vmul.f32 %v974, %v1112
    %v1143 = vmul.f32 %v978, %v1112
    %v1144 = vmul.f32 %v982, %v1112
    %v1145 = vmul.f32 %v986, %v1112
    %v1146 = vmul.f32 %v990, %v1112
    %v1147 = vmul.f32 %v994, %v1112
    %v1148 = vmul.f32 %v998, %v1112
    %v1149 = vmul.f32 %v1002, %v1112
    %v1150 = vmul.f32 %v1006, %v1112
    %v1151 = vmul.f32 %v1010, %v1112
    %v1152 = vmul.f32 %v1014, %v1112
    %v1153 = vmul.f32 %v1018, %v1112
    %v1154 = vmul.f32 %v1022, %v1112
    %v1155 = vmul.f32 %v1026, %v1112
    %v1156 = vmul.f32 %v1030, %v1112
    %v1157 = vmul.f32 %v1034, %v1112
    %v1158 = vmul.f32 %v1038, %v1112
    %v1159 = vmul.f32 %v1042, %v1112
    %v1160 = vmul.f32 %v1046, %v1112
    %v1161 = vmul.f32 %v1050, %v1112
    %v1162 = vmul.f32 %v1054, %v1112
    %v1163 = vmul.f32 %v1058, %v1112
    %v1164 = vmul.f32 %v1062, %v1112
    %v1165 = vmul.f32 %v1066, %v1112
    %v1166 = vmul.f32 %v1070, %v1112
    %v1167 = vmul.f32 %v1074, %v1112
    %v1168 = vmul.f32 %v1078, %v1112
    %v1169 = vmul.f32 %v1082, %v1112
    %v1170 = vmul.f32 %v1086, %v1112
    %v1171 = vmul.f32 %v1090, %v1112
    %v1172 = vmul.f32 %v1094, %v1112
    %v1173 = vmul.f32 %v1098, %v1112
    %v1174 = vmul.f32 %v1102, %v1112
    %v1175 = vmul.f32 %v1106, %v1112
    %v1176 = vmul.f32 %v1110, %v1112
    %v1177 = vadd.f32 %v792, %v1113
    %v1178 = vadd.f32 %v793, %v1114
    %v1179 = vadd.f32 %v794, %v1115
    %v1180 = vadd.f32 %v795, %v1116
    %v1181 = vadd.f32 %v796, %v1117
    %v1182 = vadd.f32 %v797, %v1118
    %v1183 = vadd.f32 %v798, %v1119
    %v1184 = vadd.f32 %v799, %v1120
    %v1185 = vadd.f32 %v800, %v1121
    %v1186 = vadd.f32 %v801, %v1122
    %v1187 = vadd.f32 %v802, %v1123
    %v1188 = vadd.f32 %v803, %v1124
    %v1189 = vadd.f32 %v804, %v1125
    %v1190 = vadd.f32 %v805, %v1126
    %v1191 = vadd.f32 %v806, %v1127
    %v1192 = vadd.f32 %v807, %v1128
    %v1193 = vadd.f32 %v808, %v1129
    %v1194 = vadd.f32 %v809, %v1130
    %v1195 = vadd.f32 %v810, %v1131
    %v1196 = vadd.f32 %v811, %v1132
    %v1197 = vadd.f32 %v812, %v1133
    %v1198 = vadd.f32 %v813, %v1134
    %v1199 = vadd.f32 %v814, %v1135
    %v1200 = vadd.f32 %v815, %v1136
    %v1201 = vadd.f32 %v816, %v1137
    %v1202 = vadd.f32 %v817, %v1138
    %v1203 = vadd.f32 %v818, %v1139
    %v1204 = vadd.f32 %v819, %v1140
    %v1205 = vadd.f32 %v820, %v1141
    %v1206 = vadd.f32 %v821, %v1142
    %v1207 = vadd.f32 %v822, %v1143
    %v1208 = vadd.f32 %v823, %v1144
    %v1209 = vadd.f32 %v824, %v1145
    %v1210 = vadd.f32 %v825, %v1146
    %v1211 = vadd.f32 %v826, %v1147
    %v1212 = vadd.f32 %v827, %v1148
    %v1213 = vadd.f32 %v828, %v1149
    %v1214 = vadd.f32 %v829, %v1150
    %v1215 = vadd.f32 %v830, %v1151
    %v1216 = vadd.f32 %v831, %v1152
    %v1217 = vadd.f32 %v832, %v1153
    %v1218 = vadd.f32 %v833, %v1154
    %v1219 = vadd.f32 %v834, %v1155
    %v1220 = vadd.f32 %v835, %v1156
    %v1221 = vadd.f32 %v836, %v1157
    %v1222 = vadd.f32 %v837, %v1158
    %v1223 = vadd.f32 %v838, %v1159
    %v1224 = vadd.f32 %v839, %v1160
    %v1225 = vadd.f32 %v840, %v1161
    %v1226 = vadd.f32 %v841, %v1162
    %v1227 = vadd.f32 %v842, %v1163
    %v1228 = vadd.f32 %v843, %v1164
    %v1229 = vadd.f32 %v844, %v1165
    %v1230 = vadd.f32 %v845, %v1166
    %v1231 = vadd.f32 %v846, %v1167
    %v1232 = vadd.f32 %v847, %v1168
    %v1233 = vadd.f32 %v848, %v1169
    %v1234 = vadd.f32 %v849, %v1170
    %v1235 = vadd.f32 %v850, %v1171
    %v1236 = vadd.f32 %v851, %v1172
    %v1237 = vadd.f32 %v852, %v1173
    %v1238 = vadd.f32 %v853, %v1174
    %v1239 = vadd.f32 %v854, %v1175
    %v1240 = vadd.f32 %v855, %v1176
    %v1241 = vld [vmem:[%s2] sm:$0x1]
    %v1243 = vperm.slane %v1241, 0
    %v1245 = vadd.f32 %v1177, %v1243
    %v1246 = vadd.f32 %v1178, %v1243
    %v1247 = vadd.f32 %v1179, %v1243
    %v1248 = vadd.f32 %v1180, %v1243
    %v1249 = vadd.f32 %v1181, %v1243
    %v1250 = vadd.f32 %v1182, %v1243
    %v1251 = vadd.f32 %v1183, %v1243
    %v1252 = vadd.f32 %v1184, %v1243
    %v1253 = vadd.f32 %v1185, %v1243
    %v1254 = vadd.f32 %v1186, %v1243
    %v1255 = vadd.f32 %v1187, %v1243
    %v1256 = vadd.f32 %v1188, %v1243
    %v1257 = vadd.f32 %v1189, %v1243
    %v1258 = vadd.f32 %v1190, %v1243
    %v1259 = vadd.f32 %v1191, %v1243
    %v1260 = vadd.f32 %v1192, %v1243
    %v1261 = vadd.f32 %v1193, %v1243
    %v1262 = vadd.f32 %v1194, %v1243
    %v1263 = vadd.f32 %v1195, %v1243
    %v1264 = vadd.f32 %v1196, %v1243
    %v1265 = vadd.f32 %v1197, %v1243
    %v1266 = vadd.f32 %v1198, %v1243
    %v1267 = vadd.f32 %v1199, %v1243
    %v1268 = vadd.f32 %v1200, %v1243
    %v1269 = vadd.f32 %v1201, %v1243
    %v1270 = vadd.f32 %v1202, %v1243
    %v1271 = vadd.f32 %v1203, %v1243
    %v1272 = vadd.f32 %v1204, %v1243
    %v1273 = vadd.f32 %v1205, %v1243
    %v1274 = vadd.f32 %v1206, %v1243
    %v1275 = vadd.f32 %v1207, %v1243
    %v1276 = vadd.f32 %v1208, %v1243
    %v1277 = vadd.f32 %v1209, %v1243
    %v1278 = vadd.f32 %v1210, %v1243
    %v1279 = vadd.f32 %v1211, %v1243
    %v1280 = vadd.f32 %v1212, %v1243
    %v1281 = vadd.f32 %v1213, %v1243
    %v1282 = vadd.f32 %v1214, %v1243
    %v1283 = vadd.f32 %v1215, %v1243
    %v1284 = vadd.f32 %v1216, %v1243
    %v1285 = vadd.f32 %v1217, %v1243
    %v1286 = vadd.f32 %v1218, %v1243
    %v1287 = vadd.f32 %v1219, %v1243
    %v1288 = vadd.f32 %v1220, %v1243
    %v1289 = vadd.f32 %v1221, %v1243
    %v1290 = vadd.f32 %v1222, %v1243
    %v1291 = vadd.f32 %v1223, %v1243
    %v1292 = vadd.f32 %v1224, %v1243
    %v1293 = vadd.f32 %v1225, %v1243
    %v1294 = vadd.f32 %v1226, %v1243
    %v1295 = vadd.f32 %v1227, %v1243
    %v1296 = vadd.f32 %v1228, %v1243
    %v1297 = vadd.f32 %v1229, %v1243
    %v1298 = vadd.f32 %v1230, %v1243
    %v1299 = vadd.f32 %v1231, %v1243
    %v1300 = vadd.f32 %v1232, %v1243
    %v1301 = vadd.f32 %v1233, %v1243
    %v1302 = vadd.f32 %v1234, %v1243
    %v1303 = vadd.f32 %v1235, %v1243
    %v1304 = vadd.f32 %v1236, %v1243
    %v1305 = vadd.f32 %v1237, %v1243
    %v1306 = vadd.f32 %v1238, %v1243
    %v1307 = vadd.f32 %v1239, %v1243
    %v1308 = vadd.f32 %v1240, %v1243
    %v1309 = vmax.f32 %v1245, 0.0
    %v1310 = vmax.f32 %v1246, 0.0
    %v1311 = vmax.f32 %v1247, 0.0
    %v1312 = vmax.f32 %v1248, 0.0
    %v1313 = vmax.f32 %v1249, 0.0
    %v1314 = vmax.f32 %v1250, 0.0
    %v1315 = vmax.f32 %v1251, 0.0
    %v1316 = vmax.f32 %v1252, 0.0
    %v1317 = vmax.f32 %v1253, 0.0
    %v1318 = vmax.f32 %v1254, 0.0
    %v1319 = vmax.f32 %v1255, 0.0
    %v1320 = vmax.f32 %v1256, 0.0
    %v1321 = vmax.f32 %v1257, 0.0
    %v1322 = vmax.f32 %v1258, 0.0
    %v1323 = vmax.f32 %v1259, 0.0
    %v1324 = vmax.f32 %v1260, 0.0
    %v1325 = vmax.f32 %v1261, 0.0
    %v1326 = vmax.f32 %v1262, 0.0
    %v1327 = vmax.f32 %v1263, 0.0
    %v1328 = vmax.f32 %v1264, 0.0
    %v1329 = vmax.f32 %v1265, 0.0
    %v1330 = vmax.f32 %v1266, 0.0
    %v1331 = vmax.f32 %v1267, 0.0
    %v1332 = vmax.f32 %v1268, 0.0
    %v1333 = vmax.f32 %v1269, 0.0
    %v1334 = vmax.f32 %v1270, 0.0
    %v1335 = vmax.f32 %v1271, 0.0
    %v1336 = vmax.f32 %v1272, 0.0
    %v1337 = vmax.f32 %v1273, 0.0
    %v1338 = vmax.f32 %v1274, 0.0
    %v1339 = vmax.f32 %v1275, 0.0
    %v1340 = vmax.f32 %v1276, 0.0
    %v1341 = vmax.f32 %v1277, 0.0
    %v1342 = vmax.f32 %v1278, 0.0
    %v1343 = vmax.f32 %v1279, 0.0
    %v1344 = vmax.f32 %v1280, 0.0
    %v1345 = vmax.f32 %v1281, 0.0
    %v1346 = vmax.f32 %v1282, 0.0
    %v1347 = vmax.f32 %v1283, 0.0
    %v1348 = vmax.f32 %v1284, 0.0
    %v1349 = vmax.f32 %v1285, 0.0
    %v1350 = vmax.f32 %v1286, 0.0
    %v1351 = vmax.f32 %v1287, 0.0
    %v1352 = vmax.f32 %v1288, 0.0
    %v1353 = vmax.f32 %v1289, 0.0
    %v1354 = vmax.f32 %v1290, 0.0
    %v1355 = vmax.f32 %v1291, 0.0
    %v1356 = vmax.f32 %v1292, 0.0
    %v1357 = vmax.f32 %v1293, 0.0
    %v1358 = vmax.f32 %v1294, 0.0
    %v1359 = vmax.f32 %v1295, 0.0
    %v1360 = vmax.f32 %v1296, 0.0
    %v1361 = vmax.f32 %v1297, 0.0
    %v1362 = vmax.f32 %v1298, 0.0
    %v1363 = vmax.f32 %v1299, 0.0
    %v1364 = vmax.f32 %v1300, 0.0
    %v1365 = vmax.f32 %v1301, 0.0
    %v1366 = vmax.f32 %v1302, 0.0
    %v1367 = vmax.f32 %v1303, 0.0
    %v1368 = vmax.f32 %v1304, 0.0
    %v1369 = vmax.f32 %v1305, 0.0
    %v1370 = vmax.f32 %v1306, 0.0
    %v1371 = vmax.f32 %v1307, 0.0
    %v1372 = vmax.f32 %v1308, 0.0
    %v1373 = vld [vmem:[%s3] sm:$0xff]
    %v1374 = vld [vmem:[%s3 + $0x8] sm:$0xff]
    %v1375 = vld [vmem:[%s3 + $0x10] sm:$0xff]
    %v1376 = vld [vmem:[%s3 + $0x18] sm:$0xff]
    %v1377 = vld [vmem:[%s3 + $0x20] sm:$0xff]
    %v1378 = vld [vmem:[%s3 + $0x28] sm:$0xff]
    %v1379 = vld [vmem:[%s3 + $0x30] sm:$0xff]
    %v1380 = vld [vmem:[%s3 + $0x38] sm:$0xff]
    %v1381 = vld [vmem:[%s3 + $0x40] sm:$0xff]
    %v1382 = vld [vmem:[%s3 + $0x48] sm:$0xff]
    %v1383 = vld [vmem:[%s3 + $0x50] sm:$0xff]
    %v1384 = vld [vmem:[%s3 + $0x58] sm:$0xff]
    %v1385 = vld [vmem:[%s3 + $0x60] sm:$0xff]
    %v1386 = vld [vmem:[%s3 + $0x68] sm:$0xff]
    %v1387 = vld [vmem:[%s3 + $0x70] sm:$0xff]
    %v1388 = vld [vmem:[%s3 + $0x78] sm:$0xff]
    %v1389 = vld [vmem:[%s3 + $0x80] sm:$0xff]
    %v1390 = vld [vmem:[%s3 + $0x88] sm:$0xff]
    %v1391 = vld [vmem:[%s3 + $0x90] sm:$0xff]
    %v1392 = vld [vmem:[%s3 + $0x98] sm:$0xff]
    %v1393 = vld [vmem:[%s3 + $0xa0] sm:$0xff]
    %v1394 = vld [vmem:[%s3 + $0xa8] sm:$0xff]
    %v1395 = vld [vmem:[%s3 + $0xb0] sm:$0xff]
    %v1396 = vld [vmem:[%s3 + $0xb8] sm:$0xff]
    %v1397 = vld [vmem:[%s3 + $0xc0] sm:$0xff]
    %v1398 = vld [vmem:[%s3 + $0xc8] sm:$0xff]
    %v1399 = vld [vmem:[%s3 + $0xd0] sm:$0xff]
    %v1400 = vld [vmem:[%s3 + $0xd8] sm:$0xff]
    %v1401 = vld [vmem:[%s3 + $0xe0] sm:$0xff]
    %v1402 = vld [vmem:[%s3 + $0xe8] sm:$0xff]
    %v1403 = vld [vmem:[%s3 + $0xf0] sm:$0xff]
    %v1404 = vld [vmem:[%s3 + $0xf8] sm:$0xff]
    %v1405 = vld [vmem:[%s4] sm:$0x3]
    %v1407 = vperm.slane %v1405, 0
    %v1408 = vperm.slane %v1405, 1
    %v1411 = vand.u32 %v1403, 4294901760
    %1412 = vmatpush.msra.mxu0 %v1411
    %v1413 = vand.u32 %v1401, 4294901760
    %1414 = vmatpush.msra.mxu0 %v1413
    %v1415 = vand.u32 %v1399, 4294901760
    %1416 = vmatpush.msra.mxu0 %v1415
    %v1417 = vand.u32 %v1397, 4294901760
    %1418 = vmatpush.msra.mxu0 %v1417
    %v1419 = vand.u32 %v1395, 4294901760
    %1420 = vmatpush.msra.mxu0 %v1419
    %v1421 = vand.u32 %v1393, 4294901760
    %1422 = vmatpush.msra.mxu0 %v1421
    %v1423 = vand.u32 %v1391, 4294901760
    %1424 = vmatpush.msra.mxu0 %v1423
    %v1425 = vand.u32 %v1389, 4294901760
    %1426 = vmatpush.msra.mxu0 %v1425
    %v1427 = vand.u32 %v1387, 4294901760
    %1428 = vmatpush.msra.mxu0 %v1427
    %v1429 = vand.u32 %v1385, 4294901760
    %1430 = vmatpush.msra.mxu0 %v1429
    %v1431 = vand.u32 %v1383, 4294901760
    %1432 = vmatpush.msra.mxu0 %v1431
    %v1433 = vand.u32 %v1381, 4294901760
    %1434 = vmatpush.msra.mxu0 %v1433
    %v1435 = vand.u32 %v1379, 4294901760
    %1436 = vmatpush.msra.mxu0 %v1435
    %v1437 = vand.u32 %v1377, 4294901760
    %1438 = vmatpush.msra.mxu0 %v1437
    %v1439 = vand.u32 %v1375, 4294901760
    %1440 = vmatpush.msra.mxu0 %v1439
    %v1441 = vand.u32 %v1373, 4294901760
    %1442 = vmatpush.msra.mxu0 %v1441
    %v1443 = vand.u32 %v1309, 4294901760
    %v1444 = vsub.f32 %v1309, %v1443
    %v1445 = vand.u32 %v1444, 4294901760
    %v1446 = vsub.f32 %v1444, %v1445
    %v1447 = vand.u32 %v1446, 4294901760
    %1448 = vmatmul.f32.gmra.mxu0 %v1447
    %v1449 = vpop.f32.mrf.mxu0
    %v1450 = vadd.f32 %v1407, %v1449
    %v1451 = vand.u32 %v1310, 4294901760
    %v1452 = vsub.f32 %v1310, %v1451
    %v1453 = vand.u32 %v1452, 4294901760
    %v1454 = vsub.f32 %v1452, %v1453
    %v1455 = vand.u32 %v1454, 4294901760
    %1456 = vmatmul.f32.gmra.mxu0 %v1455
    %v1457 = vpop.f32.mrf.mxu0
    %v1458 = vadd.f32 %v1407, %v1457
    %v1459 = vand.u32 %v1311, 4294901760
    %v1460 = vsub.f32 %v1311, %v1459
    %v1461 = vand.u32 %v1460, 4294901760
    %v1462 = vsub.f32 %v1460, %v1461
    %v1463 = vand.u32 %v1462, 4294901760
    %1464 = vmatmul.f32.gmra.mxu0 %v1463
    %v1465 = vpop.f32.mrf.mxu0
    %v1466 = vadd.f32 %v1407, %v1465
    %v1467 = vand.u32 %v1312, 4294901760
    %v1468 = vsub.f32 %v1312, %v1467
    %v1469 = vand.u32 %v1468, 4294901760
    %v1470 = vsub.f32 %v1468, %v1469
    %v1471 = vand.u32 %v1470, 4294901760
    %1472 = vmatmul.f32.gmra.mxu0 %v1471
    %v1473 = vpop.f32.mrf.mxu0
    %v1474 = vadd.f32 %v1407, %v1473
    %v1475 = vand.u32 %v1313, 4294901760
    %v1476 = vsub.f32 %v1313, %v1475
    %v1477 = vand.u32 %v1476, 4294901760
    %v1478 = vsub.f32 %v1476, %v1477
    %v1479 = vand.u32 %v1478, 4294901760
    %1480 = vmatmul.f32.gmra.mxu0 %v1479
    %v1481 = vpop.f32.mrf.mxu0
    %v1482 = vadd.f32 %v1407, %v1481
    %v1483 = vand.u32 %v1314, 4294901760
    %v1484 = vsub.f32 %v1314, %v1483
    %v1485 = vand.u32 %v1484, 4294901760
    %v1486 = vsub.f32 %v1484, %v1485
    %v1487 = vand.u32 %v1486, 4294901760
    %1488 = vmatmul.f32.gmra.mxu0 %v1487
    %v1489 = vpop.f32.mrf.mxu0
    %v1490 = vadd.f32 %v1407, %v1489
    %v1491 = vand.u32 %v1315, 4294901760
    %v1492 = vsub.f32 %v1315, %v1491
    %v1493 = vand.u32 %v1492, 4294901760
    %v1494 = vsub.f32 %v1492, %v1493
    %v1495 = vand.u32 %v1494, 4294901760
    %1496 = vmatmul.f32.gmra.mxu0 %v1495
    %v1497 = vpop.f32.mrf.mxu0
    %v1498 = vadd.f32 %v1407, %v1497
    %v1499 = vand.u32 %v1316, 4294901760
    %v1500 = vsub.f32 %v1316, %v1499
    %v1501 = vand.u32 %v1500, 4294901760
    %v1502 = vsub.f32 %v1500, %v1501
    %v1503 = vand.u32 %v1502, 4294901760
    %1504 = vmatmul.f32.gmra.mxu0 %v1503
    %v1505 = vpop.f32.mrf.mxu0
    %v1506 = vadd.f32 %v1407, %v1505
    %v1507 = vand.u32 %v1317, 4294901760
    %v1508 = vsub.f32 %v1317, %v1507
    %v1509 = vand.u32 %v1508, 4294901760
    %v1510 = vsub.f32 %v1508, %v1509
    %v1511 = vand.u32 %v1510, 4294901760
    %1512 = vmatmul.f32.gmra.mxu0 %v1511
    %v1513 = vpop.f32.mrf.mxu0
    %v1514 = vadd.f32 %v1407, %v1513
    %v1515 = vand.u32 %v1318, 4294901760
    %v1516 = vsub.f32 %v1318, %v1515
    %v1517 = vand.u32 %v1516, 4294901760
    %v1518 = vsub.f32 %v1516, %v1517
    %v1519 = vand.u32 %v1518, 4294901760
    %1520 = vmatmul.f32.gmra.mxu0 %v1519
    %v1521 = vpop.f32.mrf.mxu0
    %v1522 = vadd.f32 %v1407, %v1521
    %v1523 = vand.u32 %v1319, 4294901760
    %v1524 = vsub.f32 %v1319, %v1523
    %v1525 = vand.u32 %v1524, 4294901760
    %v1526 = vsub.f32 %v1524, %v1525
    %v1527 = vand.u32 %v1526, 4294901760
    %1528 = vmatmul.f32.gmra.mxu0 %v1527
    %v1529 = vpop.f32.mrf.mxu0
    %v1530 = vadd.f32 %v1407, %v1529
    %v1531 = vand.u32 %v1320, 4294901760
    %v1532 = vsub.f32 %v1320, %v1531
    %v1533 = vand.u32 %v1532, 4294901760
    %v1534 = vsub.f32 %v1532, %v1533
    %v1535 = vand.u32 %v1534, 4294901760
    %1536 = vmatmul.f32.gmra.mxu0 %v1535
    %v1537 = vpop.f32.mrf.mxu0
    %v1538 = vadd.f32 %v1407, %v1537
    %v1539 = vand.u32 %v1321, 4294901760
    %v1540 = vsub.f32 %v1321, %v1539
    %v1541 = vand.u32 %v1540, 4294901760
    %v1542 = vsub.f32 %v1540, %v1541
    %v1543 = vand.u32 %v1542, 4294901760
    %1544 = vmatmul.f32.gmra.mxu0 %v1543
    %v1545 = vpop.f32.mrf.mxu0
    %v1546 = vadd.f32 %v1407, %v1545
    %v1547 = vand.u32 %v1322, 4294901760
    %v1548 = vsub.f32 %v1322, %v1547
    %v1549 = vand.u32 %v1548, 4294901760
    %v1550 = vsub.f32 %v1548, %v1549
    %v1551 = vand.u32 %v1550, 4294901760
    %1552 = vmatmul.f32.gmra.mxu0 %v1551
    %v1553 = vpop.f32.mrf.mxu0
    %v1554 = vadd.f32 %v1407, %v1553
    %v1555 = vand.u32 %v1323, 4294901760
    %v1556 = vsub.f32 %v1323, %v1555
    %v1557 = vand.u32 %v1556, 4294901760
    %v1558 = vsub.f32 %v1556, %v1557
    %v1559 = vand.u32 %v1558, 4294901760
    %1560 = vmatmul.f32.gmra.mxu0 %v1559
    %v1561 = vpop.f32.mrf.mxu0
    %v1562 = vadd.f32 %v1407, %v1561
    %v1563 = vand.u32 %v1324, 4294901760
    %v1564 = vsub.f32 %v1324, %v1563
    %v1565 = vand.u32 %v1564, 4294901760
    %v1566 = vsub.f32 %v1564, %v1565
    %v1567 = vand.u32 %v1566, 4294901760
    %1568 = vmatmul.f32.gmra.mxu0 %v1567
    %v1569 = vpop.f32.mrf.mxu0
    %v1570 = vadd.f32 %v1407, %v1569
    %v1571 = vand.u32 %v1325, 4294901760
    %v1572 = vsub.f32 %v1325, %v1571
    %v1573 = vand.u32 %v1572, 4294901760
    %v1574 = vsub.f32 %v1572, %v1573
    %v1575 = vand.u32 %v1574, 4294901760
    %1576 = vmatmul.f32.gmra.mxu0 %v1575
    %v1577 = vpop.f32.mrf.mxu0
    %v1578 = vadd.f32 %v1407, %v1577
    %v1579 = vand.u32 %v1326, 4294901760
    %v1580 = vsub.f32 %v1326, %v1579
    %v1581 = vand.u32 %v1580, 4294901760
    %v1582 = vsub.f32 %v1580, %v1581
    %v1583 = vand.u32 %v1582, 4294901760
    %1584 = vmatmul.f32.gmra.mxu0 %v1583
    %v1585 = vpop.f32.mrf.mxu0
    %v1586 = vadd.f32 %v1407, %v1585
    %v1587 = vand.u32 %v1327, 4294901760
    %v1588 = vsub.f32 %v1327, %v1587
    %v1589 = vand.u32 %v1588, 4294901760
    %v1590 = vsub.f32 %v1588, %v1589
    %v1591 = vand.u32 %v1590, 4294901760
    %1592 = vmatmul.f32.gmra.mxu0 %v1591
    %v1593 = vpop.f32.mrf.mxu0
    %v1594 = vadd.f32 %v1407, %v1593
    %v1595 = vand.u32 %v1328, 4294901760
    %v1596 = vsub.f32 %v1328, %v1595
    %v1597 = vand.u32 %v1596, 4294901760
    %v1598 = vsub.f32 %v1596, %v1597
    %v1599 = vand.u32 %v1598, 4294901760
    %1600 = vmatmul.f32.gmra.mxu0 %v1599
    %v1601 = vpop.f32.mrf.mxu0
    %v1602 = vadd.f32 %v1407, %v1601
    %v1603 = vand.u32 %v1329, 4294901760
    %v1604 = vsub.f32 %v1329, %v1603
    %v1605 = vand.u32 %v1604, 4294901760
    %v1606 = vsub.f32 %v1604, %v1605
    %v1607 = vand.u32 %v1606, 4294901760
    %1608 = vmatmul.f32.gmra.mxu0 %v1607
    %v1609 = vpop.f32.mrf.mxu0
    %v1610 = vadd.f32 %v1407, %v1609
    %v1611 = vand.u32 %v1330, 4294901760
    %v1612 = vsub.f32 %v1330, %v1611
    %v1613 = vand.u32 %v1612, 4294901760
    %v1614 = vsub.f32 %v1612, %v1613
    %v1615 = vand.u32 %v1614, 4294901760
    %1616 = vmatmul.f32.gmra.mxu0 %v1615
    %v1617 = vpop.f32.mrf.mxu0
    %v1618 = vadd.f32 %v1407, %v1617
    %v1619 = vand.u32 %v1331, 4294901760
    %v1620 = vsub.f32 %v1331, %v1619
    %v1621 = vand.u32 %v1620, 4294901760
    %v1622 = vsub.f32 %v1620, %v1621
    %v1623 = vand.u32 %v1622, 4294901760
    %1624 = vmatmul.f32.gmra.mxu0 %v1623
    %v1625 = vpop.f32.mrf.mxu0
    %v1626 = vadd.f32 %v1407, %v1625
    %v1627 = vand.u32 %v1332, 4294901760
    %v1628 = vsub.f32 %v1332, %v1627
    %v1629 = vand.u32 %v1628, 4294901760
    %v1630 = vsub.f32 %v1628, %v1629
    %v1631 = vand.u32 %v1630, 4294901760
    %1632 = vmatmul.f32.gmra.mxu0 %v1631
    %v1633 = vpop.f32.mrf.mxu0
    %v1634 = vadd.f32 %v1407, %v1633
    %v1635 = vand.u32 %v1333, 4294901760
    %v1636 = vsub.f32 %v1333, %v1635
    %v1637 = vand.u32 %v1636, 4294901760
    %v1638 = vsub.f32 %v1636, %v1637
    %v1639 = vand.u32 %v1638, 4294901760
    %1640 = vmatmul.f32.gmra.mxu0 %v1639
    %v1641 = vpop.f32.mrf.mxu0
    %v1642 = vadd.f32 %v1407, %v1641
    %v1643 = vand.u32 %v1334, 4294901760
    %v1644 = vsub.f32 %v1334, %v1643
    %v1645 = vand.u32 %v1644, 4294901760
    %v1646 = vsub.f32 %v1644, %v1645
    %v1647 = vand.u32 %v1646, 4294901760
    %1648 = vmatmul.f32.gmra.mxu0 %v1647
    %v1649 = vpop.f32.mrf.mxu0
    %v1650 = vadd.f32 %v1407, %v1649
    %v1651 = vand.u32 %v1335, 4294901760
    %v1652 = vsub.f32 %v1335, %v1651
    %v1653 = vand.u32 %v1652, 4294901760
    %v1654 = vsub.f32 %v1652, %v1653
    %v1655 = vand.u32 %v1654, 4294901760
    %1656 = vmatmul.f32.gmra.mxu0 %v1655
    %v1657 = vpop.f32.mrf.mxu0
    %v1658 = vadd.f32 %v1407, %v1657
    %v1659 = vand.u32 %v1336, 4294901760
    %v1660 = vsub.f32 %v1336, %v1659
    %v1661 = vand.u32 %v1660, 4294901760
    %v1662 = vsub.f32 %v1660, %v1661
    %v1663 = vand.u32 %v1662, 4294901760
    %1664 = vmatmul.f32.gmra.mxu0 %v1663
    %v1665 = vpop.f32.mrf.mxu0
    %v1666 = vadd.f32 %v1407, %v1665
    %v1667 = vand.u32 %v1337, 4294901760
    %v1668 = vsub.f32 %v1337, %v1667
    %v1669 = vand.u32 %v1668, 4294901760
    %v1670 = vsub.f32 %v1668, %v1669
    %v1671 = vand.u32 %v1670, 4294901760
    %1672 = vmatmul.f32.gmra.mxu0 %v1671
    %v1673 = vpop.f32.mrf.mxu0
    %v1674 = vadd.f32 %v1407, %v1673
    %v1675 = vand.u32 %v1338, 4294901760
    %v1676 = vsub.f32 %v1338, %v1675
    %v1677 = vand.u32 %v1676, 4294901760
    %v1678 = vsub.f32 %v1676, %v1677
    %v1679 = vand.u32 %v1678, 4294901760
    %1680 = vmatmul.f32.gmra.mxu0 %v1679
    %v1681 = vpop.f32.mrf.mxu0
    %v1682 = vadd.f32 %v1407, %v1681
    %v1683 = vand.u32 %v1339, 4294901760
    %v1684 = vsub.f32 %v1339, %v1683
    %v1685 = vand.u32 %v1684, 4294901760
    %v1686 = vsub.f32 %v1684, %v1685
    %v1687 = vand.u32 %v1686, 4294901760
    %1688 = vmatmul.f32.gmra.mxu0 %v1687
    %v1689 = vpop.f32.mrf.mxu0
    %v1690 = vadd.f32 %v1407, %v1689
    %v1691 = vand.u32 %v1340, 4294901760
    %v1692 = vsub.f32 %v1340, %v1691
    %v1693 = vand.u32 %v1692, 4294901760
    %v1694 = vsub.f32 %v1692, %v1693
    %v1695 = vand.u32 %v1694, 4294901760
    %1696 = vmatmul.f32.gmra.mxu0 %v1695
    %v1697 = vpop.f32.mrf.mxu0
    %v1698 = vadd.f32 %v1407, %v1697
    %v1699 = vand.u32 %v1341, 4294901760
    %v1700 = vsub.f32 %v1341, %v1699
    %v1701 = vand.u32 %v1700, 4294901760
    %v1702 = vsub.f32 %v1700, %v1701
    %v1703 = vand.u32 %v1702, 4294901760
    %1704 = vmatmul.f32.gmra.mxu0 %v1703
    %v1705 = vpop.f32.mrf.mxu0
    %v1706 = vadd.f32 %v1407, %v1705
    %v1707 = vand.u32 %v1342, 4294901760
    %v1708 = vsub.f32 %v1342, %v1707
    %v1709 = vand.u32 %v1708, 4294901760
    %v1710 = vsub.f32 %v1708, %v1709
    %v1711 = vand.u32 %v1710, 4294901760
    %1712 = vmatmul.f32.gmra.mxu0 %v1711
    %v1713 = vpop.f32.mrf.mxu0
    %v1714 = vadd.f32 %v1407, %v1713
    %v1715 = vand.u32 %v1343, 4294901760
    %v1716 = vsub.f32 %v1343, %v1715
    %v1717 = vand.u32 %v1716, 4294901760
    %v1718 = vsub.f32 %v1716, %v1717
    %v1719 = vand.u32 %v1718, 4294901760
    %1720 = vmatmul.f32.gmra.mxu0 %v1719
    %v1721 = vpop.f32.mrf.mxu0
    %v1722 = vadd.f32 %v1407, %v1721
    %v1723 = vand.u32 %v1344, 4294901760
    %v1724 = vsub.f32 %v1344, %v1723
    %v1725 = vand.u32 %v1724, 4294901760
    %v1726 = vsub.f32 %v1724, %v1725
    %v1727 = vand.u32 %v1726, 4294901760
    %1728 = vmatmul.f32.gmra.mxu0 %v1727
    %v1729 = vpop.f32.mrf.mxu0
    %v1730 = vadd.f32 %v1407, %v1729
    %v1731 = vand.u32 %v1345, 4294901760
    %v1732 = vsub.f32 %v1345, %v1731
    %v1733 = vand.u32 %v1732, 4294901760
    %v1734 = vsub.f32 %v1732, %v1733
    %v1735 = vand.u32 %v1734, 4294901760
    %1736 = vmatmul.f32.gmra.mxu0 %v1735
    %v1737 = vpop.f32.mrf.mxu0
    %v1738 = vadd.f32 %v1407, %v1737
    %v1739 = vand.u32 %v1346, 4294901760
    %v1740 = vsub.f32 %v1346, %v1739
    %v1741 = vand.u32 %v1740, 4294901760
    %v1742 = vsub.f32 %v1740, %v1741
    %v1743 = vand.u32 %v1742, 4294901760
    %1744 = vmatmul.f32.gmra.mxu0 %v1743
    %v1745 = vpop.f32.mrf.mxu0
    %v1746 = vadd.f32 %v1407, %v1745
    %v1747 = vand.u32 %v1347, 4294901760
    %v1748 = vsub.f32 %v1347, %v1747
    %v1749 = vand.u32 %v1748, 4294901760
    %v1750 = vsub.f32 %v1748, %v1749
    %v1751 = vand.u32 %v1750, 4294901760
    %1752 = vmatmul.f32.gmra.mxu0 %v1751
    %v1753 = vpop.f32.mrf.mxu0
    %v1754 = vadd.f32 %v1407, %v1753
    %v1755 = vand.u32 %v1348, 4294901760
    %v1756 = vsub.f32 %v1348, %v1755
    %v1757 = vand.u32 %v1756, 4294901760
    %v1758 = vsub.f32 %v1756, %v1757
    %v1759 = vand.u32 %v1758, 4294901760
    %1760 = vmatmul.f32.gmra.mxu0 %v1759
    %v1761 = vpop.f32.mrf.mxu0
    %v1762 = vadd.f32 %v1407, %v1761
    %v1763 = vand.u32 %v1349, 4294901760
    %v1764 = vsub.f32 %v1349, %v1763
    %v1765 = vand.u32 %v1764, 4294901760
    %v1766 = vsub.f32 %v1764, %v1765
    %v1767 = vand.u32 %v1766, 4294901760
    %1768 = vmatmul.f32.gmra.mxu0 %v1767
    %v1769 = vpop.f32.mrf.mxu0
    %v1770 = vadd.f32 %v1407, %v1769
    %v1771 = vand.u32 %v1350, 4294901760
    %v1772 = vsub.f32 %v1350, %v1771
    %v1773 = vand.u32 %v1772, 4294901760
    %v1774 = vsub.f32 %v1772, %v1773
    %v1775 = vand.u32 %v1774, 4294901760
    %1776 = vmatmul.f32.gmra.mxu0 %v1775
    %v1777 = vpop.f32.mrf.mxu0
    %v1778 = vadd.f32 %v1407, %v1777
    %v1779 = vand.u32 %v1351, 4294901760
    %v1780 = vsub.f32 %v1351, %v1779
    %v1781 = vand.u32 %v1780, 4294901760
    %v1782 = vsub.f32 %v1780, %v1781
    %v1783 = vand.u32 %v1782, 4294901760
    %1784 = vmatmul.f32.gmra.mxu0 %v1783
    %v1785 = vpop.f32.mrf.mxu0
    %v1786 = vadd.f32 %v1407, %v1785
    %v1787 = vand.u32 %v1352, 4294901760
    %v1788 = vsub.f32 %v1352, %v1787
    %v1789 = vand.u32 %v1788, 4294901760
    %v1790 = vsub.f32 %v1788, %v1789
    %v1791 = vand.u32 %v1790, 4294901760
    %1792 = vmatmul.f32.gmra.mxu0 %v1791
    %v1793 = vpop.f32.mrf.mxu0
    %v1794 = vadd.f32 %v1407, %v1793
    %v1795 = vand.u32 %v1353, 4294901760
    %v1796 = vsub.f32 %v1353, %v1795
    %v1797 = vand.u32 %v1796, 4294901760
    %v1798 = vsub.f32 %v1796, %v1797
    %v1799 = vand.u32 %v1798, 4294901760
    %1800 = vmatmul.f32.gmra.mxu0 %v1799
    %v1801 = vpop.f32.mrf.mxu0
    %v1802 = vadd.f32 %v1407, %v1801
    %v1803 = vand.u32 %v1354, 4294901760
    %v1804 = vsub.f32 %v1354, %v1803
    %v1805 = vand.u32 %v1804, 4294901760
    %v1806 = vsub.f32 %v1804, %v1805
    %v1807 = vand.u32 %v1806, 4294901760
    %1808 = vmatmul.f32.gmra.mxu0 %v1807
    %v1809 = vpop.f32.mrf.mxu0
    %v1810 = vadd.f32 %v1407, %v1809
    %v1811 = vand.u32 %v1355, 4294901760
    %v1812 = vsub.f32 %v1355, %v1811
    %v1813 = vand.u32 %v1812, 4294901760
    %v1814 = vsub.f32 %v1812, %v1813
    %v1815 = vand.u32 %v1814, 4294901760
    %1816 = vmatmul.f32.gmra.mxu0 %v1815
    %v1817 = vpop.f32.mrf.mxu0
    %v1818 = vadd.f32 %v1407, %v1817
    %v1819 = vand.u32 %v1356, 4294901760
    %v1820 = vsub.f32 %v1356, %v1819
    %v1821 = vand.u32 %v1820, 4294901760
    %v1822 = vsub.f32 %v1820, %v1821
    %v1823 = vand.u32 %v1822, 4294901760
    %1824 = vmatmul.f32.gmra.mxu0 %v1823
    %v1825 = vpop.f32.mrf.mxu0
    %v1826 = vadd.f32 %v1407, %v1825
    %v1827 = vand.u32 %v1357, 4294901760
    %v1828 = vsub.f32 %v1357, %v1827
    %v1829 = vand.u32 %v1828, 4294901760
    %v1830 = vsub.f32 %v1828, %v1829
    %v1831 = vand.u32 %v1830, 4294901760
    %1832 = vmatmul.f32.gmra.mxu0 %v1831
    %v1833 = vpop.f32.mrf.mxu0
    %v1834 = vadd.f32 %v1407, %v1833
    %v1835 = vand.u32 %v1358, 4294901760
    %v1836 = vsub.f32 %v1358, %v1835
    %v1837 = vand.u32 %v1836, 4294901760
    %v1838 = vsub.f32 %v1836, %v1837
    %v1839 = vand.u32 %v1838, 4294901760
    %1840 = vmatmul.f32.gmra.mxu0 %v1839
    %v1841 = vpop.f32.mrf.mxu0
    %v1842 = vadd.f32 %v1407, %v1841
    %v1843 = vand.u32 %v1359, 4294901760
    %v1844 = vsub.f32 %v1359, %v1843
    %v1845 = vand.u32 %v1844, 4294901760
    %v1846 = vsub.f32 %v1844, %v1845
    %v1847 = vand.u32 %v1846, 4294901760
    %1848 = vmatmul.f32.gmra.mxu0 %v1847
    %v1849 = vpop.f32.mrf.mxu0
    %v1850 = vadd.f32 %v1407, %v1849
    %v1851 = vand.u32 %v1360, 4294901760
    %v1852 = vsub.f32 %v1360, %v1851
    %v1853 = vand.u32 %v1852, 4294901760
    %v1854 = vsub.f32 %v1852, %v1853
    %v1855 = vand.u32 %v1854, 4294901760
    %1856 = vmatmul.f32.gmra.mxu0 %v1855
    %v1857 = vpop.f32.mrf.mxu0
    %v1858 = vadd.f32 %v1407, %v1857
    %v1859 = vand.u32 %v1361, 4294901760
    %v1860 = vsub.f32 %v1361, %v1859
    %v1861 = vand.u32 %v1860, 4294901760
    %v1862 = vsub.f32 %v1860, %v1861
    %v1863 = vand.u32 %v1862, 4294901760
    %1864 = vmatmul.f32.gmra.mxu0 %v1863
    %v1865 = vpop.f32.mrf.mxu0
    %v1866 = vadd.f32 %v1407, %v1865
    %v1867 = vand.u32 %v1362, 4294901760
    %v1868 = vsub.f32 %v1362, %v1867
    %v1869 = vand.u32 %v1868, 4294901760
    %v1870 = vsub.f32 %v1868, %v1869
    %v1871 = vand.u32 %v1870, 4294901760
    %1872 = vmatmul.f32.gmra.mxu0 %v1871
    %v1873 = vpop.f32.mrf.mxu0
    %v1874 = vadd.f32 %v1407, %v1873
    %v1875 = vand.u32 %v1363, 4294901760
    %v1876 = vsub.f32 %v1363, %v1875
    %v1877 = vand.u32 %v1876, 4294901760
    %v1878 = vsub.f32 %v1876, %v1877
    %v1879 = vand.u32 %v1878, 4294901760
    %1880 = vmatmul.f32.gmra.mxu0 %v1879
    %v1881 = vpop.f32.mrf.mxu0
    %v1882 = vadd.f32 %v1407, %v1881
    %v1883 = vand.u32 %v1364, 4294901760
    %v1884 = vsub.f32 %v1364, %v1883
    %v1885 = vand.u32 %v1884, 4294901760
    %v1886 = vsub.f32 %v1884, %v1885
    %v1887 = vand.u32 %v1886, 4294901760
    %1888 = vmatmul.f32.gmra.mxu0 %v1887
    %v1889 = vpop.f32.mrf.mxu0
    %v1890 = vadd.f32 %v1407, %v1889
    %v1891 = vand.u32 %v1365, 4294901760
    %v1892 = vsub.f32 %v1365, %v1891
    %v1893 = vand.u32 %v1892, 4294901760
    %v1894 = vsub.f32 %v1892, %v1893
    %v1895 = vand.u32 %v1894, 4294901760
    %1896 = vmatmul.f32.gmra.mxu0 %v1895
    %v1897 = vpop.f32.mrf.mxu0
    %v1898 = vadd.f32 %v1407, %v1897
    %v1899 = vand.u32 %v1366, 4294901760
    %v1900 = vsub.f32 %v1366, %v1899
    %v1901 = vand.u32 %v1900, 4294901760
    %v1902 = vsub.f32 %v1900, %v1901
    %v1903 = vand.u32 %v1902, 4294901760
    %1904 = vmatmul.f32.gmra.mxu0 %v1903
    %v1905 = vpop.f32.mrf.mxu0
    %v1906 = vadd.f32 %v1407, %v1905
    %v1907 = vand.u32 %v1367, 4294901760
    %v1908 = vsub.f32 %v1367, %v1907
    %v1909 = vand.u32 %v1908, 4294901760
    %v1910 = vsub.f32 %v1908, %v1909
    %v1911 = vand.u32 %v1910, 4294901760
    %1912 = vmatmul.f32.gmra.mxu0 %v1911
    %v1913 = vpop.f32.mrf.mxu0
    %v1914 = vadd.f32 %v1407, %v1913
    %v1915 = vand.u32 %v1368, 4294901760
    %v1916 = vsub.f32 %v1368, %v1915
    %v1917 = vand.u32 %v1916, 4294901760
    %v1918 = vsub.f32 %v1916, %v1917
    %v1919 = vand.u32 %v1918, 4294901760
    %1920 = vmatmul.f32.gmra.mxu0 %v1919
    %v1921 = vpop.f32.mrf.mxu0
    %v1922 = vadd.f32 %v1407, %v1921
    %v1923 = vand.u32 %v1369, 4294901760
    %v1924 = vsub.f32 %v1369, %v1923
    %v1925 = vand.u32 %v1924, 4294901760
    %v1926 = vsub.f32 %v1924, %v1925
    %v1927 = vand.u32 %v1926, 4294901760
    %1928 = vmatmul.f32.gmra.mxu0 %v1927
    %v1929 = vpop.f32.mrf.mxu0
    %v1930 = vadd.f32 %v1407, %v1929
    %v1931 = vand.u32 %v1370, 4294901760
    %v1932 = vsub.f32 %v1370, %v1931
    %v1933 = vand.u32 %v1932, 4294901760
    %v1934 = vsub.f32 %v1932, %v1933
    %v1935 = vand.u32 %v1934, 4294901760
    %1936 = vmatmul.f32.gmra.mxu0 %v1935
    %v1937 = vpop.f32.mrf.mxu0
    %v1938 = vadd.f32 %v1407, %v1937
    %v1939 = vand.u32 %v1371, 4294901760
    %v1940 = vsub.f32 %v1371, %v1939
    %v1941 = vand.u32 %v1940, 4294901760
    %v1942 = vsub.f32 %v1940, %v1941
    %v1943 = vand.u32 %v1942, 4294901760
    %1944 = vmatmul.f32.gmra.mxu0 %v1943
    %v1945 = vpop.f32.mrf.mxu0
    %v1946 = vadd.f32 %v1407, %v1945
    %v1947 = vand.u32 %v1372, 4294901760
    %v1948 = vsub.f32 %v1372, %v1947
    %v1949 = vand.u32 %v1948, 4294901760
    %v1950 = vsub.f32 %v1948, %v1949
    %v1951 = vand.u32 %v1950, 4294901760
    %1952 = vmatmul.f32.gmra.mxu0 %v1951
    %v1953 = vpop.f32.mrf.mxu0
    %v1954 = vadd.f32 %v1407, %v1953
    %1955 = vdwg.mxu0
    %v1956 = vand.u32 %v1403, 4294901760
    %v1957 = vsub.f32 %v1403, %v1956
    %v1958 = vand.u32 %v1957, 4294901760
    %v1959 = vsub.f32 %v1957, %v1958
    %v1960 = vand.u32 %v1959, 4294901760
    %1961 = vmatpush.msra.mxu0 %v1960
    %v1962 = vand.u32 %v1401, 4294901760
    %v1963 = vsub.f32 %v1401, %v1962
    %v1964 = vand.u32 %v1963, 4294901760
    %v1965 = vsub.f32 %v1963, %v1964
    %v1966 = vand.u32 %v1965, 4294901760
    %1967 = vmatpush.msra.mxu0 %v1966
    %v1968 = vand.u32 %v1399, 4294901760
    %v1969 = vsub.f32 %v1399, %v1968
    %v1970 = vand.u32 %v1969, 4294901760
    %v1971 = vsub.f32 %v1969, %v1970
    %v1972 = vand.u32 %v1971, 4294901760
    %1973 = vmatpush.msra.mxu0 %v1972
    %v1974 = vand.u32 %v1397, 4294901760
    %v1975 = vsub.f32 %v1397, %v1974
    %v1976 = vand.u32 %v1975, 4294901760
    %v1977 = vsub.f32 %v1975, %v1976
    %v1978 = vand.u32 %v1977, 4294901760
    %1979 = vmatpush.msra.mxu0 %v1978
    %v1980 = vand.u32 %v1395, 4294901760
    %v1981 = vsub.f32 %v1395, %v1980
    %v1982 = vand.u32 %v1981, 4294901760
    %v1983 = vsub.f32 %v1981, %v1982
    %v1984 = vand.u32 %v1983, 4294901760
    %1985 = vmatpush.msra.mxu0 %v1984
    %v1986 = vand.u32 %v1393, 4294901760
    %v1987 = vsub.f32 %v1393, %v1986
    %v1988 = vand.u32 %v1987, 4294901760
    %v1989 = vsub.f32 %v1987, %v1988
    %v1990 = vand.u32 %v1989, 4294901760
    %1991 = vmatpush.msra.mxu0 %v1990
    %v1992 = vand.u32 %v1391, 4294901760
    %v1993 = vsub.f32 %v1391, %v1992
    %v1994 = vand.u32 %v1993, 4294901760
    %v1995 = vsub.f32 %v1993, %v1994
    %v1996 = vand.u32 %v1995, 4294901760
    %1997 = vmatpush.msra.mxu0 %v1996
    %v1998 = vand.u32 %v1389, 4294901760
    %v1999 = vsub.f32 %v1389, %v1998
    %v2000 = vand.u32 %v1999, 4294901760
    %v2001 = vsub.f32 %v1999, %v2000
    %v2002 = vand.u32 %v2001, 4294901760
    %2003 = vmatpush.msra.mxu0 %v2002
    %v2004 = vand.u32 %v1387, 4294901760
    %v2005 = vsub.f32 %v1387, %v2004
    %v2006 = vand.u32 %v2005, 4294901760
    %v2007 = vsub.f32 %v2005, %v2006
    %v2008 = vand.u32 %v2007, 4294901760
    %2009 = vmatpush.msra.mxu0 %v2008
    %v2010 = vand.u32 %v1385, 4294901760
    %v2011 = vsub.f32 %v1385, %v2010
    %v2012 = vand.u32 %v2011, 4294901760
    %v2013 = vsub.f32 %v2011, %v2012
    %v2014 = vand.u32 %v2013, 4294901760
    %2015 = vmatpush.msra.mxu0 %v2014
    %v2016 = vand.u32 %v1383, 4294901760
    %v2017 = vsub.f32 %v1383, %v2016
    %v2018 = vand.u32 %v2017, 4294901760
    %v2019 = vsub.f32 %v2017, %v2018
    %v2020 = vand.u32 %v2019, 4294901760
    %2021 = vmatpush.msra.mxu0 %v2020
    %v2022 = vand.u32 %v1381, 4294901760
    %v2023 = vsub.f32 %v1381, %v2022
    %v2024 = vand.u32 %v2023, 4294901760
    %v2025 = vsub.f32 %v2023, %v2024
    %v2026 = vand.u32 %v2025, 4294901760
    %2027 = vmatpush.msra.mxu0 %v2026
    %v2028 = vand.u32 %v1379, 4294901760
    %v2029 = vsub.f32 %v1379, %v2028
    %v2030 = vand.u32 %v2029, 4294901760
    %v2031 = vsub.f32 %v2029, %v2030
    %v2032 = vand.u32 %v2031, 4294901760
    %2033 = vmatpush.msra.mxu0 %v2032
    %v2034 = vand.u32 %v1377, 4294901760
    %v2035 = vsub.f32 %v1377, %v2034
    %v2036 = vand.u32 %v2035, 4294901760
    %v2037 = vsub.f32 %v2035, %v2036
    %v2038 = vand.u32 %v2037, 4294901760
    %2039 = vmatpush.msra.mxu0 %v2038
    %v2040 = vand.u32 %v1375, 4294901760
    %v2041 = vsub.f32 %v1375, %v2040
    %v2042 = vand.u32 %v2041, 4294901760
    %v2043 = vsub.f32 %v2041, %v2042
    %v2044 = vand.u32 %v2043, 4294901760
    %2045 = vmatpush.msra.mxu0 %v2044
    %v2046 = vand.u32 %v1373, 4294901760
    %v2047 = vsub.f32 %v1373, %v2046
    %v2048 = vand.u32 %v2047, 4294901760
    %v2049 = vsub.f32 %v2047, %v2048
    %v2050 = vand.u32 %v2049, 4294901760
    %2051 = vmatpush.msra.mxu0 %v2050
    %v2052 = vand.u32 %v1309, 4294901760
    %2053 = vmatmul.f32.gmra.mxu0 %v2052
    %v2054 = vpop.f32.mrf.mxu0
    %v2055 = vadd.f32 %v1450, %v2054
    %v2056 = vand.u32 %v1310, 4294901760
    %2057 = vmatmul.f32.gmra.mxu0 %v2056
    %v2058 = vpop.f32.mrf.mxu0
    %v2059 = vadd.f32 %v1458, %v2058
    %v2060 = vand.u32 %v1311, 4294901760
    %2061 = vmatmul.f32.gmra.mxu0 %v2060
    %v2062 = vpop.f32.mrf.mxu0
    %v2063 = vadd.f32 %v1466, %v2062
    %v2064 = vand.u32 %v1312, 4294901760
    %2065 = vmatmul.f32.gmra.mxu0 %v2064
    %v2066 = vpop.f32.mrf.mxu0
    %v2067 = vadd.f32 %v1474, %v2066
    %v2068 = vand.u32 %v1313, 4294901760
    %2069 = vmatmul.f32.gmra.mxu0 %v2068
    %v2070 = vpop.f32.mrf.mxu0
    %v2071 = vadd.f32 %v1482, %v2070
    %v2072 = vand.u32 %v1314, 4294901760
    %2073 = vmatmul.f32.gmra.mxu0 %v2072
    %v2074 = vpop.f32.mrf.mxu0
    %v2075 = vadd.f32 %v1490, %v2074
    %v2076 = vand.u32 %v1315, 4294901760
    %2077 = vmatmul.f32.gmra.mxu0 %v2076
    %v2078 = vpop.f32.mrf.mxu0
    %v2079 = vadd.f32 %v1498, %v2078
    %v2080 = vand.u32 %v1316, 4294901760
    %2081 = vmatmul.f32.gmra.mxu0 %v2080
    %v2082 = vpop.f32.mrf.mxu0
    %v2083 = vadd.f32 %v1506, %v2082
    %v2084 = vand.u32 %v1317, 4294901760
    %2085 = vmatmul.f32.gmra.mxu0 %v2084
    %v2086 = vpop.f32.mrf.mxu0
    %v2087 = vadd.f32 %v1514, %v2086
    %v2088 = vand.u32 %v1318, 4294901760
    %2089 = vmatmul.f32.gmra.mxu0 %v2088
    %v2090 = vpop.f32.mrf.mxu0
    %v2091 = vadd.f32 %v1522, %v2090
    %v2092 = vand.u32 %v1319, 4294901760
    %2093 = vmatmul.f32.gmra.mxu0 %v2092
    %v2094 = vpop.f32.mrf.mxu0
    %v2095 = vadd.f32 %v1530, %v2094
    %v2096 = vand.u32 %v1320, 4294901760
    %2097 = vmatmul.f32.gmra.mxu0 %v2096
    %v2098 = vpop.f32.mrf.mxu0
    %v2099 = vadd.f32 %v1538, %v2098
    %v2100 = vand.u32 %v1321, 4294901760
    %2101 = vmatmul.f32.gmra.mxu0 %v2100
    %v2102 = vpop.f32.mrf.mxu0
    %v2103 = vadd.f32 %v1546, %v2102
    %v2104 = vand.u32 %v1322, 4294901760
    %2105 = vmatmul.f32.gmra.mxu0 %v2104
    %v2106 = vpop.f32.mrf.mxu0
    %v2107 = vadd.f32 %v1554, %v2106
    %v2108 = vand.u32 %v1323, 4294901760
    %2109 = vmatmul.f32.gmra.mxu0 %v2108
    %v2110 = vpop.f32.mrf.mxu0
    %v2111 = vadd.f32 %v1562, %v2110
    %v2112 = vand.u32 %v1324, 4294901760
    %2113 = vmatmul.f32.gmra.mxu0 %v2112
    %v2114 = vpop.f32.mrf.mxu0
    %v2115 = vadd.f32 %v1570, %v2114
    %v2116 = vand.u32 %v1325, 4294901760
    %2117 = vmatmul.f32.gmra.mxu0 %v2116
    %v2118 = vpop.f32.mrf.mxu0
    %v2119 = vadd.f32 %v1578, %v2118
    %v2120 = vand.u32 %v1326, 4294901760
    %2121 = vmatmul.f32.gmra.mxu0 %v2120
    %v2122 = vpop.f32.mrf.mxu0
    %v2123 = vadd.f32 %v1586, %v2122
    %v2124 = vand.u32 %v1327, 4294901760
    %2125 = vmatmul.f32.gmra.mxu0 %v2124
    %v2126 = vpop.f32.mrf.mxu0
    %v2127 = vadd.f32 %v1594, %v2126
    %v2128 = vand.u32 %v1328, 4294901760
    %2129 = vmatmul.f32.gmra.mxu0 %v2128
    %v2130 = vpop.f32.mrf.mxu0
    %v2131 = vadd.f32 %v1602, %v2130
    %v2132 = vand.u32 %v1329, 4294901760
    %2133 = vmatmul.f32.gmra.mxu0 %v2132
    %v2134 = vpop.f32.mrf.mxu0
    %v2135 = vadd.f32 %v1610, %v2134
    %v2136 = vand.u32 %v1330, 4294901760
    %2137 = vmatmul.f32.gmra.mxu0 %v2136
    %v2138 = vpop.f32.mrf.mxu0
    %v2139 = vadd.f32 %v1618, %v2138
    %v2140 = vand.u32 %v1331, 4294901760
    %2141 = vmatmul.f32.gmra.mxu0 %v2140
    %v2142 = vpop.f32.mrf.mxu0
    %v2143 = vadd.f32 %v1626, %v2142
    %v2144 = vand.u32 %v1332, 4294901760
    %2145 = vmatmul.f32.gmra.mxu0 %v2144
    %v2146 = vpop.f32.mrf.mxu0
    %v2147 = vadd.f32 %v1634, %v2146
    %v2148 = vand.u32 %v1333, 4294901760
    %2149 = vmatmul.f32.gmra.mxu0 %v2148
    %v2150 = vpop.f32.mrf.mxu0
    %v2151 = vadd.f32 %v1642, %v2150
    %v2152 = vand.u32 %v1334, 4294901760
    %2153 = vmatmul.f32.gmra.mxu0 %v2152
    %v2154 = vpop.f32.mrf.mxu0
    %v2155 = vadd.f32 %v1650, %v2154
    %v2156 = vand.u32 %v1335, 4294901760
    %2157 = vmatmul.f32.gmra.mxu0 %v2156
    %v2158 = vpop.f32.mrf.mxu0
    %v2159 = vadd.f32 %v1658, %v2158
    %v2160 = vand.u32 %v1336, 4294901760
    %2161 = vmatmul.f32.gmra.mxu0 %v2160
    %v2162 = vpop.f32.mrf.mxu0
    %v2163 = vadd.f32 %v1666, %v2162
    %v2164 = vand.u32 %v1337, 4294901760
    %2165 = vmatmul.f32.gmra.mxu0 %v2164
    %v2166 = vpop.f32.mrf.mxu0
    %v2167 = vadd.f32 %v1674, %v2166
    %v2168 = vand.u32 %v1338, 4294901760
    %2169 = vmatmul.f32.gmra.mxu0 %v2168
    %v2170 = vpop.f32.mrf.mxu0
    %v2171 = vadd.f32 %v1682, %v2170
    %v2172 = vand.u32 %v1339, 4294901760
    %2173 = vmatmul.f32.gmra.mxu0 %v2172
    %v2174 = vpop.f32.mrf.mxu0
    %v2175 = vadd.f32 %v1690, %v2174
    %v2176 = vand.u32 %v1340, 4294901760
    %2177 = vmatmul.f32.gmra.mxu0 %v2176
    %v2178 = vpop.f32.mrf.mxu0
    %v2179 = vadd.f32 %v1698, %v2178
    %v2180 = vand.u32 %v1341, 4294901760
    %2181 = vmatmul.f32.gmra.mxu0 %v2180
    %v2182 = vpop.f32.mrf.mxu0
    %v2183 = vadd.f32 %v1706, %v2182
    %v2184 = vand.u32 %v1342, 4294901760
    %2185 = vmatmul.f32.gmra.mxu0 %v2184
    %v2186 = vpop.f32.mrf.mxu0
    %v2187 = vadd.f32 %v1714, %v2186
    %v2188 = vand.u32 %v1343, 4294901760
    %2189 = vmatmul.f32.gmra.mxu0 %v2188
    %v2190 = vpop.f32.mrf.mxu0
    %v2191 = vadd.f32 %v1722, %v2190
    %v2192 = vand.u32 %v1344, 4294901760
    %2193 = vmatmul.f32.gmra.mxu0 %v2192
    %v2194 = vpop.f32.mrf.mxu0
    %v2195 = vadd.f32 %v1730, %v2194
    %v2196 = vand.u32 %v1345, 4294901760
    %2197 = vmatmul.f32.gmra.mxu0 %v2196
    %v2198 = vpop.f32.mrf.mxu0
    %v2199 = vadd.f32 %v1738, %v2198
    %v2200 = vand.u32 %v1346, 4294901760
    %2201 = vmatmul.f32.gmra.mxu0 %v2200
    %v2202 = vpop.f32.mrf.mxu0
    %v2203 = vadd.f32 %v1746, %v2202
    %v2204 = vand.u32 %v1347, 4294901760
    %2205 = vmatmul.f32.gmra.mxu0 %v2204
    %v2206 = vpop.f32.mrf.mxu0
    %v2207 = vadd.f32 %v1754, %v2206
    %v2208 = vand.u32 %v1348, 4294901760
    %2209 = vmatmul.f32.gmra.mxu0 %v2208
    %v2210 = vpop.f32.mrf.mxu0
    %v2211 = vadd.f32 %v1762, %v2210
    %v2212 = vand.u32 %v1349, 4294901760
    %2213 = vmatmul.f32.gmra.mxu0 %v2212
    %v2214 = vpop.f32.mrf.mxu0
    %v2215 = vadd.f32 %v1770, %v2214
    %v2216 = vand.u32 %v1350, 4294901760
    %2217 = vmatmul.f32.gmra.mxu0 %v2216
    %v2218 = vpop.f32.mrf.mxu0
    %v2219 = vadd.f32 %v1778, %v2218
    %v2220 = vand.u32 %v1351, 4294901760
    %2221 = vmatmul.f32.gmra.mxu0 %v2220
    %v2222 = vpop.f32.mrf.mxu0
    %v2223 = vadd.f32 %v1786, %v2222
    %v2224 = vand.u32 %v1352, 4294901760
    %2225 = vmatmul.f32.gmra.mxu0 %v2224
    %v2226 = vpop.f32.mrf.mxu0
    %v2227 = vadd.f32 %v1794, %v2226
    %v2228 = vand.u32 %v1353, 4294901760
    %2229 = vmatmul.f32.gmra.mxu0 %v2228
    %v2230 = vpop.f32.mrf.mxu0
    %v2231 = vadd.f32 %v1802, %v2230
    %v2232 = vand.u32 %v1354, 4294901760
    %2233 = vmatmul.f32.gmra.mxu0 %v2232
    %v2234 = vpop.f32.mrf.mxu0
    %v2235 = vadd.f32 %v1810, %v2234
    %v2236 = vand.u32 %v1355, 4294901760
    %2237 = vmatmul.f32.gmra.mxu0 %v2236
    %v2238 = vpop.f32.mrf.mxu0
    %v2239 = vadd.f32 %v1818, %v2238
    %v2240 = vand.u32 %v1356, 4294901760
    %2241 = vmatmul.f32.gmra.mxu0 %v2240
    %v2242 = vpop.f32.mrf.mxu0
    %v2243 = vadd.f32 %v1826, %v2242
    %v2244 = vand.u32 %v1357, 4294901760
    %2245 = vmatmul.f32.gmra.mxu0 %v2244
    %v2246 = vpop.f32.mrf.mxu0
    %v2247 = vadd.f32 %v1834, %v2246
    %v2248 = vand.u32 %v1358, 4294901760
    %2249 = vmatmul.f32.gmra.mxu0 %v2248
    %v2250 = vpop.f32.mrf.mxu0
    %v2251 = vadd.f32 %v1842, %v2250
    %v2252 = vand.u32 %v1359, 4294901760
    %2253 = vmatmul.f32.gmra.mxu0 %v2252
    %v2254 = vpop.f32.mrf.mxu0
    %v2255 = vadd.f32 %v1850, %v2254
    %v2256 = vand.u32 %v1360, 4294901760
    %2257 = vmatmul.f32.gmra.mxu0 %v2256
    %v2258 = vpop.f32.mrf.mxu0
    %v2259 = vadd.f32 %v1858, %v2258
    %v2260 = vand.u32 %v1361, 4294901760
    %2261 = vmatmul.f32.gmra.mxu0 %v2260
    %v2262 = vpop.f32.mrf.mxu0
    %v2263 = vadd.f32 %v1866, %v2262
    %v2264 = vand.u32 %v1362, 4294901760
    %2265 = vmatmul.f32.gmra.mxu0 %v2264
    %v2266 = vpop.f32.mrf.mxu0
    %v2267 = vadd.f32 %v1874, %v2266
    %v2268 = vand.u32 %v1363, 4294901760
    %2269 = vmatmul.f32.gmra.mxu0 %v2268
    %v2270 = vpop.f32.mrf.mxu0
    %v2271 = vadd.f32 %v1882, %v2270
    %v2272 = vand.u32 %v1364, 4294901760
    %2273 = vmatmul.f32.gmra.mxu0 %v2272
    %v2274 = vpop.f32.mrf.mxu0
    %v2275 = vadd.f32 %v1890, %v2274
    %v2276 = vand.u32 %v1365, 4294901760
    %2277 = vmatmul.f32.gmra.mxu0 %v2276
    %v2278 = vpop.f32.mrf.mxu0
    %v2279 = vadd.f32 %v1898, %v2278
    %v2280 = vand.u32 %v1366, 4294901760
    %2281 = vmatmul.f32.gmra.mxu0 %v2280
    %v2282 = vpop.f32.mrf.mxu0
    %v2283 = vadd.f32 %v1906, %v2282
    %v2284 = vand.u32 %v1367, 4294901760
    %2285 = vmatmul.f32.gmra.mxu0 %v2284
    %v2286 = vpop.f32.mrf.mxu0
    %v2287 = vadd.f32 %v1914, %v2286
    %v2288 = vand.u32 %v1368, 4294901760
    %2289 = vmatmul.f32.gmra.mxu0 %v2288
    %v2290 = vpop.f32.mrf.mxu0
    %v2291 = vadd.f32 %v1922, %v2290
    %v2292 = vand.u32 %v1369, 4294901760
    %2293 = vmatmul.f32.gmra.mxu0 %v2292
    %v2294 = vpop.f32.mrf.mxu0
    %v2295 = vadd.f32 %v1930, %v2294
    %v2296 = vand.u32 %v1370, 4294901760
    %2297 = vmatmul.f32.gmra.mxu0 %v2296
    %v2298 = vpop.f32.mrf.mxu0
    %v2299 = vadd.f32 %v1938, %v2298
    %v2300 = vand.u32 %v1371, 4294901760
    %2301 = vmatmul.f32.gmra.mxu0 %v2300
    %v2302 = vpop.f32.mrf.mxu0
    %v2303 = vadd.f32 %v1946, %v2302
    %v2304 = vand.u32 %v1372, 4294901760
    %2305 = vmatmul.f32.gmra.mxu0 %v2304
    %v2306 = vpop.f32.mrf.mxu0
    %v2307 = vadd.f32 %v1954, %v2306
    %2308 = vdwg.mxu0
    %v2309 = vand.u32 %v1403, 4294901760
    %v2310 = vsub.f32 %v1403, %v2309
    %2311 = vmatpush.msra.mxu0 %v2310
    %v2312 = vand.u32 %v1401, 4294901760
    %v2313 = vsub.f32 %v1401, %v2312
    %2314 = vmatpush.msra.mxu0 %v2313
    %v2315 = vand.u32 %v1399, 4294901760
    %v2316 = vsub.f32 %v1399, %v2315
    %2317 = vmatpush.msra.mxu0 %v2316
    %v2318 = vand.u32 %v1397, 4294901760
    %v2319 = vsub.f32 %v1397, %v2318
    %2320 = vmatpush.msra.mxu0 %v2319
    %v2321 = vand.u32 %v1395, 4294901760
    %v2322 = vsub.f32 %v1395, %v2321
    %2323 = vmatpush.msra.mxu0 %v2322
    %v2324 = vand.u32 %v1393, 4294901760
    %v2325 = vsub.f32 %v1393, %v2324
    %2326 = vmatpush.msra.mxu0 %v2325
    %v2327 = vand.u32 %v1391, 4294901760
    %v2328 = vsub.f32 %v1391, %v2327
    %2329 = vmatpush.msra.mxu0 %v2328
    %v2330 = vand.u32 %v1389, 4294901760
    %v2331 = vsub.f32 %v1389, %v2330
    %2332 = vmatpush.msra.mxu0 %v2331
    %v2333 = vand.u32 %v1387, 4294901760
    %v2334 = vsub.f32 %v1387, %v2333
    %2335 = vmatpush.msra.mxu0 %v2334
    %v2336 = vand.u32 %v1385, 4294901760
    %v2337 = vsub.f32 %v1385, %v2336
    %2338 = vmatpush.msra.mxu0 %v2337
    %v2339 = vand.u32 %v1383, 4294901760
    %v2340 = vsub.f32 %v1383, %v2339
    %2341 = vmatpush.msra.mxu0 %v2340
    %v2342 = vand.u32 %v1381, 4294901760
    %v2343 = vsub.f32 %v1381, %v2342
    %2344 = vmatpush.msra.mxu0 %v2343
    %v2345 = vand.u32 %v1379, 4294901760
    %v2346 = vsub.f32 %v1379, %v2345
    %2347 = vmatpush.msra.mxu0 %v2346
    %v2348 = vand.u32 %v1377, 4294901760
    %v2349 = vsub.f32 %v1377, %v2348
    %2350 = vmatpush.msra.mxu0 %v2349
    %v2351 = vand.u32 %v1375, 4294901760
    %v2352 = vsub.f32 %v1375, %v2351
    %2353 = vmatpush.msra.mxu0 %v2352
    %v2354 = vand.u32 %v1373, 4294901760
    %v2355 = vsub.f32 %v1373, %v2354
    %2356 = vmatpush.msra.mxu0 %v2355
    %v2357 = vand.u32 %v1309, 4294901760
    %v2358 = vsub.f32 %v1309, %v2357
    %2359 = vmatmul.f32.gmra.mxu0 %v2358
    %v2360 = vpop.f32.mrf.mxu0
    %v2361 = vadd.f32 %v2055, %v2360
    %v2362 = vand.u32 %v1310, 4294901760
    %v2363 = vsub.f32 %v1310, %v2362
    %2364 = vmatmul.f32.gmra.mxu0 %v2363
    %v2365 = vpop.f32.mrf.mxu0
    %v2366 = vadd.f32 %v2059, %v2365
    %v2367 = vand.u32 %v1311, 4294901760
    %v2368 = vsub.f32 %v1311, %v2367
    %2369 = vmatmul.f32.gmra.mxu0 %v2368
    %v2370 = vpop.f32.mrf.mxu0
    %v2371 = vadd.f32 %v2063, %v2370
    %v2372 = vand.u32 %v1312, 4294901760
    %v2373 = vsub.f32 %v1312, %v2372
    %2374 = vmatmul.f32.gmra.mxu0 %v2373
    %v2375 = vpop.f32.mrf.mxu0
    %v2376 = vadd.f32 %v2067, %v2375
    %v2377 = vand.u32 %v1313, 4294901760
    %v2378 = vsub.f32 %v1313, %v2377
    %2379 = vmatmul.f32.gmra.mxu0 %v2378
    %v2380 = vpop.f32.mrf.mxu0
    %v2381 = vadd.f32 %v2071, %v2380
    %v2382 = vand.u32 %v1314, 4294901760
    %v2383 = vsub.f32 %v1314, %v2382
    %2384 = vmatmul.f32.gmra.mxu0 %v2383
    %v2385 = vpop.f32.mrf.mxu0
    %v2386 = vadd.f32 %v2075, %v2385
    %v2387 = vand.u32 %v1315, 4294901760
    %v2388 = vsub.f32 %v1315, %v2387
    %2389 = vmatmul.f32.gmra.mxu0 %v2388
    %v2390 = vpop.f32.mrf.mxu0
    %v2391 = vadd.f32 %v2079, %v2390
    %v2392 = vand.u32 %v1316, 4294901760
    %v2393 = vsub.f32 %v1316, %v2392
    %2394 = vmatmul.f32.gmra.mxu0 %v2393
    %v2395 = vpop.f32.mrf.mxu0
    %v2396 = vadd.f32 %v2083, %v2395
    %v2397 = vand.u32 %v1317, 4294901760
    %v2398 = vsub.f32 %v1317, %v2397
    %2399 = vmatmul.f32.gmra.mxu0 %v2398
    %v2400 = vpop.f32.mrf.mxu0
    %v2401 = vadd.f32 %v2087, %v2400
    %v2402 = vand.u32 %v1318, 4294901760
    %v2403 = vsub.f32 %v1318, %v2402
    %2404 = vmatmul.f32.gmra.mxu0 %v2403
    %v2405 = vpop.f32.mrf.mxu0
    %v2406 = vadd.f32 %v2091, %v2405
    %v2407 = vand.u32 %v1319, 4294901760
    %v2408 = vsub.f32 %v1319, %v2407
    %2409 = vmatmul.f32.gmra.mxu0 %v2408
    %v2410 = vpop.f32.mrf.mxu0
    %v2411 = vadd.f32 %v2095, %v2410
    %v2412 = vand.u32 %v1320, 4294901760
    %v2413 = vsub.f32 %v1320, %v2412
    %2414 = vmatmul.f32.gmra.mxu0 %v2413
    %v2415 = vpop.f32.mrf.mxu0
    %v2416 = vadd.f32 %v2099, %v2415
    %v2417 = vand.u32 %v1321, 4294901760
    %v2418 = vsub.f32 %v1321, %v2417
    %2419 = vmatmul.f32.gmra.mxu0 %v2418
    %v2420 = vpop.f32.mrf.mxu0
    %v2421 = vadd.f32 %v2103, %v2420
    %v2422 = vand.u32 %v1322, 4294901760
    %v2423 = vsub.f32 %v1322, %v2422
    %2424 = vmatmul.f32.gmra.mxu0 %v2423
    %v2425 = vpop.f32.mrf.mxu0
    %v2426 = vadd.f32 %v2107, %v2425
    %v2427 = vand.u32 %v1323, 4294901760
    %v2428 = vsub.f32 %v1323, %v2427
    %2429 = vmatmul.f32.gmra.mxu0 %v2428
    %v2430 = vpop.f32.mrf.mxu0
    %v2431 = vadd.f32 %v2111, %v2430
    %v2432 = vand.u32 %v1324, 4294901760
    %v2433 = vsub.f32 %v1324, %v2432
    %2434 = vmatmul.f32.gmra.mxu0 %v2433
    %v2435 = vpop.f32.mrf.mxu0
    %v2436 = vadd.f32 %v2115, %v2435
    %v2437 = vand.u32 %v1325, 4294901760
    %v2438 = vsub.f32 %v1325, %v2437
    %2439 = vmatmul.f32.gmra.mxu0 %v2438
    %v2440 = vpop.f32.mrf.mxu0
    %v2441 = vadd.f32 %v2119, %v2440
    %v2442 = vand.u32 %v1326, 4294901760
    %v2443 = vsub.f32 %v1326, %v2442
    %2444 = vmatmul.f32.gmra.mxu0 %v2443
    %v2445 = vpop.f32.mrf.mxu0
    %v2446 = vadd.f32 %v2123, %v2445
    %v2447 = vand.u32 %v1327, 4294901760
    %v2448 = vsub.f32 %v1327, %v2447
    %2449 = vmatmul.f32.gmra.mxu0 %v2448
    %v2450 = vpop.f32.mrf.mxu0
    %v2451 = vadd.f32 %v2127, %v2450
    %v2452 = vand.u32 %v1328, 4294901760
    %v2453 = vsub.f32 %v1328, %v2452
    %2454 = vmatmul.f32.gmra.mxu0 %v2453
    %v2455 = vpop.f32.mrf.mxu0
    %v2456 = vadd.f32 %v2131, %v2455
    %v2457 = vand.u32 %v1329, 4294901760
    %v2458 = vsub.f32 %v1329, %v2457
    %2459 = vmatmul.f32.gmra.mxu0 %v2458
    %v2460 = vpop.f32.mrf.mxu0
    %v2461 = vadd.f32 %v2135, %v2460
    %v2462 = vand.u32 %v1330, 4294901760
    %v2463 = vsub.f32 %v1330, %v2462
    %2464 = vmatmul.f32.gmra.mxu0 %v2463
    %v2465 = vpop.f32.mrf.mxu0
    %v2466 = vadd.f32 %v2139, %v2465
    %v2467 = vand.u32 %v1331, 4294901760
    %v2468 = vsub.f32 %v1331, %v2467
    %2469 = vmatmul.f32.gmra.mxu0 %v2468
    %v2470 = vpop.f32.mrf.mxu0
    %v2471 = vadd.f32 %v2143, %v2470
    %v2472 = vand.u32 %v1332, 4294901760
    %v2473 = vsub.f32 %v1332, %v2472
    %2474 = vmatmul.f32.gmra.mxu0 %v2473
    %v2475 = vpop.f32.mrf.mxu0
    %v2476 = vadd.f32 %v2147, %v2475
    %v2477 = vand.u32 %v1333, 4294901760
    %v2478 = vsub.f32 %v1333, %v2477
    %2479 = vmatmul.f32.gmra.mxu0 %v2478
    %v2480 = vpop.f32.mrf.mxu0
    %v2481 = vadd.f32 %v2151, %v2480
    %v2482 = vand.u32 %v1334, 4294901760
    %v2483 = vsub.f32 %v1334, %v2482
    %2484 = vmatmul.f32.gmra.mxu0 %v2483
    %v2485 = vpop.f32.mrf.mxu0
    %v2486 = vadd.f32 %v2155, %v2485
    %v2487 = vand.u32 %v1335, 4294901760
    %v2488 = vsub.f32 %v1335, %v2487
    %2489 = vmatmul.f32.gmra.mxu0 %v2488
    %v2490 = vpop.f32.mrf.mxu0
    %v2491 = vadd.f32 %v2159, %v2490
    %v2492 = vand.u32 %v1336, 4294901760
    %v2493 = vsub.f32 %v1336, %v2492
    %2494 = vmatmul.f32.gmra.mxu0 %v2493
    %v2495 = vpop.f32.mrf.mxu0
    %v2496 = vadd.f32 %v2163, %v2495
    %v2497 = vand.u32 %v1337, 4294901760
    %v2498 = vsub.f32 %v1337, %v2497
    %2499 = vmatmul.f32.gmra.mxu0 %v2498
    %v2500 = vpop.f32.mrf.mxu0
    %v2501 = vadd.f32 %v2167, %v2500
    %v2502 = vand.u32 %v1338, 4294901760
    %v2503 = vsub.f32 %v1338, %v2502
    %2504 = vmatmul.f32.gmra.mxu0 %v2503
    %v2505 = vpop.f32.mrf.mxu0
    %v2506 = vadd.f32 %v2171, %v2505
    %v2507 = vand.u32 %v1339, 4294901760
    %v2508 = vsub.f32 %v1339, %v2507
    %2509 = vmatmul.f32.gmra.mxu0 %v2508
    %v2510 = vpop.f32.mrf.mxu0
    %v2511 = vadd.f32 %v2175, %v2510
    %v2512 = vand.u32 %v1340, 4294901760
    %v2513 = vsub.f32 %v1340, %v2512
    %2514 = vmatmul.f32.gmra.mxu0 %v2513
    %v2515 = vpop.f32.mrf.mxu0
    %v2516 = vadd.f32 %v2179, %v2515
    %v2517 = vand.u32 %v1341, 4294901760
    %v2518 = vsub.f32 %v1341, %v2517
    %2519 = vmatmul.f32.gmra.mxu0 %v2518
    %v2520 = vpop.f32.mrf.mxu0
    %v2521 = vadd.f32 %v2183, %v2520
    %v2522 = vand.u32 %v1342, 4294901760
    %v2523 = vsub.f32 %v1342, %v2522
    %2524 = vmatmul.f32.gmra.mxu0 %v2523
    %v2525 = vpop.f32.mrf.mxu0
    %v2526 = vadd.f32 %v2187, %v2525
    %v2527 = vand.u32 %v1343, 4294901760
    %v2528 = vsub.f32 %v1343, %v2527
    %2529 = vmatmul.f32.gmra.mxu0 %v2528
    %v2530 = vpop.f32.mrf.mxu0
    %v2531 = vadd.f32 %v2191, %v2530
    %v2532 = vand.u32 %v1344, 4294901760
    %v2533 = vsub.f32 %v1344, %v2532
    %2534 = vmatmul.f32.gmra.mxu0 %v2533
    %v2535 = vpop.f32.mrf.mxu0
    %v2536 = vadd.f32 %v2195, %v2535
    %v2537 = vand.u32 %v1345, 4294901760
    %v2538 = vsub.f32 %v1345, %v2537
    %2539 = vmatmul.f32.gmra.mxu0 %v2538
    %v2540 = vpop.f32.mrf.mxu0
    %v2541 = vadd.f32 %v2199, %v2540
    %v2542 = vand.u32 %v1346, 4294901760
    %v2543 = vsub.f32 %v1346, %v2542
    %2544 = vmatmul.f32.gmra.mxu0 %v2543
    %v2545 = vpop.f32.mrf.mxu0
    %v2546 = vadd.f32 %v2203, %v2545
    %v2547 = vand.u32 %v1347, 4294901760
    %v2548 = vsub.f32 %v1347, %v2547
    %2549 = vmatmul.f32.gmra.mxu0 %v2548
    %v2550 = vpop.f32.mrf.mxu0
    %v2551 = vadd.f32 %v2207, %v2550
    %v2552 = vand.u32 %v1348, 4294901760
    %v2553 = vsub.f32 %v1348, %v2552
    %2554 = vmatmul.f32.gmra.mxu0 %v2553
    %v2555 = vpop.f32.mrf.mxu0
    %v2556 = vadd.f32 %v2211, %v2555
    %v2557 = vand.u32 %v1349, 4294901760
    %v2558 = vsub.f32 %v1349, %v2557
    %2559 = vmatmul.f32.gmra.mxu0 %v2558
    %v2560 = vpop.f32.mrf.mxu0
    %v2561 = vadd.f32 %v2215, %v2560
    %v2562 = vand.u32 %v1350, 4294901760
    %v2563 = vsub.f32 %v1350, %v2562
    %2564 = vmatmul.f32.gmra.mxu0 %v2563
    %v2565 = vpop.f32.mrf.mxu0
    %v2566 = vadd.f32 %v2219, %v2565
    %v2567 = vand.u32 %v1351, 4294901760
    %v2568 = vsub.f32 %v1351, %v2567
    %2569 = vmatmul.f32.gmra.mxu0 %v2568
    %v2570 = vpop.f32.mrf.mxu0
    %v2571 = vadd.f32 %v2223, %v2570
    %v2572 = vand.u32 %v1352, 4294901760
    %v2573 = vsub.f32 %v1352, %v2572
    %2574 = vmatmul.f32.gmra.mxu0 %v2573
    %v2575 = vpop.f32.mrf.mxu0
    %v2576 = vadd.f32 %v2227, %v2575
    %v2577 = vand.u32 %v1353, 4294901760
    %v2578 = vsub.f32 %v1353, %v2577
    %2579 = vmatmul.f32.gmra.mxu0 %v2578
    %v2580 = vpop.f32.mrf.mxu0
    %v2581 = vadd.f32 %v2231, %v2580
    %v2582 = vand.u32 %v1354, 4294901760
    %v2583 = vsub.f32 %v1354, %v2582
    %2584 = vmatmul.f32.gmra.mxu0 %v2583
    %v2585 = vpop.f32.mrf.mxu0
    %v2586 = vadd.f32 %v2235, %v2585
    %v2587 = vand.u32 %v1355, 4294901760
    %v2588 = vsub.f32 %v1355, %v2587
    %2589 = vmatmul.f32.gmra.mxu0 %v2588
    %v2590 = vpop.f32.mrf.mxu0
    %v2591 = vadd.f32 %v2239, %v2590
    %v2592 = vand.u32 %v1356, 4294901760
    %v2593 = vsub.f32 %v1356, %v2592
    %2594 = vmatmul.f32.gmra.mxu0 %v2593
    %v2595 = vpop.f32.mrf.mxu0
    %v2596 = vadd.f32 %v2243, %v2595
    %v2597 = vand.u32 %v1357, 4294901760
    %v2598 = vsub.f32 %v1357, %v2597
    %2599 = vmatmul.f32.gmra.mxu0 %v2598
    %v2600 = vpop.f32.mrf.mxu0
    %v2601 = vadd.f32 %v2247, %v2600
    %v2602 = vand.u32 %v1358, 4294901760
    %v2603 = vsub.f32 %v1358, %v2602
    %2604 = vmatmul.f32.gmra.mxu0 %v2603
    %v2605 = vpop.f32.mrf.mxu0
    %v2606 = vadd.f32 %v2251, %v2605
    %v2607 = vand.u32 %v1359, 4294901760
    %v2608 = vsub.f32 %v1359, %v2607
    %2609 = vmatmul.f32.gmra.mxu0 %v2608
    %v2610 = vpop.f32.mrf.mxu0
    %v2611 = vadd.f32 %v2255, %v2610
    %v2612 = vand.u32 %v1360, 4294901760
    %v2613 = vsub.f32 %v1360, %v2612
    %2614 = vmatmul.f32.gmra.mxu0 %v2613
    %v2615 = vpop.f32.mrf.mxu0
    %v2616 = vadd.f32 %v2259, %v2615
    %v2617 = vand.u32 %v1361, 4294901760
    %v2618 = vsub.f32 %v1361, %v2617
    %2619 = vmatmul.f32.gmra.mxu0 %v2618
    %v2620 = vpop.f32.mrf.mxu0
    %v2621 = vadd.f32 %v2263, %v2620
    %v2622 = vand.u32 %v1362, 4294901760
    %v2623 = vsub.f32 %v1362, %v2622
    %2624 = vmatmul.f32.gmra.mxu0 %v2623
    %v2625 = vpop.f32.mrf.mxu0
    %v2626 = vadd.f32 %v2267, %v2625
    %v2627 = vand.u32 %v1363, 4294901760
    %v2628 = vsub.f32 %v1363, %v2627
    %2629 = vmatmul.f32.gmra.mxu0 %v2628
    %v2630 = vpop.f32.mrf.mxu0
    %v2631 = vadd.f32 %v2271, %v2630
    %v2632 = vand.u32 %v1364, 4294901760
    %v2633 = vsub.f32 %v1364, %v2632
    %2634 = vmatmul.f32.gmra.mxu0 %v2633
    %v2635 = vpop.f32.mrf.mxu0
    %v2636 = vadd.f32 %v2275, %v2635
    %v2637 = vand.u32 %v1365, 4294901760
    %v2638 = vsub.f32 %v1365, %v2637
    %2639 = vmatmul.f32.gmra.mxu0 %v2638
    %v2640 = vpop.f32.mrf.mxu0
    %v2641 = vadd.f32 %v2279, %v2640
    %v2642 = vand.u32 %v1366, 4294901760
    %v2643 = vsub.f32 %v1366, %v2642
    %2644 = vmatmul.f32.gmra.mxu0 %v2643
    %v2645 = vpop.f32.mrf.mxu0
    %v2646 = vadd.f32 %v2283, %v2645
    %v2647 = vand.u32 %v1367, 4294901760
    %v2648 = vsub.f32 %v1367, %v2647
    %2649 = vmatmul.f32.gmra.mxu0 %v2648
    %v2650 = vpop.f32.mrf.mxu0
    %v2651 = vadd.f32 %v2287, %v2650
    %v2652 = vand.u32 %v1368, 4294901760
    %v2653 = vsub.f32 %v1368, %v2652
    %2654 = vmatmul.f32.gmra.mxu0 %v2653
    %v2655 = vpop.f32.mrf.mxu0
    %v2656 = vadd.f32 %v2291, %v2655
    %v2657 = vand.u32 %v1369, 4294901760
    %v2658 = vsub.f32 %v1369, %v2657
    %2659 = vmatmul.f32.gmra.mxu0 %v2658
    %v2660 = vpop.f32.mrf.mxu0
    %v2661 = vadd.f32 %v2295, %v2660
    %v2662 = vand.u32 %v1370, 4294901760
    %v2663 = vsub.f32 %v1370, %v2662
    %2664 = vmatmul.f32.gmra.mxu0 %v2663
    %v2665 = vpop.f32.mrf.mxu0
    %v2666 = vadd.f32 %v2299, %v2665
    %v2667 = vand.u32 %v1371, 4294901760
    %v2668 = vsub.f32 %v1371, %v2667
    %2669 = vmatmul.f32.gmra.mxu0 %v2668
    %v2670 = vpop.f32.mrf.mxu0
    %v2671 = vadd.f32 %v2303, %v2670
    %v2672 = vand.u32 %v1372, 4294901760
    %v2673 = vsub.f32 %v1372, %v2672
    %2674 = vmatmul.f32.gmra.mxu0 %v2673
    %v2675 = vpop.f32.mrf.mxu0
    %v2676 = vadd.f32 %v2307, %v2675
    %2677 = vdwg.mxu0
    %v2678 = vand.u32 %v1403, 4294901760
    %2679 = vmatpush.msra.mxu0 %v2678
    %v2680 = vand.u32 %v1401, 4294901760
    %2681 = vmatpush.msra.mxu0 %v2680
    %v2682 = vand.u32 %v1399, 4294901760
    %2683 = vmatpush.msra.mxu0 %v2682
    %v2684 = vand.u32 %v1397, 4294901760
    %2685 = vmatpush.msra.mxu0 %v2684
    %v2686 = vand.u32 %v1395, 4294901760
    %2687 = vmatpush.msra.mxu0 %v2686
    %v2688 = vand.u32 %v1393, 4294901760
    %2689 = vmatpush.msra.mxu0 %v2688
    %v2690 = vand.u32 %v1391, 4294901760
    %2691 = vmatpush.msra.mxu0 %v2690
    %v2692 = vand.u32 %v1389, 4294901760
    %2693 = vmatpush.msra.mxu0 %v2692
    %v2694 = vand.u32 %v1387, 4294901760
    %2695 = vmatpush.msra.mxu0 %v2694
    %v2696 = vand.u32 %v1385, 4294901760
    %2697 = vmatpush.msra.mxu0 %v2696
    %v2698 = vand.u32 %v1383, 4294901760
    %2699 = vmatpush.msra.mxu0 %v2698
    %v2700 = vand.u32 %v1381, 4294901760
    %2701 = vmatpush.msra.mxu0 %v2700
    %v2702 = vand.u32 %v1379, 4294901760
    %2703 = vmatpush.msra.mxu0 %v2702
    %v2704 = vand.u32 %v1377, 4294901760
    %2705 = vmatpush.msra.mxu0 %v2704
    %v2706 = vand.u32 %v1375, 4294901760
    %2707 = vmatpush.msra.mxu0 %v2706
    %v2708 = vand.u32 %v1373, 4294901760
    %2709 = vmatpush.msra.mxu0 %v2708
    %v2710 = vand.u32 %v1309, 4294901760
    %v2711 = vsub.f32 %v1309, %v2710
    %v2712 = vand.u32 %v2711, 4294901760
    %2713 = vmatmul.f32.gmra.mxu0 %v2712
    %v2714 = vpop.f32.mrf.mxu0
    %v2715 = vadd.f32 %v2361, %v2714
    %v2716 = vand.u32 %v1310, 4294901760
    %v2717 = vsub.f32 %v1310, %v2716
    %v2718 = vand.u32 %v2717, 4294901760
    %2719 = vmatmul.f32.gmra.mxu0 %v2718
    %v2720 = vpop.f32.mrf.mxu0
    %v2721 = vadd.f32 %v2366, %v2720
    %v2722 = vand.u32 %v1311, 4294901760
    %v2723 = vsub.f32 %v1311, %v2722
    %v2724 = vand.u32 %v2723, 4294901760
    %2725 = vmatmul.f32.gmra.mxu0 %v2724
    %v2726 = vpop.f32.mrf.mxu0
    %v2727 = vadd.f32 %v2371, %v2726
    %v2728 = vand.u32 %v1312, 4294901760
    %v2729 = vsub.f32 %v1312, %v2728
    %v2730 = vand.u32 %v2729, 4294901760
    %2731 = vmatmul.f32.gmra.mxu0 %v2730
    %v2732 = vpop.f32.mrf.mxu0
    %v2733 = vadd.f32 %v2376, %v2732
    %v2734 = vand.u32 %v1313, 4294901760
    %v2735 = vsub.f32 %v1313, %v2734
    %v2736 = vand.u32 %v2735, 4294901760
    %2737 = vmatmul.f32.gmra.mxu0 %v2736
    %v2738 = vpop.f32.mrf.mxu0
    %v2739 = vadd.f32 %v2381, %v2738
    %v2740 = vand.u32 %v1314, 4294901760
    %v2741 = vsub.f32 %v1314, %v2740
    %v2742 = vand.u32 %v2741, 4294901760
    %2743 = vmatmul.f32.gmra.mxu0 %v2742
    %v2744 = vpop.f32.mrf.mxu0
    %v2745 = vadd.f32 %v2386, %v2744
    %v2746 = vand.u32 %v1315, 4294901760
    %v2747 = vsub.f32 %v1315, %v2746
    %v2748 = vand.u32 %v2747, 4294901760
    %2749 = vmatmul.f32.gmra.mxu0 %v2748
    %v2750 = vpop.f32.mrf.mxu0
    %v2751 = vadd.f32 %v2391, %v2750
    %v2752 = vand.u32 %v1316, 4294901760
    %v2753 = vsub.f32 %v1316, %v2752
    %v2754 = vand.u32 %v2753, 4294901760
    %2755 = vmatmul.f32.gmra.mxu0 %v2754
    %v2756 = vpop.f32.mrf.mxu0
    %v2757 = vadd.f32 %v2396, %v2756
    %v2758 = vand.u32 %v1317, 4294901760
    %v2759 = vsub.f32 %v1317, %v2758
    %v2760 = vand.u32 %v2759, 4294901760
    %2761 = vmatmul.f32.gmra.mxu0 %v2760
    %v2762 = vpop.f32.mrf.mxu0
    %v2763 = vadd.f32 %v2401, %v2762
    %v2764 = vand.u32 %v1318, 4294901760
    %v2765 = vsub.f32 %v1318, %v2764
    %v2766 = vand.u32 %v2765, 4294901760
    %2767 = vmatmul.f32.gmra.mxu0 %v2766
    %v2768 = vpop.f32.mrf.mxu0
    %v2769 = vadd.f32 %v2406, %v2768
    %v2770 = vand.u32 %v1319, 4294901760
    %v2771 = vsub.f32 %v1319, %v2770
    %v2772 = vand.u32 %v2771, 4294901760
    %2773 = vmatmul.f32.gmra.mxu0 %v2772
    %v2774 = vpop.f32.mrf.mxu0
    %v2775 = vadd.f32 %v2411, %v2774
    %v2776 = vand.u32 %v1320, 4294901760
    %v2777 = vsub.f32 %v1320, %v2776
    %v2778 = vand.u32 %v2777, 4294901760
    %2779 = vmatmul.f32.gmra.mxu0 %v2778
    %v2780 = vpop.f32.mrf.mxu0
    %v2781 = vadd.f32 %v2416, %v2780
    %v2782 = vand.u32 %v1321, 4294901760
    %v2783 = vsub.f32 %v1321, %v2782
    %v2784 = vand.u32 %v2783, 4294901760
    %2785 = vmatmul.f32.gmra.mxu0 %v2784
    %v2786 = vpop.f32.mrf.mxu0
    %v2787 = vadd.f32 %v2421, %v2786
    %v2788 = vand.u32 %v1322, 4294901760
    %v2789 = vsub.f32 %v1322, %v2788
    %v2790 = vand.u32 %v2789, 4294901760
    %2791 = vmatmul.f32.gmra.mxu0 %v2790
    %v2792 = vpop.f32.mrf.mxu0
    %v2793 = vadd.f32 %v2426, %v2792
    %v2794 = vand.u32 %v1323, 4294901760
    %v2795 = vsub.f32 %v1323, %v2794
    %v2796 = vand.u32 %v2795, 4294901760
    %2797 = vmatmul.f32.gmra.mxu0 %v2796
    %v2798 = vpop.f32.mrf.mxu0
    %v2799 = vadd.f32 %v2431, %v2798
    %v2800 = vand.u32 %v1324, 4294901760
    %v2801 = vsub.f32 %v1324, %v2800
    %v2802 = vand.u32 %v2801, 4294901760
    %2803 = vmatmul.f32.gmra.mxu0 %v2802
    %v2804 = vpop.f32.mrf.mxu0
    %v2805 = vadd.f32 %v2436, %v2804
    %v2806 = vand.u32 %v1325, 4294901760
    %v2807 = vsub.f32 %v1325, %v2806
    %v2808 = vand.u32 %v2807, 4294901760
    %2809 = vmatmul.f32.gmra.mxu0 %v2808
    %v2810 = vpop.f32.mrf.mxu0
    %v2811 = vadd.f32 %v2441, %v2810
    %v2812 = vand.u32 %v1326, 4294901760
    %v2813 = vsub.f32 %v1326, %v2812
    %v2814 = vand.u32 %v2813, 4294901760
    %2815 = vmatmul.f32.gmra.mxu0 %v2814
    %v2816 = vpop.f32.mrf.mxu0
    %v2817 = vadd.f32 %v2446, %v2816
    %v2818 = vand.u32 %v1327, 4294901760
    %v2819 = vsub.f32 %v1327, %v2818
    %v2820 = vand.u32 %v2819, 4294901760
    %2821 = vmatmul.f32.gmra.mxu0 %v2820
    %v2822 = vpop.f32.mrf.mxu0
    %v2823 = vadd.f32 %v2451, %v2822
    %v2824 = vand.u32 %v1328, 4294901760
    %v2825 = vsub.f32 %v1328, %v2824
    %v2826 = vand.u32 %v2825, 4294901760
    %2827 = vmatmul.f32.gmra.mxu0 %v2826
    %v2828 = vpop.f32.mrf.mxu0
    %v2829 = vadd.f32 %v2456, %v2828
    %v2830 = vand.u32 %v1329, 4294901760
    %v2831 = vsub.f32 %v1329, %v2830
    %v2832 = vand.u32 %v2831, 4294901760
    %2833 = vmatmul.f32.gmra.mxu0 %v2832
    %v2834 = vpop.f32.mrf.mxu0
    %v2835 = vadd.f32 %v2461, %v2834
    %v2836 = vand.u32 %v1330, 4294901760
    %v2837 = vsub.f32 %v1330, %v2836
    %v2838 = vand.u32 %v2837, 4294901760
    %2839 = vmatmul.f32.gmra.mxu0 %v2838
    %v2840 = vpop.f32.mrf.mxu0
    %v2841 = vadd.f32 %v2466, %v2840
    %v2842 = vand.u32 %v1331, 4294901760
    %v2843 = vsub.f32 %v1331, %v2842
    %v2844 = vand.u32 %v2843, 4294901760
    %2845 = vmatmul.f32.gmra.mxu0 %v2844
    %v2846 = vpop.f32.mrf.mxu0
    %v2847 = vadd.f32 %v2471, %v2846
    %v2848 = vand.u32 %v1332, 4294901760
    %v2849 = vsub.f32 %v1332, %v2848
    %v2850 = vand.u32 %v2849, 4294901760
    %2851 = vmatmul.f32.gmra.mxu0 %v2850
    %v2852 = vpop.f32.mrf.mxu0
    %v2853 = vadd.f32 %v2476, %v2852
    %v2854 = vand.u32 %v1333, 4294901760
    %v2855 = vsub.f32 %v1333, %v2854
    %v2856 = vand.u32 %v2855, 4294901760
    %2857 = vmatmul.f32.gmra.mxu0 %v2856
    %v2858 = vpop.f32.mrf.mxu0
    %v2859 = vadd.f32 %v2481, %v2858
    %v2860 = vand.u32 %v1334, 4294901760
    %v2861 = vsub.f32 %v1334, %v2860
    %v2862 = vand.u32 %v2861, 4294901760
    %2863 = vmatmul.f32.gmra.mxu0 %v2862
    %v2864 = vpop.f32.mrf.mxu0
    %v2865 = vadd.f32 %v2486, %v2864
    %v2866 = vand.u32 %v1335, 4294901760
    %v2867 = vsub.f32 %v1335, %v2866
    %v2868 = vand.u32 %v2867, 4294901760
    %2869 = vmatmul.f32.gmra.mxu0 %v2868
    %v2870 = vpop.f32.mrf.mxu0
    %v2871 = vadd.f32 %v2491, %v2870
    %v2872 = vand.u32 %v1336, 4294901760
    %v2873 = vsub.f32 %v1336, %v2872
    %v2874 = vand.u32 %v2873, 4294901760
    %2875 = vmatmul.f32.gmra.mxu0 %v2874
    %v2876 = vpop.f32.mrf.mxu0
    %v2877 = vadd.f32 %v2496, %v2876
    %v2878 = vand.u32 %v1337, 4294901760
    %v2879 = vsub.f32 %v1337, %v2878
    %v2880 = vand.u32 %v2879, 4294901760
    %2881 = vmatmul.f32.gmra.mxu0 %v2880
    %v2882 = vpop.f32.mrf.mxu0
    %v2883 = vadd.f32 %v2501, %v2882
    %v2884 = vand.u32 %v1338, 4294901760
    %v2885 = vsub.f32 %v1338, %v2884
    %v2886 = vand.u32 %v2885, 4294901760
    %2887 = vmatmul.f32.gmra.mxu0 %v2886
    %v2888 = vpop.f32.mrf.mxu0
    %v2889 = vadd.f32 %v2506, %v2888
    %v2890 = vand.u32 %v1339, 4294901760
    %v2891 = vsub.f32 %v1339, %v2890
    %v2892 = vand.u32 %v2891, 4294901760
    %2893 = vmatmul.f32.gmra.mxu0 %v2892
    %v2894 = vpop.f32.mrf.mxu0
    %v2895 = vadd.f32 %v2511, %v2894
    %v2896 = vand.u32 %v1340, 4294901760
    %v2897 = vsub.f32 %v1340, %v2896
    %v2898 = vand.u32 %v2897, 4294901760
    %2899 = vmatmul.f32.gmra.mxu0 %v2898
    %v2900 = vpop.f32.mrf.mxu0
    %v2901 = vadd.f32 %v2516, %v2900
    %v2902 = vand.u32 %v1341, 4294901760
    %v2903 = vsub.f32 %v1341, %v2902
    %v2904 = vand.u32 %v2903, 4294901760
    %2905 = vmatmul.f32.gmra.mxu0 %v2904
    %v2906 = vpop.f32.mrf.mxu0
    %v2907 = vadd.f32 %v2521, %v2906
    %v2908 = vand.u32 %v1342, 4294901760
    %v2909 = vsub.f32 %v1342, %v2908
    %v2910 = vand.u32 %v2909, 4294901760
    %2911 = vmatmul.f32.gmra.mxu0 %v2910
    %v2912 = vpop.f32.mrf.mxu0
    %v2913 = vadd.f32 %v2526, %v2912
    %v2914 = vand.u32 %v1343, 4294901760
    %v2915 = vsub.f32 %v1343, %v2914
    %v2916 = vand.u32 %v2915, 4294901760
    %2917 = vmatmul.f32.gmra.mxu0 %v2916
    %v2918 = vpop.f32.mrf.mxu0
    %v2919 = vadd.f32 %v2531, %v2918
    %v2920 = vand.u32 %v1344, 4294901760
    %v2921 = vsub.f32 %v1344, %v2920
    %v2922 = vand.u32 %v2921, 4294901760
    %2923 = vmatmul.f32.gmra.mxu0 %v2922
    %v2924 = vpop.f32.mrf.mxu0
    %v2925 = vadd.f32 %v2536, %v2924
    %v2926 = vand.u32 %v1345, 4294901760
    %v2927 = vsub.f32 %v1345, %v2926
    %v2928 = vand.u32 %v2927, 4294901760
    %2929 = vmatmul.f32.gmra.mxu0 %v2928
    %v2930 = vpop.f32.mrf.mxu0
    %v2931 = vadd.f32 %v2541, %v2930
    %v2932 = vand.u32 %v1346, 4294901760
    %v2933 = vsub.f32 %v1346, %v2932
    %v2934 = vand.u32 %v2933, 4294901760
    %2935 = vmatmul.f32.gmra.mxu0 %v2934
    %v2936 = vpop.f32.mrf.mxu0
    %v2937 = vadd.f32 %v2546, %v2936
    %v2938 = vand.u32 %v1347, 4294901760
    %v2939 = vsub.f32 %v1347, %v2938
    %v2940 = vand.u32 %v2939, 4294901760
    %2941 = vmatmul.f32.gmra.mxu0 %v2940
    %v2942 = vpop.f32.mrf.mxu0
    %v2943 = vadd.f32 %v2551, %v2942
    %v2944 = vand.u32 %v1348, 4294901760
    %v2945 = vsub.f32 %v1348, %v2944
    %v2946 = vand.u32 %v2945, 4294901760
    %2947 = vmatmul.f32.gmra.mxu0 %v2946
    %v2948 = vpop.f32.mrf.mxu0
    %v2949 = vadd.f32 %v2556, %v2948
    %v2950 = vand.u32 %v1349, 4294901760
    %v2951 = vsub.f32 %v1349, %v2950
    %v2952 = vand.u32 %v2951, 4294901760
    %2953 = vmatmul.f32.gmra.mxu0 %v2952
    %v2954 = vpop.f32.mrf.mxu0
    %v2955 = vadd.f32 %v2561, %v2954
    %v2956 = vand.u32 %v1350, 4294901760
    %v2957 = vsub.f32 %v1350, %v2956
    %v2958 = vand.u32 %v2957, 4294901760
    %2959 = vmatmul.f32.gmra.mxu0 %v2958
    %v2960 = vpop.f32.mrf.mxu0
    %v2961 = vadd.f32 %v2566, %v2960
    %v2962 = vand.u32 %v1351, 4294901760
    %v2963 = vsub.f32 %v1351, %v2962
    %v2964 = vand.u32 %v2963, 4294901760
    %2965 = vmatmul.f32.gmra.mxu0 %v2964
    %v2966 = vpop.f32.mrf.mxu0
    %v2967 = vadd.f32 %v2571, %v2966
    %v2968 = vand.u32 %v1352, 4294901760
    %v2969 = vsub.f32 %v1352, %v2968
    %v2970 = vand.u32 %v2969, 4294901760
    %2971 = vmatmul.f32.gmra.mxu0 %v2970
    %v2972 = vpop.f32.mrf.mxu0
    %v2973 = vadd.f32 %v2576, %v2972
    %v2974 = vand.u32 %v1353, 4294901760
    %v2975 = vsub.f32 %v1353, %v2974
    %v2976 = vand.u32 %v2975, 4294901760
    %2977 = vmatmul.f32.gmra.mxu0 %v2976
    %v2978 = vpop.f32.mrf.mxu0
    %v2979 = vadd.f32 %v2581, %v2978
    %v2980 = vand.u32 %v1354, 4294901760
    %v2981 = vsub.f32 %v1354, %v2980
    %v2982 = vand.u32 %v2981, 4294901760
    %2983 = vmatmul.f32.gmra.mxu0 %v2982
    %v2984 = vpop.f32.mrf.mxu0
    %v2985 = vadd.f32 %v2586, %v2984
    %v2986 = vand.u32 %v1355, 4294901760
    %v2987 = vsub.f32 %v1355, %v2986
    %v2988 = vand.u32 %v2987, 4294901760
    %2989 = vmatmul.f32.gmra.mxu0 %v2988
    %v2990 = vpop.f32.mrf.mxu0
    %v2991 = vadd.f32 %v2591, %v2990
    %v2992 = vand.u32 %v1356, 4294901760
    %v2993 = vsub.f32 %v1356, %v2992
    %v2994 = vand.u32 %v2993, 4294901760
    %2995 = vmatmul.f32.gmra.mxu0 %v2994
    %v2996 = vpop.f32.mrf.mxu0
    %v2997 = vadd.f32 %v2596, %v2996
    %v2998 = vand.u32 %v1357, 4294901760
    %v2999 = vsub.f32 %v1357, %v2998
    %v3000 = vand.u32 %v2999, 4294901760
    %3001 = vmatmul.f32.gmra.mxu0 %v3000
    %v3002 = vpop.f32.mrf.mxu0
    %v3003 = vadd.f32 %v2601, %v3002
    %v3004 = vand.u32 %v1358, 4294901760
    %v3005 = vsub.f32 %v1358, %v3004
    %v3006 = vand.u32 %v3005, 4294901760
    %3007 = vmatmul.f32.gmra.mxu0 %v3006
    %v3008 = vpop.f32.mrf.mxu0
    %v3009 = vadd.f32 %v2606, %v3008
    %v3010 = vand.u32 %v1359, 4294901760
    %v3011 = vsub.f32 %v1359, %v3010
    %v3012 = vand.u32 %v3011, 4294901760
    %3013 = vmatmul.f32.gmra.mxu0 %v3012
    %v3014 = vpop.f32.mrf.mxu0
    %v3015 = vadd.f32 %v2611, %v3014
    %v3016 = vand.u32 %v1360, 4294901760
    %v3017 = vsub.f32 %v1360, %v3016
    %v3018 = vand.u32 %v3017, 4294901760
    %3019 = vmatmul.f32.gmra.mxu0 %v3018
    %v3020 = vpop.f32.mrf.mxu0
    %v3021 = vadd.f32 %v2616, %v3020
    %v3022 = vand.u32 %v1361, 4294901760
    %v3023 = vsub.f32 %v1361, %v3022
    %v3024 = vand.u32 %v3023, 4294901760
    %3025 = vmatmul.f32.gmra.mxu0 %v3024
    %v3026 = vpop.f32.mrf.mxu0
    %v3027 = vadd.f32 %v2621, %v3026
    %v3028 = vand.u32 %v1362, 4294901760
    %v3029 = vsub.f32 %v1362, %v3028
    %v3030 = vand.u32 %v3029, 4294901760
    %3031 = vmatmul.f32.gmra.mxu0 %v3030
    %v3032 = vpop.f32.mrf.mxu0
    %v3033 = vadd.f32 %v2626, %v3032
    %v3034 = vand.u32 %v1363, 4294901760
    %v3035 = vsub.f32 %v1363, %v3034
    %v3036 = vand.u32 %v3035, 4294901760
    %3037 = vmatmul.f32.gmra.mxu0 %v3036
    %v3038 = vpop.f32.mrf.mxu0
    %v3039 = vadd.f32 %v2631, %v3038
    %v3040 = vand.u32 %v1364, 4294901760
    %v3041 = vsub.f32 %v1364, %v3040
    %v3042 = vand.u32 %v3041, 4294901760
    %3043 = vmatmul.f32.gmra.mxu0 %v3042
    %v3044 = vpop.f32.mrf.mxu0
    %v3045 = vadd.f32 %v2636, %v3044
    %v3046 = vand.u32 %v1365, 4294901760
    %v3047 = vsub.f32 %v1365, %v3046
    %v3048 = vand.u32 %v3047, 4294901760
    %3049 = vmatmul.f32.gmra.mxu0 %v3048
    %v3050 = vpop.f32.mrf.mxu0
    %v3051 = vadd.f32 %v2641, %v3050
    %v3052 = vand.u32 %v1366, 4294901760
    %v3053 = vsub.f32 %v1366, %v3052
    %v3054 = vand.u32 %v3053, 4294901760
    %3055 = vmatmul.f32.gmra.mxu0 %v3054
    %v3056 = vpop.f32.mrf.mxu0
    %v3057 = vadd.f32 %v2646, %v3056
    %v3058 = vand.u32 %v1367, 4294901760
    %v3059 = vsub.f32 %v1367, %v3058
    %v3060 = vand.u32 %v3059, 4294901760
    %3061 = vmatmul.f32.gmra.mxu0 %v3060
    %v3062 = vpop.f32.mrf.mxu0
    %v3063 = vadd.f32 %v2651, %v3062
    %v3064 = vand.u32 %v1368, 4294901760
    %v3065 = vsub.f32 %v1368, %v3064
    %v3066 = vand.u32 %v3065, 4294901760
    %3067 = vmatmul.f32.gmra.mxu0 %v3066
    %v3068 = vpop.f32.mrf.mxu0
    %v3069 = vadd.f32 %v2656, %v3068
    %v3070 = vand.u32 %v1369, 4294901760
    %v3071 = vsub.f32 %v1369, %v3070
    %v3072 = vand.u32 %v3071, 4294901760
    %3073 = vmatmul.f32.gmra.mxu0 %v3072
    %v3074 = vpop.f32.mrf.mxu0
    %v3075 = vadd.f32 %v2661, %v3074
    %v3076 = vand.u32 %v1370, 4294901760
    %v3077 = vsub.f32 %v1370, %v3076
    %v3078 = vand.u32 %v3077, 4294901760
    %3079 = vmatmul.f32.gmra.mxu0 %v3078
    %v3080 = vpop.f32.mrf.mxu0
    %v3081 = vadd.f32 %v2666, %v3080
    %v3082 = vand.u32 %v1371, 4294901760
    %v3083 = vsub.f32 %v1371, %v3082
    %v3084 = vand.u32 %v3083, 4294901760
    %3085 = vmatmul.f32.gmra.mxu0 %v3084
    %v3086 = vpop.f32.mrf.mxu0
    %v3087 = vadd.f32 %v2671, %v3086
    %v3088 = vand.u32 %v1372, 4294901760
    %v3089 = vsub.f32 %v1372, %v3088
    %v3090 = vand.u32 %v3089, 4294901760
    %3091 = vmatmul.f32.gmra.mxu0 %v3090
    %v3092 = vpop.f32.mrf.mxu0
    %v3093 = vadd.f32 %v2676, %v3092
    %3094 = vdwg.mxu0
    %v3095 = vand.u32 %v1403, 4294901760
    %v3096 = vsub.f32 %v1403, %v3095
    %v3097 = vand.u32 %v3096, 4294901760
    %3098 = vmatpush.msra.mxu0 %v3097
    %v3099 = vand.u32 %v1401, 4294901760
    %v3100 = vsub.f32 %v1401, %v3099
    %v3101 = vand.u32 %v3100, 4294901760
    %3102 = vmatpush.msra.mxu0 %v3101
    %v3103 = vand.u32 %v1399, 4294901760
    %v3104 = vsub.f32 %v1399, %v3103
    %v3105 = vand.u32 %v3104, 4294901760
    %3106 = vmatpush.msra.mxu0 %v3105
    %v3107 = vand.u32 %v1397, 4294901760
    %v3108 = vsub.f32 %v1397, %v3107
    %v3109 = vand.u32 %v3108, 4294901760
    %3110 = vmatpush.msra.mxu0 %v3109
    %v3111 = vand.u32 %v1395, 4294901760
    %v3112 = vsub.f32 %v1395, %v3111
    %v3113 = vand.u32 %v3112, 4294901760
    %3114 = vmatpush.msra.mxu0 %v3113
    %v3115 = vand.u32 %v1393, 4294901760
    %v3116 = vsub.f32 %v1393, %v3115
    %v3117 = vand.u32 %v3116, 4294901760
    %3118 = vmatpush.msra.mxu0 %v3117
    %v3119 = vand.u32 %v1391, 4294901760
    %v3120 = vsub.f32 %v1391, %v3119
    %v3121 = vand.u32 %v3120, 4294901760
    %3122 = vmatpush.msra.mxu0 %v3121
    %v3123 = vand.u32 %v1389, 4294901760
    %v3124 = vsub.f32 %v1389, %v3123
    %v3125 = vand.u32 %v3124, 4294901760
    %3126 = vmatpush.msra.mxu0 %v3125
    %v3127 = vand.u32 %v1387, 4294901760
    %v3128 = vsub.f32 %v1387, %v3127
    %v3129 = vand.u32 %v3128, 4294901760
    %3130 = vmatpush.msra.mxu0 %v3129
    %v3131 = vand.u32 %v1385, 4294901760
    %v3132 = vsub.f32 %v1385, %v3131
    %v3133 = vand.u32 %v3132, 4294901760
    %3134 = vmatpush.msra.mxu0 %v3133
    %v3135 = vand.u32 %v1383, 4294901760
    %v3136 = vsub.f32 %v1383, %v3135
    %v3137 = vand.u32 %v3136, 4294901760
    %3138 = vmatpush.msra.mxu0 %v3137
    %v3139 = vand.u32 %v1381, 4294901760
    %v3140 = vsub.f32 %v1381, %v3139
    %v3141 = vand.u32 %v3140, 4294901760
    %3142 = vmatpush.msra.mxu0 %v3141
    %v3143 = vand.u32 %v1379, 4294901760
    %v3144 = vsub.f32 %v1379, %v3143
    %v3145 = vand.u32 %v3144, 4294901760
    %3146 = vmatpush.msra.mxu0 %v3145
    %v3147 = vand.u32 %v1377, 4294901760
    %v3148 = vsub.f32 %v1377, %v3147
    %v3149 = vand.u32 %v3148, 4294901760
    %3150 = vmatpush.msra.mxu0 %v3149
    %v3151 = vand.u32 %v1375, 4294901760
    %v3152 = vsub.f32 %v1375, %v3151
    %v3153 = vand.u32 %v3152, 4294901760
    %3154 = vmatpush.msra.mxu0 %v3153
    %v3155 = vand.u32 %v1373, 4294901760
    %v3156 = vsub.f32 %v1373, %v3155
    %v3157 = vand.u32 %v3156, 4294901760
    %3158 = vmatpush.msra.mxu0 %v3157
    %v3159 = vand.u32 %v1309, 4294901760
    %3160 = vmatmul.f32.gmra.mxu0 %v3159
    %v3161 = vpop.f32.mrf.mxu0
    %v3162 = vadd.f32 %v2715, %v3161
    %v3163 = vand.u32 %v1310, 4294901760
    %3164 = vmatmul.f32.gmra.mxu0 %v3163
    %v3165 = vpop.f32.mrf.mxu0
    %v3166 = vadd.f32 %v2721, %v3165
    %v3167 = vand.u32 %v1311, 4294901760
    %3168 = vmatmul.f32.gmra.mxu0 %v3167
    %v3169 = vpop.f32.mrf.mxu0
    %v3170 = vadd.f32 %v2727, %v3169
    %v3171 = vand.u32 %v1312, 4294901760
    %3172 = vmatmul.f32.gmra.mxu0 %v3171
    %v3173 = vpop.f32.mrf.mxu0
    %v3174 = vadd.f32 %v2733, %v3173
    %v3175 = vand.u32 %v1313, 4294901760
    %3176 = vmatmul.f32.gmra.mxu0 %v3175
    %v3177 = vpop.f32.mrf.mxu0
    %v3178 = vadd.f32 %v2739, %v3177
    %v3179 = vand.u32 %v1314, 4294901760
    %3180 = vmatmul.f32.gmra.mxu0 %v3179
    %v3181 = vpop.f32.mrf.mxu0
    %v3182 = vadd.f32 %v2745, %v3181
    %v3183 = vand.u32 %v1315, 4294901760
    %3184 = vmatmul.f32.gmra.mxu0 %v3183
    %v3185 = vpop.f32.mrf.mxu0
    %v3186 = vadd.f32 %v2751, %v3185
    %v3187 = vand.u32 %v1316, 4294901760
    %3188 = vmatmul.f32.gmra.mxu0 %v3187
    %v3189 = vpop.f32.mrf.mxu0
    %v3190 = vadd.f32 %v2757, %v3189
    %v3191 = vand.u32 %v1317, 4294901760
    %3192 = vmatmul.f32.gmra.mxu0 %v3191
    %v3193 = vpop.f32.mrf.mxu0
    %v3194 = vadd.f32 %v2763, %v3193
    %v3195 = vand.u32 %v1318, 4294901760
    %3196 = vmatmul.f32.gmra.mxu0 %v3195
    %v3197 = vpop.f32.mrf.mxu0
    %v3198 = vadd.f32 %v2769, %v3197
    %v3199 = vand.u32 %v1319, 4294901760
    %3200 = vmatmul.f32.gmra.mxu0 %v3199
    %v3201 = vpop.f32.mrf.mxu0
    %v3202 = vadd.f32 %v2775, %v3201
    %v3203 = vand.u32 %v1320, 4294901760
    %3204 = vmatmul.f32.gmra.mxu0 %v3203
    %v3205 = vpop.f32.mrf.mxu0
    %v3206 = vadd.f32 %v2781, %v3205
    %v3207 = vand.u32 %v1321, 4294901760
    %3208 = vmatmul.f32.gmra.mxu0 %v3207
    %v3209 = vpop.f32.mrf.mxu0
    %v3210 = vadd.f32 %v2787, %v3209
    %v3211 = vand.u32 %v1322, 4294901760
    %3212 = vmatmul.f32.gmra.mxu0 %v3211
    %v3213 = vpop.f32.mrf.mxu0
    %v3214 = vadd.f32 %v2793, %v3213
    %v3215 = vand.u32 %v1323, 4294901760
    %3216 = vmatmul.f32.gmra.mxu0 %v3215
    %v3217 = vpop.f32.mrf.mxu0
    %v3218 = vadd.f32 %v2799, %v3217
    %v3219 = vand.u32 %v1324, 4294901760
    %3220 = vmatmul.f32.gmra.mxu0 %v3219
    %v3221 = vpop.f32.mrf.mxu0
    %v3222 = vadd.f32 %v2805, %v3221
    %v3223 = vand.u32 %v1325, 4294901760
    %3224 = vmatmul.f32.gmra.mxu0 %v3223
    %v3225 = vpop.f32.mrf.mxu0
    %v3226 = vadd.f32 %v2811, %v3225
    %v3227 = vand.u32 %v1326, 4294901760
    %3228 = vmatmul.f32.gmra.mxu0 %v3227
    %v3229 = vpop.f32.mrf.mxu0
    %v3230 = vadd.f32 %v2817, %v3229
    %v3231 = vand.u32 %v1327, 4294901760
    %3232 = vmatmul.f32.gmra.mxu0 %v3231
    %v3233 = vpop.f32.mrf.mxu0
    %v3234 = vadd.f32 %v2823, %v3233
    %v3235 = vand.u32 %v1328, 4294901760
    %3236 = vmatmul.f32.gmra.mxu0 %v3235
    %v3237 = vpop.f32.mrf.mxu0
    %v3238 = vadd.f32 %v2829, %v3237
    %v3239 = vand.u32 %v1329, 4294901760
    %3240 = vmatmul.f32.gmra.mxu0 %v3239
    %v3241 = vpop.f32.mrf.mxu0
    %v3242 = vadd.f32 %v2835, %v3241
    %v3243 = vand.u32 %v1330, 4294901760
    %3244 = vmatmul.f32.gmra.mxu0 %v3243
    %v3245 = vpop.f32.mrf.mxu0
    %v3246 = vadd.f32 %v2841, %v3245
    %v3247 = vand.u32 %v1331, 4294901760
    %3248 = vmatmul.f32.gmra.mxu0 %v3247
    %v3249 = vpop.f32.mrf.mxu0
    %v3250 = vadd.f32 %v2847, %v3249
    %v3251 = vand.u32 %v1332, 4294901760
    %3252 = vmatmul.f32.gmra.mxu0 %v3251
    %v3253 = vpop.f32.mrf.mxu0
    %v3254 = vadd.f32 %v2853, %v3253
    %v3255 = vand.u32 %v1333, 4294901760
    %3256 = vmatmul.f32.gmra.mxu0 %v3255
    %v3257 = vpop.f32.mrf.mxu0
    %v3258 = vadd.f32 %v2859, %v3257
    %v3259 = vand.u32 %v1334, 4294901760
    %3260 = vmatmul.f32.gmra.mxu0 %v3259
    %v3261 = vpop.f32.mrf.mxu0
    %v3262 = vadd.f32 %v2865, %v3261
    %v3263 = vand.u32 %v1335, 4294901760
    %3264 = vmatmul.f32.gmra.mxu0 %v3263
    %v3265 = vpop.f32.mrf.mxu0
    %v3266 = vadd.f32 %v2871, %v3265
    %v3267 = vand.u32 %v1336, 4294901760
    %3268 = vmatmul.f32.gmra.mxu0 %v3267
    %v3269 = vpop.f32.mrf.mxu0
    %v3270 = vadd.f32 %v2877, %v3269
    %v3271 = vand.u32 %v1337, 4294901760
    %3272 = vmatmul.f32.gmra.mxu0 %v3271
    %v3273 = vpop.f32.mrf.mxu0
    %v3274 = vadd.f32 %v2883, %v3273
    %v3275 = vand.u32 %v1338, 4294901760
    %3276 = vmatmul.f32.gmra.mxu0 %v3275
    %v3277 = vpop.f32.mrf.mxu0
    %v3278 = vadd.f32 %v2889, %v3277
    %v3279 = vand.u32 %v1339, 4294901760
    %3280 = vmatmul.f32.gmra.mxu0 %v3279
    %v3281 = vpop.f32.mrf.mxu0
    %v3282 = vadd.f32 %v2895, %v3281
    %v3283 = vand.u32 %v1340, 4294901760
    %3284 = vmatmul.f32.gmra.mxu0 %v3283
    %v3285 = vpop.f32.mrf.mxu0
    %v3286 = vadd.f32 %v2901, %v3285
    %v3287 = vand.u32 %v1341, 4294901760
    %3288 = vmatmul.f32.gmra.mxu0 %v3287
    %v3289 = vpop.f32.mrf.mxu0
    %v3290 = vadd.f32 %v2907, %v3289
    %v3291 = vand.u32 %v1342, 4294901760
    %3292 = vmatmul.f32.gmra.mxu0 %v3291
    %v3293 = vpop.f32.mrf.mxu0
    %v3294 = vadd.f32 %v2913, %v3293
    %v3295 = vand.u32 %v1343, 4294901760
    %3296 = vmatmul.f32.gmra.mxu0 %v3295
    %v3297 = vpop.f32.mrf.mxu0
    %v3298 = vadd.f32 %v2919, %v3297
    %v3299 = vand.u32 %v1344, 4294901760
    %3300 = vmatmul.f32.gmra.mxu0 %v3299
    %v3301 = vpop.f32.mrf.mxu0
    %v3302 = vadd.f32 %v2925, %v3301
    %v3303 = vand.u32 %v1345, 4294901760
    %3304 = vmatmul.f32.gmra.mxu0 %v3303
    %v3305 = vpop.f32.mrf.mxu0
    %v3306 = vadd.f32 %v2931, %v3305
    %v3307 = vand.u32 %v1346, 4294901760
    %3308 = vmatmul.f32.gmra.mxu0 %v3307
    %v3309 = vpop.f32.mrf.mxu0
    %v3310 = vadd.f32 %v2937, %v3309
    %v3311 = vand.u32 %v1347, 4294901760
    %3312 = vmatmul.f32.gmra.mxu0 %v3311
    %v3313 = vpop.f32.mrf.mxu0
    %v3314 = vadd.f32 %v2943, %v3313
    %v3315 = vand.u32 %v1348, 4294901760
    %3316 = vmatmul.f32.gmra.mxu0 %v3315
    %v3317 = vpop.f32.mrf.mxu0
    %v3318 = vadd.f32 %v2949, %v3317
    %v3319 = vand.u32 %v1349, 4294901760
    %3320 = vmatmul.f32.gmra.mxu0 %v3319
    %v3321 = vpop.f32.mrf.mxu0
    %v3322 = vadd.f32 %v2955, %v3321
    %v3323 = vand.u32 %v1350, 4294901760
    %3324 = vmatmul.f32.gmra.mxu0 %v3323
    %v3325 = vpop.f32.mrf.mxu0
    %v3326 = vadd.f32 %v2961, %v3325
    %v3327 = vand.u32 %v1351, 4294901760
    %3328 = vmatmul.f32.gmra.mxu0 %v3327
    %v3329 = vpop.f32.mrf.mxu0
    %v3330 = vadd.f32 %v2967, %v3329
    %v3331 = vand.u32 %v1352, 4294901760
    %3332 = vmatmul.f32.gmra.mxu0 %v3331
    %v3333 = vpop.f32.mrf.mxu0
    %v3334 = vadd.f32 %v2973, %v3333
    %v3335 = vand.u32 %v1353, 4294901760
    %3336 = vmatmul.f32.gmra.mxu0 %v3335
    %v3337 = vpop.f32.mrf.mxu0
    %v3338 = vadd.f32 %v2979, %v3337
    %v3339 = vand.u32 %v1354, 4294901760
    %3340 = vmatmul.f32.gmra.mxu0 %v3339
    %v3341 = vpop.f32.mrf.mxu0
    %v3342 = vadd.f32 %v2985, %v3341
    %v3343 = vand.u32 %v1355, 4294901760
    %3344 = vmatmul.f32.gmra.mxu0 %v3343
    %v3345 = vpop.f32.mrf.mxu0
    %v3346 = vadd.f32 %v2991, %v3345
    %v3347 = vand.u32 %v1356, 4294901760
    %3348 = vmatmul.f32.gmra.mxu0 %v3347
    %v3349 = vpop.f32.mrf.mxu0
    %v3350 = vadd.f32 %v2997, %v3349
    %v3351 = vand.u32 %v1357, 4294901760
    %3352 = vmatmul.f32.gmra.mxu0 %v3351
    %v3353 = vpop.f32.mrf.mxu0
    %v3354 = vadd.f32 %v3003, %v3353
    %v3355 = vand.u32 %v1358, 4294901760
    %3356 = vmatmul.f32.gmra.mxu0 %v3355
    %v3357 = vpop.f32.mrf.mxu0
    %v3358 = vadd.f32 %v3009, %v3357
    %v3359 = vand.u32 %v1359, 4294901760
    %3360 = vmatmul.f32.gmra.mxu0 %v3359
    %v3361 = vpop.f32.mrf.mxu0
    %v3362 = vadd.f32 %v3015, %v3361
    %v3363 = vand.u32 %v1360, 4294901760
    %3364 = vmatmul.f32.gmra.mxu0 %v3363
    %v3365 = vpop.f32.mrf.mxu0
    %v3366 = vadd.f32 %v3021, %v3365
    %v3367 = vand.u32 %v1361, 4294901760
    %3368 = vmatmul.f32.gmra.mxu0 %v3367
    %v3369 = vpop.f32.mrf.mxu0
    %v3370 = vadd.f32 %v3027, %v3369
    %v3371 = vand.u32 %v1362, 4294901760
    %3372 = vmatmul.f32.gmra.mxu0 %v3371
    %v3373 = vpop.f32.mrf.mxu0
    %v3374 = vadd.f32 %v3033, %v3373
    %v3375 = vand.u32 %v1363, 4294901760
    %3376 = vmatmul.f32.gmra.mxu0 %v3375
    %v3377 = vpop.f32.mrf.mxu0
    %v3378 = vadd.f32 %v3039, %v3377
    %v3379 = vand.u32 %v1364, 4294901760
    %3380 = vmatmul.f32.gmra.mxu0 %v3379
    %v3381 = vpop.f32.mrf.mxu0
    %v3382 = vadd.f32 %v3045, %v3381
    %v3383 = vand.u32 %v1365, 4294901760
    %3384 = vmatmul.f32.gmra.mxu0 %v3383
    %v3385 = vpop.f32.mrf.mxu0
    %v3386 = vadd.f32 %v3051, %v3385
    %v3387 = vand.u32 %v1366, 4294901760
    %3388 = vmatmul.f32.gmra.mxu0 %v3387
    %v3389 = vpop.f32.mrf.mxu0
    %v3390 = vadd.f32 %v3057, %v3389
    %v3391 = vand.u32 %v1367, 4294901760
    %3392 = vmatmul.f32.gmra.mxu0 %v3391
    %v3393 = vpop.f32.mrf.mxu0
    %v3394 = vadd.f32 %v3063, %v3393
    %v3395 = vand.u32 %v1368, 4294901760
    %3396 = vmatmul.f32.gmra.mxu0 %v3395
    %v3397 = vpop.f32.mrf.mxu0
    %v3398 = vadd.f32 %v3069, %v3397
    %v3399 = vand.u32 %v1369, 4294901760
    %3400 = vmatmul.f32.gmra.mxu0 %v3399
    %v3401 = vpop.f32.mrf.mxu0
    %v3402 = vadd.f32 %v3075, %v3401
    %v3403 = vand.u32 %v1370, 4294901760
    %3404 = vmatmul.f32.gmra.mxu0 %v3403
    %v3405 = vpop.f32.mrf.mxu0
    %v3406 = vadd.f32 %v3081, %v3405
    %v3407 = vand.u32 %v1371, 4294901760
    %3408 = vmatmul.f32.gmra.mxu0 %v3407
    %v3409 = vpop.f32.mrf.mxu0
    %v3410 = vadd.f32 %v3087, %v3409
    %v3411 = vand.u32 %v1372, 4294901760
    %3412 = vmatmul.f32.gmra.mxu0 %v3411
    %v3413 = vpop.f32.mrf.mxu0
    %v3414 = vadd.f32 %v3093, %v3413
    %3415 = vdwg.mxu0
    %v3416 = vand.u32 %v1403, 4294901760
    %3417 = vmatpush.msra.mxu0 %v3416
    %v3418 = vand.u32 %v1401, 4294901760
    %3419 = vmatpush.msra.mxu0 %v3418
    %v3420 = vand.u32 %v1399, 4294901760
    %3421 = vmatpush.msra.mxu0 %v3420
    %v3422 = vand.u32 %v1397, 4294901760
    %3423 = vmatpush.msra.mxu0 %v3422
    %v3424 = vand.u32 %v1395, 4294901760
    %3425 = vmatpush.msra.mxu0 %v3424
    %v3426 = vand.u32 %v1393, 4294901760
    %3427 = vmatpush.msra.mxu0 %v3426
    %v3428 = vand.u32 %v1391, 4294901760
    %3429 = vmatpush.msra.mxu0 %v3428
    %v3430 = vand.u32 %v1389, 4294901760
    %3431 = vmatpush.msra.mxu0 %v3430
    %v3432 = vand.u32 %v1387, 4294901760
    %3433 = vmatpush.msra.mxu0 %v3432
    %v3434 = vand.u32 %v1385, 4294901760
    %3435 = vmatpush.msra.mxu0 %v3434
    %v3436 = vand.u32 %v1383, 4294901760
    %3437 = vmatpush.msra.mxu0 %v3436
    %v3438 = vand.u32 %v1381, 4294901760
    %3439 = vmatpush.msra.mxu0 %v3438
    %v3440 = vand.u32 %v1379, 4294901760
    %3441 = vmatpush.msra.mxu0 %v3440
    %v3442 = vand.u32 %v1377, 4294901760
    %3443 = vmatpush.msra.mxu0 %v3442
    %v3444 = vand.u32 %v1375, 4294901760
    %3445 = vmatpush.msra.mxu0 %v3444
    %v3446 = vand.u32 %v1373, 4294901760
    %3447 = vmatpush.msra.mxu0 %v3446
    %v3448 = vand.u32 %v1309, 4294901760
    %3449 = vmatmul.f32.gmra.mxu0 %v3448
    %v3450 = vpop.f32.mrf.mxu0
    %v3451 = vadd.f32 %v3162, %v3450
    %v3452 = vand.u32 %v1310, 4294901760
    %3453 = vmatmul.f32.gmra.mxu0 %v3452
    %v3454 = vpop.f32.mrf.mxu0
    %v3455 = vadd.f32 %v3166, %v3454
    %v3456 = vand.u32 %v1311, 4294901760
    %3457 = vmatmul.f32.gmra.mxu0 %v3456
    %v3458 = vpop.f32.mrf.mxu0
    %v3459 = vadd.f32 %v3170, %v3458
    %v3460 = vand.u32 %v1312, 4294901760
    %3461 = vmatmul.f32.gmra.mxu0 %v3460
    %v3462 = vpop.f32.mrf.mxu0
    %v3463 = vadd.f32 %v3174, %v3462
    %v3464 = vand.u32 %v1313, 4294901760
    %3465 = vmatmul.f32.gmra.mxu0 %v3464
    %v3466 = vpop.f32.mrf.mxu0
    %v3467 = vadd.f32 %v3178, %v3466
    %v3468 = vand.u32 %v1314, 4294901760
    %3469 = vmatmul.f32.gmra.mxu0 %v3468
    %v3470 = vpop.f32.mrf.mxu0
    %v3471 = vadd.f32 %v3182, %v3470
    %v3472 = vand.u32 %v1315, 4294901760
    %3473 = vmatmul.f32.gmra.mxu0 %v3472
    %v3474 = vpop.f32.mrf.mxu0
    %v3475 = vadd.f32 %v3186, %v3474
    %v3476 = vand.u32 %v1316, 4294901760
    %3477 = vmatmul.f32.gmra.mxu0 %v3476
    %v3478 = vpop.f32.mrf.mxu0
    %v3479 = vadd.f32 %v3190, %v3478
    %v3480 = vand.u32 %v1317, 4294901760
    %3481 = vmatmul.f32.gmra.mxu0 %v3480
    %v3482 = vpop.f32.mrf.mxu0
    %v3483 = vadd.f32 %v3194, %v3482
    %v3484 = vand.u32 %v1318, 4294901760
    %3485 = vmatmul.f32.gmra.mxu0 %v3484
    %v3486 = vpop.f32.mrf.mxu0
    %v3487 = vadd.f32 %v3198, %v3486
    %v3488 = vand.u32 %v1319, 4294901760
    %3489 = vmatmul.f32.gmra.mxu0 %v3488
    %v3490 = vpop.f32.mrf.mxu0
    %v3491 = vadd.f32 %v3202, %v3490
    %v3492 = vand.u32 %v1320, 4294901760
    %3493 = vmatmul.f32.gmra.mxu0 %v3492
    %v3494 = vpop.f32.mrf.mxu0
    %v3495 = vadd.f32 %v3206, %v3494
    %v3496 = vand.u32 %v1321, 4294901760
    %3497 = vmatmul.f32.gmra.mxu0 %v3496
    %v3498 = vpop.f32.mrf.mxu0
    %v3499 = vadd.f32 %v3210, %v3498
    %v3500 = vand.u32 %v1322, 4294901760
    %3501 = vmatmul.f32.gmra.mxu0 %v3500
    %v3502 = vpop.f32.mrf.mxu0
    %v3503 = vadd.f32 %v3214, %v3502
    %v3504 = vand.u32 %v1323, 4294901760
    %3505 = vmatmul.f32.gmra.mxu0 %v3504
    %v3506 = vpop.f32.mrf.mxu0
    %v3507 = vadd.f32 %v3218, %v3506
    %v3508 = vand.u32 %v1324, 4294901760
    %3509 = vmatmul.f32.gmra.mxu0 %v3508
    %v3510 = vpop.f32.mrf.mxu0
    %v3511 = vadd.f32 %v3222, %v3510
    %v3512 = vand.u32 %v1325, 4294901760
    %3513 = vmatmul.f32.gmra.mxu0 %v3512
    %v3514 = vpop.f32.mrf.mxu0
    %v3515 = vadd.f32 %v3226, %v3514
    %v3516 = vand.u32 %v1326, 4294901760
    %3517 = vmatmul.f32.gmra.mxu0 %v3516
    %v3518 = vpop.f32.mrf.mxu0
    %v3519 = vadd.f32 %v3230, %v3518
    %v3520 = vand.u32 %v1327, 4294901760
    %3521 = vmatmul.f32.gmra.mxu0 %v3520
    %v3522 = vpop.f32.mrf.mxu0
    %v3523 = vadd.f32 %v3234, %v3522
    %v3524 = vand.u32 %v1328, 4294901760
    %3525 = vmatmul.f32.gmra.mxu0 %v3524
    %v3526 = vpop.f32.mrf.mxu0
    %v3527 = vadd.f32 %v3238, %v3526
    %v3528 = vand.u32 %v1329, 4294901760
    %3529 = vmatmul.f32.gmra.mxu0 %v3528
    %v3530 = vpop.f32.mrf.mxu0
    %v3531 = vadd.f32 %v3242, %v3530
    %v3532 = vand.u32 %v1330, 4294901760
    %3533 = vmatmul.f32.gmra.mxu0 %v3532
    %v3534 = vpop.f32.mrf.mxu0
    %v3535 = vadd.f32 %v3246, %v3534
    %v3536 = vand.u32 %v1331, 4294901760
    %3537 = vmatmul.f32.gmra.mxu0 %v3536
    %v3538 = vpop.f32.mrf.mxu0
    %v3539 = vadd.f32 %v3250, %v3538
    %v3540 = vand.u32 %v1332, 4294901760
    %3541 = vmatmul.f32.gmra.mxu0 %v3540
    %v3542 = vpop.f32.mrf.mxu0
    %v3543 = vadd.f32 %v3254, %v3542
    %v3544 = vand.u32 %v1333, 4294901760
    %3545 = vmatmul.f32.gmra.mxu0 %v3544
    %v3546 = vpop.f32.mrf.mxu0
    %v3547 = vadd.f32 %v3258, %v3546
    %v3548 = vand.u32 %v1334, 4294901760
    %3549 = vmatmul.f32.gmra.mxu0 %v3548
    %v3550 = vpop.f32.mrf.mxu0
    %v3551 = vadd.f32 %v3262, %v3550
    %v3552 = vand.u32 %v1335, 4294901760
    %3553 = vmatmul.f32.gmra.mxu0 %v3552
    %v3554 = vpop.f32.mrf.mxu0
    %v3555 = vadd.f32 %v3266, %v3554
    %v3556 = vand.u32 %v1336, 4294901760
    %3557 = vmatmul.f32.gmra.mxu0 %v3556
    %v3558 = vpop.f32.mrf.mxu0
    %v3559 = vadd.f32 %v3270, %v3558
    %v3560 = vand.u32 %v1337, 4294901760
    %3561 = vmatmul.f32.gmra.mxu0 %v3560
    %v3562 = vpop.f32.mrf.mxu0
    %v3563 = vadd.f32 %v3274, %v3562
    %v3564 = vand.u32 %v1338, 4294901760
    %3565 = vmatmul.f32.gmra.mxu0 %v3564
    %v3566 = vpop.f32.mrf.mxu0
    %v3567 = vadd.f32 %v3278, %v3566
    %v3568 = vand.u32 %v1339, 4294901760
    %3569 = vmatmul.f32.gmra.mxu0 %v3568
    %v3570 = vpop.f32.mrf.mxu0
    %v3571 = vadd.f32 %v3282, %v3570
    %v3572 = vand.u32 %v1340, 4294901760
    %3573 = vmatmul.f32.gmra.mxu0 %v3572
    %v3574 = vpop.f32.mrf.mxu0
    %v3575 = vadd.f32 %v3286, %v3574
    %v3576 = vand.u32 %v1341, 4294901760
    %3577 = vmatmul.f32.gmra.mxu0 %v3576
    %v3578 = vpop.f32.mrf.mxu0
    %v3579 = vadd.f32 %v3290, %v3578
    %v3580 = vand.u32 %v1342, 4294901760
    %3581 = vmatmul.f32.gmra.mxu0 %v3580
    %v3582 = vpop.f32.mrf.mxu0
    %v3583 = vadd.f32 %v3294, %v3582
    %v3584 = vand.u32 %v1343, 4294901760
    %3585 = vmatmul.f32.gmra.mxu0 %v3584
    %v3586 = vpop.f32.mrf.mxu0
    %v3587 = vadd.f32 %v3298, %v3586
    %v3588 = vand.u32 %v1344, 4294901760
    %3589 = vmatmul.f32.gmra.mxu0 %v3588
    %v3590 = vpop.f32.mrf.mxu0
    %v3591 = vadd.f32 %v3302, %v3590
    %v3592 = vand.u32 %v1345, 4294901760
    %3593 = vmatmul.f32.gmra.mxu0 %v3592
    %v3594 = vpop.f32.mrf.mxu0
    %v3595 = vadd.f32 %v3306, %v3594
    %v3596 = vand.u32 %v1346, 4294901760
    %3597 = vmatmul.f32.gmra.mxu0 %v3596
    %v3598 = vpop.f32.mrf.mxu0
    %v3599 = vadd.f32 %v3310, %v3598
    %v3600 = vand.u32 %v1347, 4294901760
    %3601 = vmatmul.f32.gmra.mxu0 %v3600
    %v3602 = vpop.f32.mrf.mxu0
    %v3603 = vadd.f32 %v3314, %v3602
    %v3604 = vand.u32 %v1348, 4294901760
    %3605 = vmatmul.f32.gmra.mxu0 %v3604
    %v3606 = vpop.f32.mrf.mxu0
    %v3607 = vadd.f32 %v3318, %v3606
    %v3608 = vand.u32 %v1349, 4294901760
    %3609 = vmatmul.f32.gmra.mxu0 %v3608
    %v3610 = vpop.f32.mrf.mxu0
    %v3611 = vadd.f32 %v3322, %v3610
    %v3612 = vand.u32 %v1350, 4294901760
    %3613 = vmatmul.f32.gmra.mxu0 %v3612
    %v3614 = vpop.f32.mrf.mxu0
    %v3615 = vadd.f32 %v3326, %v3614
    %v3616 = vand.u32 %v1351, 4294901760
    %3617 = vmatmul.f32.gmra.mxu0 %v3616
    %v3618 = vpop.f32.mrf.mxu0
    %v3619 = vadd.f32 %v3330, %v3618
    %v3620 = vand.u32 %v1352, 4294901760
    %3621 = vmatmul.f32.gmra.mxu0 %v3620
    %v3622 = vpop.f32.mrf.mxu0
    %v3623 = vadd.f32 %v3334, %v3622
    %v3624 = vand.u32 %v1353, 4294901760
    %3625 = vmatmul.f32.gmra.mxu0 %v3624
    %v3626 = vpop.f32.mrf.mxu0
    %v3627 = vadd.f32 %v3338, %v3626
    %v3628 = vand.u32 %v1354, 4294901760
    %3629 = vmatmul.f32.gmra.mxu0 %v3628
    %v3630 = vpop.f32.mrf.mxu0
    %v3631 = vadd.f32 %v3342, %v3630
    %v3632 = vand.u32 %v1355, 4294901760
    %3633 = vmatmul.f32.gmra.mxu0 %v3632
    %v3634 = vpop.f32.mrf.mxu0
    %v3635 = vadd.f32 %v3346, %v3634
    %v3636 = vand.u32 %v1356, 4294901760
    %3637 = vmatmul.f32.gmra.mxu0 %v3636
    %v3638 = vpop.f32.mrf.mxu0
    %v3639 = vadd.f32 %v3350, %v3638
    %v3640 = vand.u32 %v1357, 4294901760
    %3641 = vmatmul.f32.gmra.mxu0 %v3640
    %v3642 = vpop.f32.mrf.mxu0
    %v3643 = vadd.f32 %v3354, %v3642
    %v3644 = vand.u32 %v1358, 4294901760
    %3645 = vmatmul.f32.gmra.mxu0 %v3644
    %v3646 = vpop.f32.mrf.mxu0
    %v3647 = vadd.f32 %v3358, %v3646
    %v3648 = vand.u32 %v1359, 4294901760
    %3649 = vmatmul.f32.gmra.mxu0 %v3648
    %v3650 = vpop.f32.mrf.mxu0
    %v3651 = vadd.f32 %v3362, %v3650
    %v3652 = vand.u32 %v1360, 4294901760
    %3653 = vmatmul.f32.gmra.mxu0 %v3652
    %v3654 = vpop.f32.mrf.mxu0
    %v3655 = vadd.f32 %v3366, %v3654
    %v3656 = vand.u32 %v1361, 4294901760
    %3657 = vmatmul.f32.gmra.mxu0 %v3656
    %v3658 = vpop.f32.mrf.mxu0
    %v3659 = vadd.f32 %v3370, %v3658
    %v3660 = vand.u32 %v1362, 4294901760
    %3661 = vmatmul.f32.gmra.mxu0 %v3660
    %v3662 = vpop.f32.mrf.mxu0
    %v3663 = vadd.f32 %v3374, %v3662
    %v3664 = vand.u32 %v1363, 4294901760
    %3665 = vmatmul.f32.gmra.mxu0 %v3664
    %v3666 = vpop.f32.mrf.mxu0
    %v3667 = vadd.f32 %v3378, %v3666
    %v3668 = vand.u32 %v1364, 4294901760
    %3669 = vmatmul.f32.gmra.mxu0 %v3668
    %v3670 = vpop.f32.mrf.mxu0
    %v3671 = vadd.f32 %v3382, %v3670
    %v3672 = vand.u32 %v1365, 4294901760
    %3673 = vmatmul.f32.gmra.mxu0 %v3672
    %v3674 = vpop.f32.mrf.mxu0
    %v3675 = vadd.f32 %v3386, %v3674
    %v3676 = vand.u32 %v1366, 4294901760
    %3677 = vmatmul.f32.gmra.mxu0 %v3676
    %v3678 = vpop.f32.mrf.mxu0
    %v3679 = vadd.f32 %v3390, %v3678
    %v3680 = vand.u32 %v1367, 4294901760
    %3681 = vmatmul.f32.gmra.mxu0 %v3680
    %v3682 = vpop.f32.mrf.mxu0
    %v3683 = vadd.f32 %v3394, %v3682
    %v3684 = vand.u32 %v1368, 4294901760
    %3685 = vmatmul.f32.gmra.mxu0 %v3684
    %v3686 = vpop.f32.mrf.mxu0
    %v3687 = vadd.f32 %v3398, %v3686
    %v3688 = vand.u32 %v1369, 4294901760
    %3689 = vmatmul.f32.gmra.mxu0 %v3688
    %v3690 = vpop.f32.mrf.mxu0
    %v3691 = vadd.f32 %v3402, %v3690
    %v3692 = vand.u32 %v1370, 4294901760
    %3693 = vmatmul.f32.gmra.mxu0 %v3692
    %v3694 = vpop.f32.mrf.mxu0
    %v3695 = vadd.f32 %v3406, %v3694
    %v3696 = vand.u32 %v1371, 4294901760
    %3697 = vmatmul.f32.gmra.mxu0 %v3696
    %v3698 = vpop.f32.mrf.mxu0
    %v3699 = vadd.f32 %v3410, %v3698
    %v3700 = vand.u32 %v1372, 4294901760
    %3701 = vmatmul.f32.gmra.mxu0 %v3700
    %v3702 = vpop.f32.mrf.mxu0
    %v3703 = vadd.f32 %v3414, %v3702
    %3704 = vdwg.mxu0
    %v3705 = vand.u32 %v1404, 4294901760
    %3706 = vmatpush.msra.mxu0 %v3705
    %v3707 = vand.u32 %v1402, 4294901760
    %3708 = vmatpush.msra.mxu0 %v3707
    %v3709 = vand.u32 %v1400, 4294901760
    %3710 = vmatpush.msra.mxu0 %v3709
    %v3711 = vand.u32 %v1398, 4294901760
    %3712 = vmatpush.msra.mxu0 %v3711
    %v3713 = vand.u32 %v1396, 4294901760
    %3714 = vmatpush.msra.mxu0 %v3713
    %v3715 = vand.u32 %v1394, 4294901760
    %3716 = vmatpush.msra.mxu0 %v3715
    %v3717 = vand.u32 %v1392, 4294901760
    %3718 = vmatpush.msra.mxu0 %v3717
    %v3719 = vand.u32 %v1390, 4294901760
    %3720 = vmatpush.msra.mxu0 %v3719
    %v3721 = vand.u32 %v1388, 4294901760
    %3722 = vmatpush.msra.mxu0 %v3721
    %v3723 = vand.u32 %v1386, 4294901760
    %3724 = vmatpush.msra.mxu0 %v3723
    %v3725 = vand.u32 %v1384, 4294901760
    %3726 = vmatpush.msra.mxu0 %v3725
    %v3727 = vand.u32 %v1382, 4294901760
    %3728 = vmatpush.msra.mxu0 %v3727
    %v3729 = vand.u32 %v1380, 4294901760
    %3730 = vmatpush.msra.mxu0 %v3729
    %v3731 = vand.u32 %v1378, 4294901760
    %3732 = vmatpush.msra.mxu0 %v3731
    %v3733 = vand.u32 %v1376, 4294901760
    %3734 = vmatpush.msra.mxu0 %v3733
    %v3735 = vand.u32 %v1374, 4294901760
    %3736 = vmatpush.msra.mxu0 %v3735
    %v3737 = vand.u32 %v1309, 4294901760
    %v3738 = vsub.f32 %v1309, %v3737
    %v3739 = vand.u32 %v3738, 4294901760
    %v3740 = vsub.f32 %v3738, %v3739
    %v3741 = vand.u32 %v3740, 4294901760
    %3742 = vmatmul.f32.gmra.mxu0 %v3741
    %v3743 = vpop.f32.mrf.mxu0
    %v3744 = vadd.f32 %v1408, %v3743
    %v3745 = vand.u32 %v1310, 4294901760
    %v3746 = vsub.f32 %v1310, %v3745
    %v3747 = vand.u32 %v3746, 4294901760
    %v3748 = vsub.f32 %v3746, %v3747
    %v3749 = vand.u32 %v3748, 4294901760
    %3750 = vmatmul.f32.gmra.mxu0 %v3749
    %v3751 = vpop.f32.mrf.mxu0
    %v3752 = vadd.f32 %v1408, %v3751
    %v3753 = vand.u32 %v1311, 4294901760
    %v3754 = vsub.f32 %v1311, %v3753
    %v3755 = vand.u32 %v3754, 4294901760
    %v3756 = vsub.f32 %v3754, %v3755
    %v3757 = vand.u32 %v3756, 4294901760
    %3758 = vmatmul.f32.gmra.mxu0 %v3757
    %v3759 = vpop.f32.mrf.mxu0
    %v3760 = vadd.f32 %v1408, %v3759
    %v3761 = vand.u32 %v1312, 4294901760
    %v3762 = vsub.f32 %v1312, %v3761
    %v3763 = vand.u32 %v3762, 4294901760
    %v3764 = vsub.f32 %v3762, %v3763
    %v3765 = vand.u32 %v3764, 4294901760
    %3766 = vmatmul.f32.gmra.mxu0 %v3765
    %v3767 = vpop.f32.mrf.mxu0
    %v3768 = vadd.f32 %v1408, %v3767
    %v3769 = vand.u32 %v1313, 4294901760
    %v3770 = vsub.f32 %v1313, %v3769
    %v3771 = vand.u32 %v3770, 4294901760
    %v3772 = vsub.f32 %v3770, %v3771
    %v3773 = vand.u32 %v3772, 4294901760
    %3774 = vmatmul.f32.gmra.mxu0 %v3773
    %v3775 = vpop.f32.mrf.mxu0
    %v3776 = vadd.f32 %v1408, %v3775
    %v3777 = vand.u32 %v1314, 4294901760
    %v3778 = vsub.f32 %v1314, %v3777
    %v3779 = vand.u32 %v3778, 4294901760
    %v3780 = vsub.f32 %v3778, %v3779
    %v3781 = vand.u32 %v3780, 4294901760
    %3782 = vmatmul.f32.gmra.mxu0 %v3781
    %v3783 = vpop.f32.mrf.mxu0
    %v3784 = vadd.f32 %v1408, %v3783
    %v3785 = vand.u32 %v1315, 4294901760
    %v3786 = vsub.f32 %v1315, %v3785
    %v3787 = vand.u32 %v3786, 4294901760
    %v3788 = vsub.f32 %v3786, %v3787
    %v3789 = vand.u32 %v3788, 4294901760
    %3790 = vmatmul.f32.gmra.mxu0 %v3789
    %v3791 = vpop.f32.mrf.mxu0
    %v3792 = vadd.f32 %v1408, %v3791
    %v3793 = vand.u32 %v1316, 4294901760
    %v3794 = vsub.f32 %v1316, %v3793
    %v3795 = vand.u32 %v3794, 4294901760
    %v3796 = vsub.f32 %v3794, %v3795
    %v3797 = vand.u32 %v3796, 4294901760
    %3798 = vmatmul.f32.gmra.mxu0 %v3797
    %v3799 = vpop.f32.mrf.mxu0
    %v3800 = vadd.f32 %v1408, %v3799
    %v3801 = vand.u32 %v1317, 4294901760
    %v3802 = vsub.f32 %v1317, %v3801
    %v3803 = vand.u32 %v3802, 4294901760
    %v3804 = vsub.f32 %v3802, %v3803
    %v3805 = vand.u32 %v3804, 4294901760
    %3806 = vmatmul.f32.gmra.mxu0 %v3805
    %v3807 = vpop.f32.mrf.mxu0
    %v3808 = vadd.f32 %v1408, %v3807
    %v3809 = vand.u32 %v1318, 4294901760
    %v3810 = vsub.f32 %v1318, %v3809
    %v3811 = vand.u32 %v3810, 4294901760
    %v3812 = vsub.f32 %v3810, %v3811
    %v3813 = vand.u32 %v3812, 4294901760
    %3814 = vmatmul.f32.gmra.mxu0 %v3813
    %v3815 = vpop.f32.mrf.mxu0
    %v3816 = vadd.f32 %v1408, %v3815
    %v3817 = vand.u32 %v1319, 4294901760
    %v3818 = vsub.f32 %v1319, %v3817
    %v3819 = vand.u32 %v3818, 4294901760
    %v3820 = vsub.f32 %v3818, %v3819
    %v3821 = vand.u32 %v3820, 4294901760
    %3822 = vmatmul.f32.gmra.mxu0 %v3821
    %v3823 = vpop.f32.mrf.mxu0
    %v3824 = vadd.f32 %v1408, %v3823
    %v3825 = vand.u32 %v1320, 4294901760
    %v3826 = vsub.f32 %v1320, %v3825
    %v3827 = vand.u32 %v3826, 4294901760
    %v3828 = vsub.f32 %v3826, %v3827
    %v3829 = vand.u32 %v3828, 4294901760
    %3830 = vmatmul.f32.gmra.mxu0 %v3829
    %v3831 = vpop.f32.mrf.mxu0
    %v3832 = vadd.f32 %v1408, %v3831
    %v3833 = vand.u32 %v1321, 4294901760
    %v3834 = vsub.f32 %v1321, %v3833
    %v3835 = vand.u32 %v3834, 4294901760
    %v3836 = vsub.f32 %v3834, %v3835
    %v3837 = vand.u32 %v3836, 4294901760
    %3838 = vmatmul.f32.gmra.mxu0 %v3837
    %v3839 = vpop.f32.mrf.mxu0
    %v3840 = vadd.f32 %v1408, %v3839
    %v3841 = vand.u32 %v1322, 4294901760
    %v3842 = vsub.f32 %v1322, %v3841
    %v3843 = vand.u32 %v3842, 4294901760
    %v3844 = vsub.f32 %v3842, %v3843
    %v3845 = vand.u32 %v3844, 4294901760
    %3846 = vmatmul.f32.gmra.mxu0 %v3845
    %v3847 = vpop.f32.mrf.mxu0
    %v3848 = vadd.f32 %v1408, %v3847
    %v3849 = vand.u32 %v1323, 4294901760
    %v3850 = vsub.f32 %v1323, %v3849
    %v3851 = vand.u32 %v3850, 4294901760
    %v3852 = vsub.f32 %v3850, %v3851
    %v3853 = vand.u32 %v3852, 4294901760
    %3854 = vmatmul.f32.gmra.mxu0 %v3853
    %v3855 = vpop.f32.mrf.mxu0
    %v3856 = vadd.f32 %v1408, %v3855
    %v3857 = vand.u32 %v1324, 4294901760
    %v3858 = vsub.f32 %v1324, %v3857
    %v3859 = vand.u32 %v3858, 4294901760
    %v3860 = vsub.f32 %v3858, %v3859
    %v3861 = vand.u32 %v3860, 4294901760
    %3862 = vmatmul.f32.gmra.mxu0 %v3861
    %v3863 = vpop.f32.mrf.mxu0
    %v3864 = vadd.f32 %v1408, %v3863
    %v3865 = vand.u32 %v1325, 4294901760
    %v3866 = vsub.f32 %v1325, %v3865
    %v3867 = vand.u32 %v3866, 4294901760
    %v3868 = vsub.f32 %v3866, %v3867
    %v3869 = vand.u32 %v3868, 4294901760
    %3870 = vmatmul.f32.gmra.mxu0 %v3869
    %v3871 = vpop.f32.mrf.mxu0
    %v3872 = vadd.f32 %v1408, %v3871
    %v3873 = vand.u32 %v1326, 4294901760
    %v3874 = vsub.f32 %v1326, %v3873
    %v3875 = vand.u32 %v3874, 4294901760
    %v3876 = vsub.f32 %v3874, %v3875
    %v3877 = vand.u32 %v3876, 4294901760
    %3878 = vmatmul.f32.gmra.mxu0 %v3877
    %v3879 = vpop.f32.mrf.mxu0
    %v3880 = vadd.f32 %v1408, %v3879
    %v3881 = vand.u32 %v1327, 4294901760
    %v3882 = vsub.f32 %v1327, %v3881
    %v3883 = vand.u32 %v3882, 4294901760
    %v3884 = vsub.f32 %v3882, %v3883
    %v3885 = vand.u32 %v3884, 4294901760
    %3886 = vmatmul.f32.gmra.mxu0 %v3885
    %v3887 = vpop.f32.mrf.mxu0
    %v3888 = vadd.f32 %v1408, %v3887
    %v3889 = vand.u32 %v1328, 4294901760
    %v3890 = vsub.f32 %v1328, %v3889
    %v3891 = vand.u32 %v3890, 4294901760
    %v3892 = vsub.f32 %v3890, %v3891
    %v3893 = vand.u32 %v3892, 4294901760
    %3894 = vmatmul.f32.gmra.mxu0 %v3893
    %v3895 = vpop.f32.mrf.mxu0
    %v3896 = vadd.f32 %v1408, %v3895
    %v3897 = vand.u32 %v1329, 4294901760
    %v3898 = vsub.f32 %v1329, %v3897
    %v3899 = vand.u32 %v3898, 4294901760
    %v3900 = vsub.f32 %v3898, %v3899
    %v3901 = vand.u32 %v3900, 4294901760
    %3902 = vmatmul.f32.gmra.mxu0 %v3901
    %v3903 = vpop.f32.mrf.mxu0
    %v3904 = vadd.f32 %v1408, %v3903
    %v3905 = vand.u32 %v1330, 4294901760
    %v3906 = vsub.f32 %v1330, %v3905
    %v3907 = vand.u32 %v3906, 4294901760
    %v3908 = vsub.f32 %v3906, %v3907
    %v3909 = vand.u32 %v3908, 4294901760
    %3910 = vmatmul.f32.gmra.mxu0 %v3909
    %v3911 = vpop.f32.mrf.mxu0
    %v3912 = vadd.f32 %v1408, %v3911
    %v3913 = vand.u32 %v1331, 4294901760
    %v3914 = vsub.f32 %v1331, %v3913
    %v3915 = vand.u32 %v3914, 4294901760
    %v3916 = vsub.f32 %v3914, %v3915
    %v3917 = vand.u32 %v3916, 4294901760
    %3918 = vmatmul.f32.gmra.mxu0 %v3917
    %v3919 = vpop.f32.mrf.mxu0
    %v3920 = vadd.f32 %v1408, %v3919
    %v3921 = vand.u32 %v1332, 4294901760
    %v3922 = vsub.f32 %v1332, %v3921
    %v3923 = vand.u32 %v3922, 4294901760
    %v3924 = vsub.f32 %v3922, %v3923
    %v3925 = vand.u32 %v3924, 4294901760
    %3926 = vmatmul.f32.gmra.mxu0 %v3925
    %v3927 = vpop.f32.mrf.mxu0
    %v3928 = vadd.f32 %v1408, %v3927
    %v3929 = vand.u32 %v1333, 4294901760
    %v3930 = vsub.f32 %v1333, %v3929
    %v3931 = vand.u32 %v3930, 4294901760
    %v3932 = vsub.f32 %v3930, %v3931
    %v3933 = vand.u32 %v3932, 4294901760
    %3934 = vmatmul.f32.gmra.mxu0 %v3933
    %v3935 = vpop.f32.mrf.mxu0
    %v3936 = vadd.f32 %v1408, %v3935
    %v3937 = vand.u32 %v1334, 4294901760
    %v3938 = vsub.f32 %v1334, %v3937
    %v3939 = vand.u32 %v3938, 4294901760
    %v3940 = vsub.f32 %v3938, %v3939
    %v3941 = vand.u32 %v3940, 4294901760
    %3942 = vmatmul.f32.gmra.mxu0 %v3941
    %v3943 = vpop.f32.mrf.mxu0
    %v3944 = vadd.f32 %v1408, %v3943
    %v3945 = vand.u32 %v1335, 4294901760
    %v3946 = vsub.f32 %v1335, %v3945
    %v3947 = vand.u32 %v3946, 4294901760
    %v3948 = vsub.f32 %v3946, %v3947
    %v3949 = vand.u32 %v3948, 4294901760
    %3950 = vmatmul.f32.gmra.mxu0 %v3949
    %v3951 = vpop.f32.mrf.mxu0
    %v3952 = vadd.f32 %v1408, %v3951
    %v3953 = vand.u32 %v1336, 4294901760
    %v3954 = vsub.f32 %v1336, %v3953
    %v3955 = vand.u32 %v3954, 4294901760
    %v3956 = vsub.f32 %v3954, %v3955
    %v3957 = vand.u32 %v3956, 4294901760
    %3958 = vmatmul.f32.gmra.mxu0 %v3957
    %v3959 = vpop.f32.mrf.mxu0
    %v3960 = vadd.f32 %v1408, %v3959
    %v3961 = vand.u32 %v1337, 4294901760
    %v3962 = vsub.f32 %v1337, %v3961
    %v3963 = vand.u32 %v3962, 4294901760
    %v3964 = vsub.f32 %v3962, %v3963
    %v3965 = vand.u32 %v3964, 4294901760
    %3966 = vmatmul.f32.gmra.mxu0 %v3965
    %v3967 = vpop.f32.mrf.mxu0
    %v3968 = vadd.f32 %v1408, %v3967
    %v3969 = vand.u32 %v1338, 4294901760
    %v3970 = vsub.f32 %v1338, %v3969
    %v3971 = vand.u32 %v3970, 4294901760
    %v3972 = vsub.f32 %v3970, %v3971
    %v3973 = vand.u32 %v3972, 4294901760
    %3974 = vmatmul.f32.gmra.mxu0 %v3973
    %v3975 = vpop.f32.mrf.mxu0
    %v3976 = vadd.f32 %v1408, %v3975
    %v3977 = vand.u32 %v1339, 4294901760
    %v3978 = vsub.f32 %v1339, %v3977
    %v3979 = vand.u32 %v3978, 4294901760
    %v3980 = vsub.f32 %v3978, %v3979
    %v3981 = vand.u32 %v3980, 4294901760
    %3982 = vmatmul.f32.gmra.mxu0 %v3981
    %v3983 = vpop.f32.mrf.mxu0
    %v3984 = vadd.f32 %v1408, %v3983
    %v3985 = vand.u32 %v1340, 4294901760
    %v3986 = vsub.f32 %v1340, %v3985
    %v3987 = vand.u32 %v3986, 4294901760
    %v3988 = vsub.f32 %v3986, %v3987
    %v3989 = vand.u32 %v3988, 4294901760
    %3990 = vmatmul.f32.gmra.mxu0 %v3989
    %v3991 = vpop.f32.mrf.mxu0
    %v3992 = vadd.f32 %v1408, %v3991
    %v3993 = vand.u32 %v1341, 4294901760
    %v3994 = vsub.f32 %v1341, %v3993
    %v3995 = vand.u32 %v3994, 4294901760
    %v3996 = vsub.f32 %v3994, %v3995
    %v3997 = vand.u32 %v3996, 4294901760
    %3998 = vmatmul.f32.gmra.mxu0 %v3997
    %v3999 = vpop.f32.mrf.mxu0
    %v4000 = vadd.f32 %v1408, %v3999
    %v4001 = vand.u32 %v1342, 4294901760
    %v4002 = vsub.f32 %v1342, %v4001
    %v4003 = vand.u32 %v4002, 4294901760
    %v4004 = vsub.f32 %v4002, %v4003
    %v4005 = vand.u32 %v4004, 4294901760
    %4006 = vmatmul.f32.gmra.mxu0 %v4005
    %v4007 = vpop.f32.mrf.mxu0
    %v4008 = vadd.f32 %v1408, %v4007
    %v4009 = vand.u32 %v1343, 4294901760
    %v4010 = vsub.f32 %v1343, %v4009
    %v4011 = vand.u32 %v4010, 4294901760
    %v4012 = vsub.f32 %v4010, %v4011
    %v4013 = vand.u32 %v4012, 4294901760
    %4014 = vmatmul.f32.gmra.mxu0 %v4013
    %v4015 = vpop.f32.mrf.mxu0
    %v4016 = vadd.f32 %v1408, %v4015
    %v4017 = vand.u32 %v1344, 4294901760
    %v4018 = vsub.f32 %v1344, %v4017
    %v4019 = vand.u32 %v4018, 4294901760
    %v4020 = vsub.f32 %v4018, %v4019
    %v4021 = vand.u32 %v4020, 4294901760
    %4022 = vmatmul.f32.gmra.mxu0 %v4021
    %v4023 = vpop.f32.mrf.mxu0
    %v4024 = vadd.f32 %v1408, %v4023
    %v4025 = vand.u32 %v1345, 4294901760
    %v4026 = vsub.f32 %v1345, %v4025
    %v4027 = vand.u32 %v4026, 4294901760
    %v4028 = vsub.f32 %v4026, %v4027
    %v4029 = vand.u32 %v4028, 4294901760
    %4030 = vmatmul.f32.gmra.mxu0 %v4029
    %v4031 = vpop.f32.mrf.mxu0
    %v4032 = vadd.f32 %v1408, %v4031
    %v4033 = vand.u32 %v1346, 4294901760
    %v4034 = vsub.f32 %v1346, %v4033
    %v4035 = vand.u32 %v4034, 4294901760
    %v4036 = vsub.f32 %v4034, %v4035
    %v4037 = vand.u32 %v4036, 4294901760
    %4038 = vmatmul.f32.gmra.mxu0 %v4037
    %v4039 = vpop.f32.mrf.mxu0
    %v4040 = vadd.f32 %v1408, %v4039
    %v4041 = vand.u32 %v1347, 4294901760
    %v4042 = vsub.f32 %v1347, %v4041
    %v4043 = vand.u32 %v4042, 4294901760
    %v4044 = vsub.f32 %v4042, %v4043
    %v4045 = vand.u32 %v4044, 4294901760
    %4046 = vmatmul.f32.gmra.mxu0 %v4045
    %v4047 = vpop.f32.mrf.mxu0
    %v4048 = vadd.f32 %v1408, %v4047
    %v4049 = vand.u32 %v1348, 4294901760
    %v4050 = vsub.f32 %v1348, %v4049
    %v4051 = vand.u32 %v4050, 4294901760
    %v4052 = vsub.f32 %v4050, %v4051
    %v4053 = vand.u32 %v4052, 4294901760
    %4054 = vmatmul.f32.gmra.mxu0 %v4053
    %v4055 = vpop.f32.mrf.mxu0
    %v4056 = vadd.f32 %v1408, %v4055
    %v4057 = vand.u32 %v1349, 4294901760
    %v4058 = vsub.f32 %v1349, %v4057
    %v4059 = vand.u32 %v4058, 4294901760
    %v4060 = vsub.f32 %v4058, %v4059
    %v4061 = vand.u32 %v4060, 4294901760
    %4062 = vmatmul.f32.gmra.mxu0 %v4061
    %v4063 = vpop.f32.mrf.mxu0
    %v4064 = vadd.f32 %v1408, %v4063
    %v4065 = vand.u32 %v1350, 4294901760
    %v4066 = vsub.f32 %v1350, %v4065
    %v4067 = vand.u32 %v4066, 4294901760
    %v4068 = vsub.f32 %v4066, %v4067
    %v4069 = vand.u32 %v4068, 4294901760
    %4070 = vmatmul.f32.gmra.mxu0 %v4069
    %v4071 = vpop.f32.mrf.mxu0
    %v4072 = vadd.f32 %v1408, %v4071
    %v4073 = vand.u32 %v1351, 4294901760
    %v4074 = vsub.f32 %v1351, %v4073
    %v4075 = vand.u32 %v4074, 4294901760
    %v4076 = vsub.f32 %v4074, %v4075
    %v4077 = vand.u32 %v4076, 4294901760
    %4078 = vmatmul.f32.gmra.mxu0 %v4077
    %v4079 = vpop.f32.mrf.mxu0
    %v4080 = vadd.f32 %v1408, %v4079
    %v4081 = vand.u32 %v1352, 4294901760
    %v4082 = vsub.f32 %v1352, %v4081
    %v4083 = vand.u32 %v4082, 4294901760
    %v4084 = vsub.f32 %v4082, %v4083
    %v4085 = vand.u32 %v4084, 4294901760
    %4086 = vmatmul.f32.gmra.mxu0 %v4085
    %v4087 = vpop.f32.mrf.mxu0
    %v4088 = vadd.f32 %v1408, %v4087
    %v4089 = vand.u32 %v1353, 4294901760
    %v4090 = vsub.f32 %v1353, %v4089
    %v4091 = vand.u32 %v4090, 4294901760
    %v4092 = vsub.f32 %v4090, %v4091
    %v4093 = vand.u32 %v4092, 4294901760
    %4094 = vmatmul.f32.gmra.mxu0 %v4093
    %v4095 = vpop.f32.mrf.mxu0
    %v4096 = vadd.f32 %v1408, %v4095
    %v4097 = vand.u32 %v1354, 4294901760
    %v4098 = vsub.f32 %v1354, %v4097
    %v4099 = vand.u32 %v4098, 4294901760
    %v4100 = vsub.f32 %v4098, %v4099
    %v4101 = vand.u32 %v4100, 4294901760
    %4102 = vmatmul.f32.gmra.mxu0 %v4101
    %v4103 = vpop.f32.mrf.mxu0
    %v4104 = vadd.f32 %v1408, %v4103
    %v4105 = vand.u32 %v1355, 4294901760
    %v4106 = vsub.f32 %v1355, %v4105
    %v4107 = vand.u32 %v4106, 4294901760
    %v4108 = vsub.f32 %v4106, %v4107
    %v4109 = vand.u32 %v4108, 4294901760
    %4110 = vmatmul.f32.gmra.mxu0 %v4109
    %v4111 = vpop.f32.mrf.mxu0
    %v4112 = vadd.f32 %v1408, %v4111
    %v4113 = vand.u32 %v1356, 4294901760
    %v4114 = vsub.f32 %v1356, %v4113
    %v4115 = vand.u32 %v4114, 4294901760
    %v4116 = vsub.f32 %v4114, %v4115
    %v4117 = vand.u32 %v4116, 4294901760
    %4118 = vmatmul.f32.gmra.mxu0 %v4117
    %v4119 = vpop.f32.mrf.mxu0
    %v4120 = vadd.f32 %v1408, %v4119
    %v4121 = vand.u32 %v1357, 4294901760
    %v4122 = vsub.f32 %v1357, %v4121
    %v4123 = vand.u32 %v4122, 4294901760
    %v4124 = vsub.f32 %v4122, %v4123
    %v4125 = vand.u32 %v4124, 4294901760
    %4126 = vmatmul.f32.gmra.mxu0 %v4125
    %v4127 = vpop.f32.mrf.mxu0
    %v4128 = vadd.f32 %v1408, %v4127
    %v4129 = vand.u32 %v1358, 4294901760
    %v4130 = vsub.f32 %v1358, %v4129
    %v4131 = vand.u32 %v4130, 4294901760
    %v4132 = vsub.f32 %v4130, %v4131
    %v4133 = vand.u32 %v4132, 4294901760
    %4134 = vmatmul.f32.gmra.mxu0 %v4133
    %v4135 = vpop.f32.mrf.mxu0
    %v4136 = vadd.f32 %v1408, %v4135
    %v4137 = vand.u32 %v1359, 4294901760
    %v4138 = vsub.f32 %v1359, %v4137
    %v4139 = vand.u32 %v4138, 4294901760
    %v4140 = vsub.f32 %v4138, %v4139
    %v4141 = vand.u32 %v4140, 4294901760
    %4142 = vmatmul.f32.gmra.mxu0 %v4141
    %v4143 = vpop.f32.mrf.mxu0
    %v4144 = vadd.f32 %v1408, %v4143
    %v4145 = vand.u32 %v1360, 4294901760
    %v4146 = vsub.f32 %v1360, %v4145
    %v4147 = vand.u32 %v4146, 4294901760
    %v4148 = vsub.f32 %v4146, %v4147
    %v4149 = vand.u32 %v4148, 4294901760
    %4150 = vmatmul.f32.gmra.mxu0 %v4149
    %v4151 = vpop.f32.mrf.mxu0
    %v4152 = vadd.f32 %v1408, %v4151
    %v4153 = vand.u32 %v1361, 4294901760
    %v4154 = vsub.f32 %v1361, %v4153
    %v4155 = vand.u32 %v4154, 4294901760
    %v4156 = vsub.f32 %v4154, %v4155
    %v4157 = vand.u32 %v4156, 4294901760
    %4158 = vmatmul.f32.gmra.mxu0 %v4157
    %v4159 = vpop.f32.mrf.mxu0
    %v4160 = vadd.f32 %v1408, %v4159
    %v4161 = vand.u32 %v1362, 4294901760
    %v4162 = vsub.f32 %v1362, %v4161
    %v4163 = vand.u32 %v4162, 4294901760
    %v4164 = vsub.f32 %v4162, %v4163
    %v4165 = vand.u32 %v4164, 4294901760
    %4166 = vmatmul.f32.gmra.mxu0 %v4165
    %v4167 = vpop.f32.mrf.mxu0
    %v4168 = vadd.f32 %v1408, %v4167
    %v4169 = vand.u32 %v1363, 4294901760
    %v4170 = vsub.f32 %v1363, %v4169
    %v4171 = vand.u32 %v4170, 4294901760
    %v4172 = vsub.f32 %v4170, %v4171
    %v4173 = vand.u32 %v4172, 4294901760
    %4174 = vmatmul.f32.gmra.mxu0 %v4173
    %v4175 = vpop.f32.mrf.mxu0
    %v4176 = vadd.f32 %v1408, %v4175
    %v4177 = vand.u32 %v1364, 4294901760
    %v4178 = vsub.f32 %v1364, %v4177
    %v4179 = vand.u32 %v4178, 4294901760
    %v4180 = vsub.f32 %v4178, %v4179
    %v4181 = vand.u32 %v4180, 4294901760
    %4182 = vmatmul.f32.gmra.mxu0 %v4181
    %v4183 = vpop.f32.mrf.mxu0
    %v4184 = vadd.f32 %v1408, %v4183
    %v4185 = vand.u32 %v1365, 4294901760
    %v4186 = vsub.f32 %v1365, %v4185
    %v4187 = vand.u32 %v4186, 4294901760
    %v4188 = vsub.f32 %v4186, %v4187
    %v4189 = vand.u32 %v4188, 4294901760
    %4190 = vmatmul.f32.gmra.mxu0 %v4189
    %v4191 = vpop.f32.mrf.mxu0
    %v4192 = vadd.f32 %v1408, %v4191
    %v4193 = vand.u32 %v1366, 4294901760
    %v4194 = vsub.f32 %v1366, %v4193
    %v4195 = vand.u32 %v4194, 4294901760
    %v4196 = vsub.f32 %v4194, %v4195
    %v4197 = vand.u32 %v4196, 4294901760
    %4198 = vmatmul.f32.gmra.mxu0 %v4197
    %v4199 = vpop.f32.mrf.mxu0
    %v4200 = vadd.f32 %v1408, %v4199
    %v4201 = vand.u32 %v1367, 4294901760
    %v4202 = vsub.f32 %v1367, %v4201
    %v4203 = vand.u32 %v4202, 4294901760
    %v4204 = vsub.f32 %v4202, %v4203
    %v4205 = vand.u32 %v4204, 4294901760
    %4206 = vmatmul.f32.gmra.mxu0 %v4205
    %v4207 = vpop.f32.mrf.mxu0
    %v4208 = vadd.f32 %v1408, %v4207
    %v4209 = vand.u32 %v1368, 4294901760
    %v4210 = vsub.f32 %v1368, %v4209
    %v4211 = vand.u32 %v4210, 4294901760
    %v4212 = vsub.f32 %v4210, %v4211
    %v4213 = vand.u32 %v4212, 4294901760
    %4214 = vmatmul.f32.gmra.mxu0 %v4213
    %v4215 = vpop.f32.mrf.mxu0
    %v4216 = vadd.f32 %v1408, %v4215
    %v4217 = vand.u32 %v1369, 4294901760
    %v4218 = vsub.f32 %v1369, %v4217
    %v4219 = vand.u32 %v4218, 4294901760
    %v4220 = vsub.f32 %v4218, %v4219
    %v4221 = vand.u32 %v4220, 4294901760
    %4222 = vmatmul.f32.gmra.mxu0 %v4221
    %v4223 = vpop.f32.mrf.mxu0
    %v4224 = vadd.f32 %v1408, %v4223
    %v4225 = vand.u32 %v1370, 4294901760
    %v4226 = vsub.f32 %v1370, %v4225
    %v4227 = vand.u32 %v4226, 4294901760
    %v4228 = vsub.f32 %v4226, %v4227
    %v4229 = vand.u32 %v4228, 4294901760
    %4230 = vmatmul.f32.gmra.mxu0 %v4229
    %v4231 = vpop.f32.mrf.mxu0
    %v4232 = vadd.f32 %v1408, %v4231
    %v4233 = vand.u32 %v1371, 4294901760
    %v4234 = vsub.f32 %v1371, %v4233
    %v4235 = vand.u32 %v4234, 4294901760
    %v4236 = vsub.f32 %v4234, %v4235
    %v4237 = vand.u32 %v4236, 4294901760
    %4238 = vmatmul.f32.gmra.mxu0 %v4237
    %v4239 = vpop.f32.mrf.mxu0
    %v4240 = vadd.f32 %v1408, %v4239
    %v4241 = vand.u32 %v1372, 4294901760
    %v4242 = vsub.f32 %v1372, %v4241
    %v4243 = vand.u32 %v4242, 4294901760
    %v4244 = vsub.f32 %v4242, %v4243
    %v4245 = vand.u32 %v4244, 4294901760
    %4246 = vmatmul.f32.gmra.mxu0 %v4245
    %v4247 = vpop.f32.mrf.mxu0
    %v4248 = vadd.f32 %v1408, %v4247
    %4249 = vdwg.mxu0
    %v4250 = vand.u32 %v1404, 4294901760
    %v4251 = vsub.f32 %v1404, %v4250
    %v4252 = vand.u32 %v4251, 4294901760
    %v4253 = vsub.f32 %v4251, %v4252
    %v4254 = vand.u32 %v4253, 4294901760
    %4255 = vmatpush.msra.mxu0 %v4254
    %v4256 = vand.u32 %v1402, 4294901760
    %v4257 = vsub.f32 %v1402, %v4256
    %v4258 = vand.u32 %v4257, 4294901760
    %v4259 = vsub.f32 %v4257, %v4258
    %v4260 = vand.u32 %v4259, 4294901760
    %4261 = vmatpush.msra.mxu0 %v4260
    %v4262 = vand.u32 %v1400, 4294901760
    %v4263 = vsub.f32 %v1400, %v4262
    %v4264 = vand.u32 %v4263, 4294901760
    %v4265 = vsub.f32 %v4263, %v4264
    %v4266 = vand.u32 %v4265, 4294901760
    %4267 = vmatpush.msra.mxu0 %v4266
    %v4268 = vand.u32 %v1398, 4294901760
    %v4269 = vsub.f32 %v1398, %v4268
    %v4270 = vand.u32 %v4269, 4294901760
    %v4271 = vsub.f32 %v4269, %v4270
    %v4272 = vand.u32 %v4271, 4294901760
    %4273 = vmatpush.msra.mxu0 %v4272
    %v4274 = vand.u32 %v1396, 4294901760
    %v4275 = vsub.f32 %v1396, %v4274
    %v4276 = vand.u32 %v4275, 4294901760
    %v4277 = vsub.f32 %v4275, %v4276
    %v4278 = vand.u32 %v4277, 4294901760
    %4279 = vmatpush.msra.mxu0 %v4278
    %v4280 = vand.u32 %v1394, 4294901760
    %v4281 = vsub.f32 %v1394, %v4280
    %v4282 = vand.u32 %v4281, 4294901760
    %v4283 = vsub.f32 %v4281, %v4282
    %v4284 = vand.u32 %v4283, 4294901760
    %4285 = vmatpush.msra.mxu0 %v4284
    %v4286 = vand.u32 %v1392, 4294901760
    %v4287 = vsub.f32 %v1392, %v4286
    %v4288 = vand.u32 %v4287, 4294901760
    %v4289 = vsub.f32 %v4287, %v4288
    %v4290 = vand.u32 %v4289, 4294901760
    %4291 = vmatpush.msra.mxu0 %v4290
    %v4292 = vand.u32 %v1390, 4294901760
    %v4293 = vsub.f32 %v1390, %v4292
    %v4294 = vand.u32 %v4293, 4294901760
    %v4295 = vsub.f32 %v4293, %v4294
    %v4296 = vand.u32 %v4295, 4294901760
    %4297 = vmatpush.msra.mxu0 %v4296
    %v4298 = vand.u32 %v1388, 4294901760
    %v4299 = vsub.f32 %v1388, %v4298
    %v4300 = vand.u32 %v4299, 4294901760
    %v4301 = vsub.f32 %v4299, %v4300
    %v4302 = vand.u32 %v4301, 4294901760
    %4303 = vmatpush.msra.mxu0 %v4302
    %v4304 = vand.u32 %v1386, 4294901760
    %v4305 = vsub.f32 %v1386, %v4304
    %v4306 = vand.u32 %v4305, 4294901760
    %v4307 = vsub.f32 %v4305, %v4306
    %v4308 = vand.u32 %v4307, 4294901760
    %4309 = vmatpush.msra.mxu0 %v4308
    %v4310 = vand.u32 %v1384, 4294901760
    %v4311 = vsub.f32 %v1384, %v4310
    %v4312 = vand.u32 %v4311, 4294901760
    %v4313 = vsub.f32 %v4311, %v4312
    %v4314 = vand.u32 %v4313, 4294901760
    %4315 = vmatpush.msra.mxu0 %v4314
    %v4316 = vand.u32 %v1382, 4294901760
    %v4317 = vsub.f32 %v1382, %v4316
    %v4318 = vand.u32 %v4317, 4294901760
    %v4319 = vsub.f32 %v4317, %v4318
    %v4320 = vand.u32 %v4319, 4294901760
    %4321 = vmatpush.msra.mxu0 %v4320
    %v4322 = vand.u32 %v1380, 4294901760
    %v4323 = vsub.f32 %v1380, %v4322
    %v4324 = vand.u32 %v4323, 4294901760
    %v4325 = vsub.f32 %v4323, %v4324
    %v4326 = vand.u32 %v4325, 4294901760
    %4327 = vmatpush.msra.mxu0 %v4326
    %v4328 = vand.u32 %v1378, 4294901760
    %v4329 = vsub.f32 %v1378, %v4328
    %v4330 = vand.u32 %v4329, 4294901760
    %v4331 = vsub.f32 %v4329, %v4330
    %v4332 = vand.u32 %v4331, 4294901760
    %4333 = vmatpush.msra.mxu0 %v4332
    %v4334 = vand.u32 %v1376, 4294901760
    %v4335 = vsub.f32 %v1376, %v4334
    %v4336 = vand.u32 %v4335, 4294901760
    %v4337 = vsub.f32 %v4335, %v4336
    %v4338 = vand.u32 %v4337, 4294901760
    %4339 = vmatpush.msra.mxu0 %v4338
    %v4340 = vand.u32 %v1374, 4294901760
    %v4341 = vsub.f32 %v1374, %v4340
    %v4342 = vand.u32 %v4341, 4294901760
    %v4343 = vsub.f32 %v4341, %v4342
    %v4344 = vand.u32 %v4343, 4294901760
    %4345 = vmatpush.msra.mxu0 %v4344
    %v4346 = vand.u32 %v1309, 4294901760
    %4347 = vmatmul.f32.gmra.mxu0 %v4346
    %v4348 = vpop.f32.mrf.mxu0
    %v4349 = vadd.f32 %v3744, %v4348
    %v4350 = vand.u32 %v1310, 4294901760
    %4351 = vmatmul.f32.gmra.mxu0 %v4350
    %v4352 = vpop.f32.mrf.mxu0
    %v4353 = vadd.f32 %v3752, %v4352
    %v4354 = vand.u32 %v1311, 4294901760
    %4355 = vmatmul.f32.gmra.mxu0 %v4354
    %v4356 = vpop.f32.mrf.mxu0
    %v4357 = vadd.f32 %v3760, %v4356
    %v4358 = vand.u32 %v1312, 4294901760
    %4359 = vmatmul.f32.gmra.mxu0 %v4358
    %v4360 = vpop.f32.mrf.mxu0
    %v4361 = vadd.f32 %v3768, %v4360
    %v4362 = vand.u32 %v1313, 4294901760
    %4363 = vmatmul.f32.gmra.mxu0 %v4362
    %v4364 = vpop.f32.mrf.mxu0
    %v4365 = vadd.f32 %v3776, %v4364
    %v4366 = vand.u32 %v1314, 4294901760
    %4367 = vmatmul.f32.gmra.mxu0 %v4366
    %v4368 = vpop.f32.mrf.mxu0
    %v4369 = vadd.f32 %v3784, %v4368
    %v4370 = vand.u32 %v1315, 4294901760
    %4371 = vmatmul.f32.gmra.mxu0 %v4370
    %v4372 = vpop.f32.mrf.mxu0
    %v4373 = vadd.f32 %v3792, %v4372
    %v4374 = vand.u32 %v1316, 4294901760
    %4375 = vmatmul.f32.gmra.mxu0 %v4374
    %v4376 = vpop.f32.mrf.mxu0
    %v4377 = vadd.f32 %v3800, %v4376
    %v4378 = vand.u32 %v1317, 4294901760
    %4379 = vmatmul.f32.gmra.mxu0 %v4378
    %v4380 = vpop.f32.mrf.mxu0
    %v4381 = vadd.f32 %v3808, %v4380
    %v4382 = vand.u32 %v1318, 4294901760
    %4383 = vmatmul.f32.gmra.mxu0 %v4382
    %v4384 = vpop.f32.mrf.mxu0
    %v4385 = vadd.f32 %v3816, %v4384
    %v4386 = vand.u32 %v1319, 4294901760
    %4387 = vmatmul.f32.gmra.mxu0 %v4386
    %v4388 = vpop.f32.mrf.mxu0
    %v4389 = vadd.f32 %v3824, %v4388
    %v4390 = vand.u32 %v1320, 4294901760
    %4391 = vmatmul.f32.gmra.mxu0 %v4390
    %v4392 = vpop.f32.mrf.mxu0
    %v4393 = vadd.f32 %v3832, %v4392
    %v4394 = vand.u32 %v1321, 4294901760
    %4395 = vmatmul.f32.gmra.mxu0 %v4394
    %v4396 = vpop.f32.mrf.mxu0
    %v4397 = vadd.f32 %v3840, %v4396
    %v4398 = vand.u32 %v1322, 4294901760
    %4399 = vmatmul.f32.gmra.mxu0 %v4398
    %v4400 = vpop.f32.mrf.mxu0
    %v4401 = vadd.f32 %v3848, %v4400
    %v4402 = vand.u32 %v1323, 4294901760
    %4403 = vmatmul.f32.gmra.mxu0 %v4402
    %v4404 = vpop.f32.mrf.mxu0
    %v4405 = vadd.f32 %v3856, %v4404
    %v4406 = vand.u32 %v1324, 4294901760
    %4407 = vmatmul.f32.gmra.mxu0 %v4406
    %v4408 = vpop.f32.mrf.mxu0
    %v4409 = vadd.f32 %v3864, %v4408
    %v4410 = vand.u32 %v1325, 4294901760
    %4411 = vmatmul.f32.gmra.mxu0 %v4410
    %v4412 = vpop.f32.mrf.mxu0
    %v4413 = vadd.f32 %v3872, %v4412
    %v4414 = vand.u32 %v1326, 4294901760
    %4415 = vmatmul.f32.gmra.mxu0 %v4414
    %v4416 = vpop.f32.mrf.mxu0
    %v4417 = vadd.f32 %v3880, %v4416
    %v4418 = vand.u32 %v1327, 4294901760
    %4419 = vmatmul.f32.gmra.mxu0 %v4418
    %v4420 = vpop.f32.mrf.mxu0
    %v4421 = vadd.f32 %v3888, %v4420
    %v4422 = vand.u32 %v1328, 4294901760
    %4423 = vmatmul.f32.gmra.mxu0 %v4422
    %v4424 = vpop.f32.mrf.mxu0
    %v4425 = vadd.f32 %v3896, %v4424
    %v4426 = vand.u32 %v1329, 4294901760
    %4427 = vmatmul.f32.gmra.mxu0 %v4426
    %v4428 = vpop.f32.mrf.mxu0
    %v4429 = vadd.f32 %v3904, %v4428
    %v4430 = vand.u32 %v1330, 4294901760
    %4431 = vmatmul.f32.gmra.mxu0 %v4430
    %v4432 = vpop.f32.mrf.mxu0
    %v4433 = vadd.f32 %v3912, %v4432
    %v4434 = vand.u32 %v1331, 4294901760
    %4435 = vmatmul.f32.gmra.mxu0 %v4434
    %v4436 = vpop.f32.mrf.mxu0
    %v4437 = vadd.f32 %v3920, %v4436
    %v4438 = vand.u32 %v1332, 4294901760
    %4439 = vmatmul.f32.gmra.mxu0 %v4438
    %v4440 = vpop.f32.mrf.mxu0
    %v4441 = vadd.f32 %v3928, %v4440
    %v4442 = vand.u32 %v1333, 4294901760
    %4443 = vmatmul.f32.gmra.mxu0 %v4442
    %v4444 = vpop.f32.mrf.mxu0
    %v4445 = vadd.f32 %v3936, %v4444
    %v4446 = vand.u32 %v1334, 4294901760
    %4447 = vmatmul.f32.gmra.mxu0 %v4446
    %v4448 = vpop.f32.mrf.mxu0
    %v4449 = vadd.f32 %v3944, %v4448
    %v4450 = vand.u32 %v1335, 4294901760
    %4451 = vmatmul.f32.gmra.mxu0 %v4450
    %v4452 = vpop.f32.mrf.mxu0
    %v4453 = vadd.f32 %v3952, %v4452
    %v4454 = vand.u32 %v1336, 4294901760
    %4455 = vmatmul.f32.gmra.mxu0 %v4454
    %v4456 = vpop.f32.mrf.mxu0
    %v4457 = vadd.f32 %v3960, %v4456
    %v4458 = vand.u32 %v1337, 4294901760
    %4459 = vmatmul.f32.gmra.mxu0 %v4458
    %v4460 = vpop.f32.mrf.mxu0
    %v4461 = vadd.f32 %v3968, %v4460
    %v4462 = vand.u32 %v1338, 4294901760
    %4463 = vmatmul.f32.gmra.mxu0 %v4462
    %v4464 = vpop.f32.mrf.mxu0
    %v4465 = vadd.f32 %v3976, %v4464
    %v4466 = vand.u32 %v1339, 4294901760
    %4467 = vmatmul.f32.gmra.mxu0 %v4466
    %v4468 = vpop.f32.mrf.mxu0
    %v4469 = vadd.f32 %v3984, %v4468
    %v4470 = vand.u32 %v1340, 4294901760
    %4471 = vmatmul.f32.gmra.mxu0 %v4470
    %v4472 = vpop.f32.mrf.mxu0
    %v4473 = vadd.f32 %v3992, %v4472
    %v4474 = vand.u32 %v1341, 4294901760
    %4475 = vmatmul.f32.gmra.mxu0 %v4474
    %v4476 = vpop.f32.mrf.mxu0
    %v4477 = vadd.f32 %v4000, %v4476
    %v4478 = vand.u32 %v1342, 4294901760
    %4479 = vmatmul.f32.gmra.mxu0 %v4478
    %v4480 = vpop.f32.mrf.mxu0
    %v4481 = vadd.f32 %v4008, %v4480
    %v4482 = vand.u32 %v1343, 4294901760
    %4483 = vmatmul.f32.gmra.mxu0 %v4482
    %v4484 = vpop.f32.mrf.mxu0
    %v4485 = vadd.f32 %v4016, %v4484
    %v4486 = vand.u32 %v1344, 4294901760
    %4487 = vmatmul.f32.gmra.mxu0 %v4486
    %v4488 = vpop.f32.mrf.mxu0
    %v4489 = vadd.f32 %v4024, %v4488
    %v4490 = vand.u32 %v1345, 4294901760
    %4491 = vmatmul.f32.gmra.mxu0 %v4490
    %v4492 = vpop.f32.mrf.mxu0
    %v4493 = vadd.f32 %v4032, %v4492
    %v4494 = vand.u32 %v1346, 4294901760
    %4495 = vmatmul.f32.gmra.mxu0 %v4494
    %v4496 = vpop.f32.mrf.mxu0
    %v4497 = vadd.f32 %v4040, %v4496
    %v4498 = vand.u32 %v1347, 4294901760
    %4499 = vmatmul.f32.gmra.mxu0 %v4498
    %v4500 = vpop.f32.mrf.mxu0
    %v4501 = vadd.f32 %v4048, %v4500
    %v4502 = vand.u32 %v1348, 4294901760
    %4503 = vmatmul.f32.gmra.mxu0 %v4502
    %v4504 = vpop.f32.mrf.mxu0
    %v4505 = vadd.f32 %v4056, %v4504
    %v4506 = vand.u32 %v1349, 4294901760
    %4507 = vmatmul.f32.gmra.mxu0 %v4506
    %v4508 = vpop.f32.mrf.mxu0
    %v4509 = vadd.f32 %v4064, %v4508
    %v4510 = vand.u32 %v1350, 4294901760
    %4511 = vmatmul.f32.gmra.mxu0 %v4510
    %v4512 = vpop.f32.mrf.mxu0
    %v4513 = vadd.f32 %v4072, %v4512
    %v4514 = vand.u32 %v1351, 4294901760
    %4515 = vmatmul.f32.gmra.mxu0 %v4514
    %v4516 = vpop.f32.mrf.mxu0
    %v4517 = vadd.f32 %v4080, %v4516
    %v4518 = vand.u32 %v1352, 4294901760
    %4519 = vmatmul.f32.gmra.mxu0 %v4518
    %v4520 = vpop.f32.mrf.mxu0
    %v4521 = vadd.f32 %v4088, %v4520
    %v4522 = vand.u32 %v1353, 4294901760
    %4523 = vmatmul.f32.gmra.mxu0 %v4522
    %v4524 = vpop.f32.mrf.mxu0
    %v4525 = vadd.f32 %v4096, %v4524
    %v4526 = vand.u32 %v1354, 4294901760
    %4527 = vmatmul.f32.gmra.mxu0 %v4526
    %v4528 = vpop.f32.mrf.mxu0
    %v4529 = vadd.f32 %v4104, %v4528
    %v4530 = vand.u32 %v1355, 4294901760
    %4531 = vmatmul.f32.gmra.mxu0 %v4530
    %v4532 = vpop.f32.mrf.mxu0
    %v4533 = vadd.f32 %v4112, %v4532
    %v4534 = vand.u32 %v1356, 4294901760
    %4535 = vmatmul.f32.gmra.mxu0 %v4534
    %v4536 = vpop.f32.mrf.mxu0
    %v4537 = vadd.f32 %v4120, %v4536
    %v4538 = vand.u32 %v1357, 4294901760
    %4539 = vmatmul.f32.gmra.mxu0 %v4538
    %v4540 = vpop.f32.mrf.mxu0
    %v4541 = vadd.f32 %v4128, %v4540
    %v4542 = vand.u32 %v1358, 4294901760
    %4543 = vmatmul.f32.gmra.mxu0 %v4542
    %v4544 = vpop.f32.mrf.mxu0
    %v4545 = vadd.f32 %v4136, %v4544
    %v4546 = vand.u32 %v1359, 4294901760
    %4547 = vmatmul.f32.gmra.mxu0 %v4546
    %v4548 = vpop.f32.mrf.mxu0
    %v4549 = vadd.f32 %v4144, %v4548
    %v4550 = vand.u32 %v1360, 4294901760
    %4551 = vmatmul.f32.gmra.mxu0 %v4550
    %v4552 = vpop.f32.mrf.mxu0
    %v4553 = vadd.f32 %v4152, %v4552
    %v4554 = vand.u32 %v1361, 4294901760
    %4555 = vmatmul.f32.gmra.mxu0 %v4554
    %v4556 = vpop.f32.mrf.mxu0
    %v4557 = vadd.f32 %v4160, %v4556
    %v4558 = vand.u32 %v1362, 4294901760
    %4559 = vmatmul.f32.gmra.mxu0 %v4558
    %v4560 = vpop.f32.mrf.mxu0
    %v4561 = vadd.f32 %v4168, %v4560
    %v4562 = vand.u32 %v1363, 4294901760
    %4563 = vmatmul.f32.gmra.mxu0 %v4562
    %v4564 = vpop.f32.mrf.mxu0
    %v4565 = vadd.f32 %v4176, %v4564
    %v4566 = vand.u32 %v1364, 4294901760
    %4567 = vmatmul.f32.gmra.mxu0 %v4566
    %v4568 = vpop.f32.mrf.mxu0
    %v4569 = vadd.f32 %v4184, %v4568
    %v4570 = vand.u32 %v1365, 4294901760
    %4571 = vmatmul.f32.gmra.mxu0 %v4570
    %v4572 = vpop.f32.mrf.mxu0
    %v4573 = vadd.f32 %v4192, %v4572
    %v4574 = vand.u32 %v1366, 4294901760
    %4575 = vmatmul.f32.gmra.mxu0 %v4574
    %v4576 = vpop.f32.mrf.mxu0
    %v4577 = vadd.f32 %v4200, %v4576
    %v4578 = vand.u32 %v1367, 4294901760
    %4579 = vmatmul.f32.gmra.mxu0 %v4578
    %v4580 = vpop.f32.mrf.mxu0
    %v4581 = vadd.f32 %v4208, %v4580
    %v4582 = vand.u32 %v1368, 4294901760
    %4583 = vmatmul.f32.gmra.mxu0 %v4582
    %v4584 = vpop.f32.mrf.mxu0
    %v4585 = vadd.f32 %v4216, %v4584
    %v4586 = vand.u32 %v1369, 4294901760
    %4587 = vmatmul.f32.gmra.mxu0 %v4586
    %v4588 = vpop.f32.mrf.mxu0
    %v4589 = vadd.f32 %v4224, %v4588
    %v4590 = vand.u32 %v1370, 4294901760
    %4591 = vmatmul.f32.gmra.mxu0 %v4590
    %v4592 = vpop.f32.mrf.mxu0
    %v4593 = vadd.f32 %v4232, %v4592
    %v4594 = vand.u32 %v1371, 4294901760
    %4595 = vmatmul.f32.gmra.mxu0 %v4594
    %v4596 = vpop.f32.mrf.mxu0
    %v4597 = vadd.f32 %v4240, %v4596
    %v4598 = vand.u32 %v1372, 4294901760
    %4599 = vmatmul.f32.gmra.mxu0 %v4598
    %v4600 = vpop.f32.mrf.mxu0
    %v4601 = vadd.f32 %v4248, %v4600
    %4602 = vdwg.mxu0
    %v4603 = vand.u32 %v1404, 4294901760
    %v4604 = vsub.f32 %v1404, %v4603
    %4605 = vmatpush.msra.mxu0 %v4604
    %v4606 = vand.u32 %v1402, 4294901760
    %v4607 = vsub.f32 %v1402, %v4606
    %4608 = vmatpush.msra.mxu0 %v4607
    %v4609 = vand.u32 %v1400, 4294901760
    %v4610 = vsub.f32 %v1400, %v4609
    %4611 = vmatpush.msra.mxu0 %v4610
    %v4612 = vand.u32 %v1398, 4294901760
    %v4613 = vsub.f32 %v1398, %v4612
    %4614 = vmatpush.msra.mxu0 %v4613
    %v4615 = vand.u32 %v1396, 4294901760
    %v4616 = vsub.f32 %v1396, %v4615
    %4617 = vmatpush.msra.mxu0 %v4616
    %v4618 = vand.u32 %v1394, 4294901760
    %v4619 = vsub.f32 %v1394, %v4618
    %4620 = vmatpush.msra.mxu0 %v4619
    %v4621 = vand.u32 %v1392, 4294901760
    %v4622 = vsub.f32 %v1392, %v4621
    %4623 = vmatpush.msra.mxu0 %v4622
    %v4624 = vand.u32 %v1390, 4294901760
    %v4625 = vsub.f32 %v1390, %v4624
    %4626 = vmatpush.msra.mxu0 %v4625
    %v4627 = vand.u32 %v1388, 4294901760
    %v4628 = vsub.f32 %v1388, %v4627
    %4629 = vmatpush.msra.mxu0 %v4628
    %v4630 = vand.u32 %v1386, 4294901760
    %v4631 = vsub.f32 %v1386, %v4630
    %4632 = vmatpush.msra.mxu0 %v4631
    %v4633 = vand.u32 %v1384, 4294901760
    %v4634 = vsub.f32 %v1384, %v4633
    %4635 = vmatpush.msra.mxu0 %v4634
    %v4636 = vand.u32 %v1382, 4294901760
    %v4637 = vsub.f32 %v1382, %v4636
    %4638 = vmatpush.msra.mxu0 %v4637
    %v4639 = vand.u32 %v1380, 4294901760
    %v4640 = vsub.f32 %v1380, %v4639
    %4641 = vmatpush.msra.mxu0 %v4640
    %v4642 = vand.u32 %v1378, 4294901760
    %v4643 = vsub.f32 %v1378, %v4642
    %4644 = vmatpush.msra.mxu0 %v4643
    %v4645 = vand.u32 %v1376, 4294901760
    %v4646 = vsub.f32 %v1376, %v4645
    %4647 = vmatpush.msra.mxu0 %v4646
    %v4648 = vand.u32 %v1374, 4294901760
    %v4649 = vsub.f32 %v1374, %v4648
    %4650 = vmatpush.msra.mxu0 %v4649
    %v4651 = vand.u32 %v1309, 4294901760
    %v4652 = vsub.f32 %v1309, %v4651
    %4653 = vmatmul.f32.gmra.mxu0 %v4652
    %v4654 = vpop.f32.mrf.mxu0
    %v4655 = vadd.f32 %v4349, %v4654
    %v4656 = vand.u32 %v1310, 4294901760
    %v4657 = vsub.f32 %v1310, %v4656
    %4658 = vmatmul.f32.gmra.mxu0 %v4657
    %v4659 = vpop.f32.mrf.mxu0
    %v4660 = vadd.f32 %v4353, %v4659
    %v4661 = vand.u32 %v1311, 4294901760
    %v4662 = vsub.f32 %v1311, %v4661
    %4663 = vmatmul.f32.gmra.mxu0 %v4662
    %v4664 = vpop.f32.mrf.mxu0
    %v4665 = vadd.f32 %v4357, %v4664
    %v4666 = vand.u32 %v1312, 4294901760
    %v4667 = vsub.f32 %v1312, %v4666
    %4668 = vmatmul.f32.gmra.mxu0 %v4667
    %v4669 = vpop.f32.mrf.mxu0
    %v4670 = vadd.f32 %v4361, %v4669
    %v4671 = vand.u32 %v1313, 4294901760
    %v4672 = vsub.f32 %v1313, %v4671
    %4673 = vmatmul.f32.gmra.mxu0 %v4672
    %v4674 = vpop.f32.mrf.mxu0
    %v4675 = vadd.f32 %v4365, %v4674
    %v4676 = vand.u32 %v1314, 4294901760
    %v4677 = vsub.f32 %v1314, %v4676
    %4678 = vmatmul.f32.gmra.mxu0 %v4677
    %v4679 = vpop.f32.mrf.mxu0
    %v4680 = vadd.f32 %v4369, %v4679
    %v4681 = vand.u32 %v1315, 4294901760
    %v4682 = vsub.f32 %v1315, %v4681
    %4683 = vmatmul.f32.gmra.mxu0 %v4682
    %v4684 = vpop.f32.mrf.mxu0
    %v4685 = vadd.f32 %v4373, %v4684
    %v4686 = vand.u32 %v1316, 4294901760
    %v4687 = vsub.f32 %v1316, %v4686
    %4688 = vmatmul.f32.gmra.mxu0 %v4687
    %v4689 = vpop.f32.mrf.mxu0
    %v4690 = vadd.f32 %v4377, %v4689
    %v4691 = vand.u32 %v1317, 4294901760
    %v4692 = vsub.f32 %v1317, %v4691
    %4693 = vmatmul.f32.gmra.mxu0 %v4692
    %v4694 = vpop.f32.mrf.mxu0
    %v4695 = vadd.f32 %v4381, %v4694
    %v4696 = vand.u32 %v1318, 4294901760
    %v4697 = vsub.f32 %v1318, %v4696
    %4698 = vmatmul.f32.gmra.mxu0 %v4697
    %v4699 = vpop.f32.mrf.mxu0
    %v4700 = vadd.f32 %v4385, %v4699
    %v4701 = vand.u32 %v1319, 4294901760
    %v4702 = vsub.f32 %v1319, %v4701
    %4703 = vmatmul.f32.gmra.mxu0 %v4702
    %v4704 = vpop.f32.mrf.mxu0
    %v4705 = vadd.f32 %v4389, %v4704
    %v4706 = vand.u32 %v1320, 4294901760
    %v4707 = vsub.f32 %v1320, %v4706
    %4708 = vmatmul.f32.gmra.mxu0 %v4707
    %v4709 = vpop.f32.mrf.mxu0
    %v4710 = vadd.f32 %v4393, %v4709
    %v4711 = vand.u32 %v1321, 4294901760
    %v4712 = vsub.f32 %v1321, %v4711
    %4713 = vmatmul.f32.gmra.mxu0 %v4712
    %v4714 = vpop.f32.mrf.mxu0
    %v4715 = vadd.f32 %v4397, %v4714
    %v4716 = vand.u32 %v1322, 4294901760
    %v4717 = vsub.f32 %v1322, %v4716
    %4718 = vmatmul.f32.gmra.mxu0 %v4717
    %v4719 = vpop.f32.mrf.mxu0
    %v4720 = vadd.f32 %v4401, %v4719
    %v4721 = vand.u32 %v1323, 4294901760
    %v4722 = vsub.f32 %v1323, %v4721
    %4723 = vmatmul.f32.gmra.mxu0 %v4722
    %v4724 = vpop.f32.mrf.mxu0
    %v4725 = vadd.f32 %v4405, %v4724
    %v4726 = vand.u32 %v1324, 4294901760
    %v4727 = vsub.f32 %v1324, %v4726
    %4728 = vmatmul.f32.gmra.mxu0 %v4727
    %v4729 = vpop.f32.mrf.mxu0
    %v4730 = vadd.f32 %v4409, %v4729
    %v4731 = vand.u32 %v1325, 4294901760
    %v4732 = vsub.f32 %v1325, %v4731
    %4733 = vmatmul.f32.gmra.mxu0 %v4732
    %v4734 = vpop.f32.mrf.mxu0
    %v4735 = vadd.f32 %v4413, %v4734
    %v4736 = vand.u32 %v1326, 4294901760
    %v4737 = vsub.f32 %v1326, %v4736
    %4738 = vmatmul.f32.gmra.mxu0 %v4737
    %v4739 = vpop.f32.mrf.mxu0
    %v4740 = vadd.f32 %v4417, %v4739
    %v4741 = vand.u32 %v1327, 4294901760
    %v4742 = vsub.f32 %v1327, %v4741
    %4743 = vmatmul.f32.gmra.mxu0 %v4742
    %v4744 = vpop.f32.mrf.mxu0
    %v4745 = vadd.f32 %v4421, %v4744
    %v4746 = vand.u32 %v1328, 4294901760
    %v4747 = vsub.f32 %v1328, %v4746
    %4748 = vmatmul.f32.gmra.mxu0 %v4747
    %v4749 = vpop.f32.mrf.mxu0
    %v4750 = vadd.f32 %v4425, %v4749
    %v4751 = vand.u32 %v1329, 4294901760
    %v4752 = vsub.f32 %v1329, %v4751
    %4753 = vmatmul.f32.gmra.mxu0 %v4752
    %v4754 = vpop.f32.mrf.mxu0
    %v4755 = vadd.f32 %v4429, %v4754
    %v4756 = vand.u32 %v1330, 4294901760
    %v4757 = vsub.f32 %v1330, %v4756
    %4758 = vmatmul.f32.gmra.mxu0 %v4757
    %v4759 = vpop.f32.mrf.mxu0
    %v4760 = vadd.f32 %v4433, %v4759
    %v4761 = vand.u32 %v1331, 4294901760
    %v4762 = vsub.f32 %v1331, %v4761
    %4763 = vmatmul.f32.gmra.mxu0 %v4762
    %v4764 = vpop.f32.mrf.mxu0
    %v4765 = vadd.f32 %v4437, %v4764
    %v4766 = vand.u32 %v1332, 4294901760
    %v4767 = vsub.f32 %v1332, %v4766
    %4768 = vmatmul.f32.gmra.mxu0 %v4767
    %v4769 = vpop.f32.mrf.mxu0
    %v4770 = vadd.f32 %v4441, %v4769
    %v4771 = vand.u32 %v1333, 4294901760
    %v4772 = vsub.f32 %v1333, %v4771
    %4773 = vmatmul.f32.gmra.mxu0 %v4772
    %v4774 = vpop.f32.mrf.mxu0
    %v4775 = vadd.f32 %v4445, %v4774
    %v4776 = vand.u32 %v1334, 4294901760
    %v4777 = vsub.f32 %v1334, %v4776
    %4778 = vmatmul.f32.gmra.mxu0 %v4777
    %v4779 = vpop.f32.mrf.mxu0
    %v4780 = vadd.f32 %v4449, %v4779
    %v4781 = vand.u32 %v1335, 4294901760
    %v4782 = vsub.f32 %v1335, %v4781
    %4783 = vmatmul.f32.gmra.mxu0 %v4782
    %v4784 = vpop.f32.mrf.mxu0
    %v4785 = vadd.f32 %v4453, %v4784
    %v4786 = vand.u32 %v1336, 4294901760
    %v4787 = vsub.f32 %v1336, %v4786
    %4788 = vmatmul.f32.gmra.mxu0 %v4787
    %v4789 = vpop.f32.mrf.mxu0
    %v4790 = vadd.f32 %v4457, %v4789
    %v4791 = vand.u32 %v1337, 4294901760
    %v4792 = vsub.f32 %v1337, %v4791
    %4793 = vmatmul.f32.gmra.mxu0 %v4792
    %v4794 = vpop.f32.mrf.mxu0
    %v4795 = vadd.f32 %v4461, %v4794
    %v4796 = vand.u32 %v1338, 4294901760
    %v4797 = vsub.f32 %v1338, %v4796
    %4798 = vmatmul.f32.gmra.mxu0 %v4797
    %v4799 = vpop.f32.mrf.mxu0
    %v4800 = vadd.f32 %v4465, %v4799
    %v4801 = vand.u32 %v1339, 4294901760
    %v4802 = vsub.f32 %v1339, %v4801
    %4803 = vmatmul.f32.gmra.mxu0 %v4802
    %v4804 = vpop.f32.mrf.mxu0
    %v4805 = vadd.f32 %v4469, %v4804
    %v4806 = vand.u32 %v1340, 4294901760
    %v4807 = vsub.f32 %v1340, %v4806
    %4808 = vmatmul.f32.gmra.mxu0 %v4807
    %v4809 = vpop.f32.mrf.mxu0
    %v4810 = vadd.f32 %v4473, %v4809
    %v4811 = vand.u32 %v1341, 4294901760
    %v4812 = vsub.f32 %v1341, %v4811
    %4813 = vmatmul.f32.gmra.mxu0 %v4812
    %v4814 = vpop.f32.mrf.mxu0
    %v4815 = vadd.f32 %v4477, %v4814
    %v4816 = vand.u32 %v1342, 4294901760
    %v4817 = vsub.f32 %v1342, %v4816
    %4818 = vmatmul.f32.gmra.mxu0 %v4817
    %v4819 = vpop.f32.mrf.mxu0
    %v4820 = vadd.f32 %v4481, %v4819
    %v4821 = vand.u32 %v1343, 4294901760
    %v4822 = vsub.f32 %v1343, %v4821
    %4823 = vmatmul.f32.gmra.mxu0 %v4822
    %v4824 = vpop.f32.mrf.mxu0
    %v4825 = vadd.f32 %v4485, %v4824
    %v4826 = vand.u32 %v1344, 4294901760
    %v4827 = vsub.f32 %v1344, %v4826
    %4828 = vmatmul.f32.gmra.mxu0 %v4827
    %v4829 = vpop.f32.mrf.mxu0
    %v4830 = vadd.f32 %v4489, %v4829
    %v4831 = vand.u32 %v1345, 4294901760
    %v4832 = vsub.f32 %v1345, %v4831
    %4833 = vmatmul.f32.gmra.mxu0 %v4832
    %v4834 = vpop.f32.mrf.mxu0
    %v4835 = vadd.f32 %v4493, %v4834
    %v4836 = vand.u32 %v1346, 4294901760
    %v4837 = vsub.f32 %v1346, %v4836
    %4838 = vmatmul.f32.gmra.mxu0 %v4837
    %v4839 = vpop.f32.mrf.mxu0
    %v4840 = vadd.f32 %v4497, %v4839
    %v4841 = vand.u32 %v1347, 4294901760
    %v4842 = vsub.f32 %v1347, %v4841
    %4843 = vmatmul.f32.gmra.mxu0 %v4842
    %v4844 = vpop.f32.mrf.mxu0
    %v4845 = vadd.f32 %v4501, %v4844
    %v4846 = vand.u32 %v1348, 4294901760
    %v4847 = vsub.f32 %v1348, %v4846
    %4848 = vmatmul.f32.gmra.mxu0 %v4847
    %v4849 = vpop.f32.mrf.mxu0
    %v4850 = vadd.f32 %v4505, %v4849
    %v4851 = vand.u32 %v1349, 4294901760
    %v4852 = vsub.f32 %v1349, %v4851
    %4853 = vmatmul.f32.gmra.mxu0 %v4852
    %v4854 = vpop.f32.mrf.mxu0
    %v4855 = vadd.f32 %v4509, %v4854
    %v4856 = vand.u32 %v1350, 4294901760
    %v4857 = vsub.f32 %v1350, %v4856
    %4858 = vmatmul.f32.gmra.mxu0 %v4857
    %v4859 = vpop.f32.mrf.mxu0
    %v4860 = vadd.f32 %v4513, %v4859
    %v4861 = vand.u32 %v1351, 4294901760
    %v4862 = vsub.f32 %v1351, %v4861
    %4863 = vmatmul.f32.gmra.mxu0 %v4862
    %v4864 = vpop.f32.mrf.mxu0
    %v4865 = vadd.f32 %v4517, %v4864
    %v4866 = vand.u32 %v1352, 4294901760
    %v4867 = vsub.f32 %v1352, %v4866
    %4868 = vmatmul.f32.gmra.mxu0 %v4867
    %v4869 = vpop.f32.mrf.mxu0
    %v4870 = vadd.f32 %v4521, %v4869
    %v4871 = vand.u32 %v1353, 4294901760
    %v4872 = vsub.f32 %v1353, %v4871
    %4873 = vmatmul.f32.gmra.mxu0 %v4872
    %v4874 = vpop.f32.mrf.mxu0
    %v4875 = vadd.f32 %v4525, %v4874
    %v4876 = vand.u32 %v1354, 4294901760
    %v4877 = vsub.f32 %v1354, %v4876
    %4878 = vmatmul.f32.gmra.mxu0 %v4877
    %v4879 = vpop.f32.mrf.mxu0
    %v4880 = vadd.f32 %v4529, %v4879
    %v4881 = vand.u32 %v1355, 4294901760
    %v4882 = vsub.f32 %v1355, %v4881
    %4883 = vmatmul.f32.gmra.mxu0 %v4882
    %v4884 = vpop.f32.mrf.mxu0
    %v4885 = vadd.f32 %v4533, %v4884
    %v4886 = vand.u32 %v1356, 4294901760
    %v4887 = vsub.f32 %v1356, %v4886
    %4888 = vmatmul.f32.gmra.mxu0 %v4887
    %v4889 = vpop.f32.mrf.mxu0
    %v4890 = vadd.f32 %v4537, %v4889
    %v4891 = vand.u32 %v1357, 4294901760
    %v4892 = vsub.f32 %v1357, %v4891
    %4893 = vmatmul.f32.gmra.mxu0 %v4892
    %v4894 = vpop.f32.mrf.mxu0
    %v4895 = vadd.f32 %v4541, %v4894
    %v4896 = vand.u32 %v1358, 4294901760
    %v4897 = vsub.f32 %v1358, %v4896
    %4898 = vmatmul.f32.gmra.mxu0 %v4897
    %v4899 = vpop.f32.mrf.mxu0
    %v4900 = vadd.f32 %v4545, %v4899
    %v4901 = vand.u32 %v1359, 4294901760
    %v4902 = vsub.f32 %v1359, %v4901
    %4903 = vmatmul.f32.gmra.mxu0 %v4902
    %v4904 = vpop.f32.mrf.mxu0
    %v4905 = vadd.f32 %v4549, %v4904
    %v4906 = vand.u32 %v1360, 4294901760
    %v4907 = vsub.f32 %v1360, %v4906
    %4908 = vmatmul.f32.gmra.mxu0 %v4907
    %v4909 = vpop.f32.mrf.mxu0
    %v4910 = vadd.f32 %v4553, %v4909
    %v4911 = vand.u32 %v1361, 4294901760
    %v4912 = vsub.f32 %v1361, %v4911
    %4913 = vmatmul.f32.gmra.mxu0 %v4912
    %v4914 = vpop.f32.mrf.mxu0
    %v4915 = vadd.f32 %v4557, %v4914
    %v4916 = vand.u32 %v1362, 4294901760
    %v4917 = vsub.f32 %v1362, %v4916
    %4918 = vmatmul.f32.gmra.mxu0 %v4917
    %v4919 = vpop.f32.mrf.mxu0
    %v4920 = vadd.f32 %v4561, %v4919
    %v4921 = vand.u32 %v1363, 4294901760
    %v4922 = vsub.f32 %v1363, %v4921
    %4923 = vmatmul.f32.gmra.mxu0 %v4922
    %v4924 = vpop.f32.mrf.mxu0
    %v4925 = vadd.f32 %v4565, %v4924
    %v4926 = vand.u32 %v1364, 4294901760
    %v4927 = vsub.f32 %v1364, %v4926
    %4928 = vmatmul.f32.gmra.mxu0 %v4927
    %v4929 = vpop.f32.mrf.mxu0
    %v4930 = vadd.f32 %v4569, %v4929
    %v4931 = vand.u32 %v1365, 4294901760
    %v4932 = vsub.f32 %v1365, %v4931
    %4933 = vmatmul.f32.gmra.mxu0 %v4932
    %v4934 = vpop.f32.mrf.mxu0
    %v4935 = vadd.f32 %v4573, %v4934
    %v4936 = vand.u32 %v1366, 4294901760
    %v4937 = vsub.f32 %v1366, %v4936
    %4938 = vmatmul.f32.gmra.mxu0 %v4937
    %v4939 = vpop.f32.mrf.mxu0
    %v4940 = vadd.f32 %v4577, %v4939
    %v4941 = vand.u32 %v1367, 4294901760
    %v4942 = vsub.f32 %v1367, %v4941
    %4943 = vmatmul.f32.gmra.mxu0 %v4942
    %v4944 = vpop.f32.mrf.mxu0
    %v4945 = vadd.f32 %v4581, %v4944
    %v4946 = vand.u32 %v1368, 4294901760
    %v4947 = vsub.f32 %v1368, %v4946
    %4948 = vmatmul.f32.gmra.mxu0 %v4947
    %v4949 = vpop.f32.mrf.mxu0
    %v4950 = vadd.f32 %v4585, %v4949
    %v4951 = vand.u32 %v1369, 4294901760
    %v4952 = vsub.f32 %v1369, %v4951
    %4953 = vmatmul.f32.gmra.mxu0 %v4952
    %v4954 = vpop.f32.mrf.mxu0
    %v4955 = vadd.f32 %v4589, %v4954
    %v4956 = vand.u32 %v1370, 4294901760
    %v4957 = vsub.f32 %v1370, %v4956
    %4958 = vmatmul.f32.gmra.mxu0 %v4957
    %v4959 = vpop.f32.mrf.mxu0
    %v4960 = vadd.f32 %v4593, %v4959
    %v4961 = vand.u32 %v1371, 4294901760
    %v4962 = vsub.f32 %v1371, %v4961
    %4963 = vmatmul.f32.gmra.mxu0 %v4962
    %v4964 = vpop.f32.mrf.mxu0
    %v4965 = vadd.f32 %v4597, %v4964
    %v4966 = vand.u32 %v1372, 4294901760
    %v4967 = vsub.f32 %v1372, %v4966
    %4968 = vmatmul.f32.gmra.mxu0 %v4967
    %v4969 = vpop.f32.mrf.mxu0
    %v4970 = vadd.f32 %v4601, %v4969
    %4971 = vdwg.mxu0
    %v4972 = vand.u32 %v1404, 4294901760
    %4973 = vmatpush.msra.mxu0 %v4972
    %v4974 = vand.u32 %v1402, 4294901760
    %4975 = vmatpush.msra.mxu0 %v4974
    %v4976 = vand.u32 %v1400, 4294901760
    %4977 = vmatpush.msra.mxu0 %v4976
    %v4978 = vand.u32 %v1398, 4294901760
    %4979 = vmatpush.msra.mxu0 %v4978
    %v4980 = vand.u32 %v1396, 4294901760
    %4981 = vmatpush.msra.mxu0 %v4980
    %v4982 = vand.u32 %v1394, 4294901760
    %4983 = vmatpush.msra.mxu0 %v4982
    %v4984 = vand.u32 %v1392, 4294901760
    %4985 = vmatpush.msra.mxu0 %v4984
    %v4986 = vand.u32 %v1390, 4294901760
    %4987 = vmatpush.msra.mxu0 %v4986
    %v4988 = vand.u32 %v1388, 4294901760
    %4989 = vmatpush.msra.mxu0 %v4988
    %v4990 = vand.u32 %v1386, 4294901760
    %4991 = vmatpush.msra.mxu0 %v4990
    %v4992 = vand.u32 %v1384, 4294901760
    %4993 = vmatpush.msra.mxu0 %v4992
    %v4994 = vand.u32 %v1382, 4294901760
    %4995 = vmatpush.msra.mxu0 %v4994
    %v4996 = vand.u32 %v1380, 4294901760
    %4997 = vmatpush.msra.mxu0 %v4996
    %v4998 = vand.u32 %v1378, 4294901760
    %4999 = vmatpush.msra.mxu0 %v4998
    %v5000 = vand.u32 %v1376, 4294901760
    %5001 = vmatpush.msra.mxu0 %v5000
    %v5002 = vand.u32 %v1374, 4294901760
    %5003 = vmatpush.msra.mxu0 %v5002
    %v5004 = vand.u32 %v1309, 4294901760
    %v5005 = vsub.f32 %v1309, %v5004
    %v5006 = vand.u32 %v5005, 4294901760
    %5007 = vmatmul.f32.gmra.mxu0 %v5006
    %v5008 = vpop.f32.mrf.mxu0
    %v5009 = vadd.f32 %v4655, %v5008
    %v5010 = vand.u32 %v1310, 4294901760
    %v5011 = vsub.f32 %v1310, %v5010
    %v5012 = vand.u32 %v5011, 4294901760
    %5013 = vmatmul.f32.gmra.mxu0 %v5012
    %v5014 = vpop.f32.mrf.mxu0
    %v5015 = vadd.f32 %v4660, %v5014
    %v5016 = vand.u32 %v1311, 4294901760
    %v5017 = vsub.f32 %v1311, %v5016
    %v5018 = vand.u32 %v5017, 4294901760
    %5019 = vmatmul.f32.gmra.mxu0 %v5018
    %v5020 = vpop.f32.mrf.mxu0
    %v5021 = vadd.f32 %v4665, %v5020
    %v5022 = vand.u32 %v1312, 4294901760
    %v5023 = vsub.f32 %v1312, %v5022
    %v5024 = vand.u32 %v5023, 4294901760
    %5025 = vmatmul.f32.gmra.mxu0 %v5024
    %v5026 = vpop.f32.mrf.mxu0
    %v5027 = vadd.f32 %v4670, %v5026
    %v5028 = vand.u32 %v1313, 4294901760
    %v5029 = vsub.f32 %v1313, %v5028
    %v5030 = vand.u32 %v5029, 4294901760
    %5031 = vmatmul.f32.gmra.mxu0 %v5030
    %v5032 = vpop.f32.mrf.mxu0
    %v5033 = vadd.f32 %v4675, %v5032
    %v5034 = vand.u32 %v1314, 4294901760
    %v5035 = vsub.f32 %v1314, %v5034
    %v5036 = vand.u32 %v5035, 4294901760
    %5037 = vmatmul.f32.gmra.mxu0 %v5036
    %v5038 = vpop.f32.mrf.mxu0
    %v5039 = vadd.f32 %v4680, %v5038
    %v5040 = vand.u32 %v1315, 4294901760
    %v5041 = vsub.f32 %v1315, %v5040
    %v5042 = vand.u32 %v5041, 4294901760
    %5043 = vmatmul.f32.gmra.mxu0 %v5042
    %v5044 = vpop.f32.mrf.mxu0
    %v5045 = vadd.f32 %v4685, %v5044
    %v5046 = vand.u32 %v1316, 4294901760
    %v5047 = vsub.f32 %v1316, %v5046
    %v5048 = vand.u32 %v5047, 4294901760
    %5049 = vmatmul.f32.gmra.mxu0 %v5048
    %v5050 = vpop.f32.mrf.mxu0
    %v5051 = vadd.f32 %v4690, %v5050
    %v5052 = vand.u32 %v1317, 4294901760
    %v5053 = vsub.f32 %v1317, %v5052
    %v5054 = vand.u32 %v5053, 4294901760
    %5055 = vmatmul.f32.gmra.mxu0 %v5054
    %v5056 = vpop.f32.mrf.mxu0
    %v5057 = vadd.f32 %v4695, %v5056
    %v5058 = vand.u32 %v1318, 4294901760
    %v5059 = vsub.f32 %v1318, %v5058
    %v5060 = vand.u32 %v5059, 4294901760
    %5061 = vmatmul.f32.gmra.mxu0 %v5060
    %v5062 = vpop.f32.mrf.mxu0
    %v5063 = vadd.f32 %v4700, %v5062
    %v5064 = vand.u32 %v1319, 4294901760
    %v5065 = vsub.f32 %v1319, %v5064
    %v5066 = vand.u32 %v5065, 4294901760
    %5067 = vmatmul.f32.gmra.mxu0 %v5066
    %v5068 = vpop.f32.mrf.mxu0
    %v5069 = vadd.f32 %v4705, %v5068
    %v5070 = vand.u32 %v1320, 4294901760
    %v5071 = vsub.f32 %v1320, %v5070
    %v5072 = vand.u32 %v5071, 4294901760
    %5073 = vmatmul.f32.gmra.mxu0 %v5072
    %v5074 = vpop.f32.mrf.mxu0
    %v5075 = vadd.f32 %v4710, %v5074
    %v5076 = vand.u32 %v1321, 4294901760
    %v5077 = vsub.f32 %v1321, %v5076
    %v5078 = vand.u32 %v5077, 4294901760
    %5079 = vmatmul.f32.gmra.mxu0 %v5078
    %v5080 = vpop.f32.mrf.mxu0
    %v5081 = vadd.f32 %v4715, %v5080
    %v5082 = vand.u32 %v1322, 4294901760
    %v5083 = vsub.f32 %v1322, %v5082
    %v5084 = vand.u32 %v5083, 4294901760
    %5085 = vmatmul.f32.gmra.mxu0 %v5084
    %v5086 = vpop.f32.mrf.mxu0
    %v5087 = vadd.f32 %v4720, %v5086
    %v5088 = vand.u32 %v1323, 4294901760
    %v5089 = vsub.f32 %v1323, %v5088
    %v5090 = vand.u32 %v5089, 4294901760
    %5091 = vmatmul.f32.gmra.mxu0 %v5090
    %v5092 = vpop.f32.mrf.mxu0
    %v5093 = vadd.f32 %v4725, %v5092
    %v5094 = vand.u32 %v1324, 4294901760
    %v5095 = vsub.f32 %v1324, %v5094
    %v5096 = vand.u32 %v5095, 4294901760
    %5097 = vmatmul.f32.gmra.mxu0 %v5096
    %v5098 = vpop.f32.mrf.mxu0
    %v5099 = vadd.f32 %v4730, %v5098
    %v5100 = vand.u32 %v1325, 4294901760
    %v5101 = vsub.f32 %v1325, %v5100
    %v5102 = vand.u32 %v5101, 4294901760
    %5103 = vmatmul.f32.gmra.mxu0 %v5102
    %v5104 = vpop.f32.mrf.mxu0
    %v5105 = vadd.f32 %v4735, %v5104
    %v5106 = vand.u32 %v1326, 4294901760
    %v5107 = vsub.f32 %v1326, %v5106
    %v5108 = vand.u32 %v5107, 4294901760
    %5109 = vmatmul.f32.gmra.mxu0 %v5108
    %v5110 = vpop.f32.mrf.mxu0
    %v5111 = vadd.f32 %v4740, %v5110
    %v5112 = vand.u32 %v1327, 4294901760
    %v5113 = vsub.f32 %v1327, %v5112
    %v5114 = vand.u32 %v5113, 4294901760
    %5115 = vmatmul.f32.gmra.mxu0 %v5114
    %v5116 = vpop.f32.mrf.mxu0
    %v5117 = vadd.f32 %v4745, %v5116
    %v5118 = vand.u32 %v1328, 4294901760
    %v5119 = vsub.f32 %v1328, %v5118
    %v5120 = vand.u32 %v5119, 4294901760
    %5121 = vmatmul.f32.gmra.mxu0 %v5120
    %v5122 = vpop.f32.mrf.mxu0
    %v5123 = vadd.f32 %v4750, %v5122
    %v5124 = vand.u32 %v1329, 4294901760
    %v5125 = vsub.f32 %v1329, %v5124
    %v5126 = vand.u32 %v5125, 4294901760
    %5127 = vmatmul.f32.gmra.mxu0 %v5126
    %v5128 = vpop.f32.mrf.mxu0
    %v5129 = vadd.f32 %v4755, %v5128
    %v5130 = vand.u32 %v1330, 4294901760
    %v5131 = vsub.f32 %v1330, %v5130
    %v5132 = vand.u32 %v5131, 4294901760
    %5133 = vmatmul.f32.gmra.mxu0 %v5132
    %v5134 = vpop.f32.mrf.mxu0
    %v5135 = vadd.f32 %v4760, %v5134
    %v5136 = vand.u32 %v1331, 4294901760
    %v5137 = vsub.f32 %v1331, %v5136
    %v5138 = vand.u32 %v5137, 4294901760
    %5139 = vmatmul.f32.gmra.mxu0 %v5138
    %v5140 = vpop.f32.mrf.mxu0
    %v5141 = vadd.f32 %v4765, %v5140
    %v5142 = vand.u32 %v1332, 4294901760
    %v5143 = vsub.f32 %v1332, %v5142
    %v5144 = vand.u32 %v5143, 4294901760
    %5145 = vmatmul.f32.gmra.mxu0 %v5144
    %v5146 = vpop.f32.mrf.mxu0
    %v5147 = vadd.f32 %v4770, %v5146
    %v5148 = vand.u32 %v1333, 4294901760
    %v5149 = vsub.f32 %v1333, %v5148
    %v5150 = vand.u32 %v5149, 4294901760
    %5151 = vmatmul.f32.gmra.mxu0 %v5150
    %v5152 = vpop.f32.mrf.mxu0
    %v5153 = vadd.f32 %v4775, %v5152
    %v5154 = vand.u32 %v1334, 4294901760
    %v5155 = vsub.f32 %v1334, %v5154
    %v5156 = vand.u32 %v5155, 4294901760
    %5157 = vmatmul.f32.gmra.mxu0 %v5156
    %v5158 = vpop.f32.mrf.mxu0
    %v5159 = vadd.f32 %v4780, %v5158
    %v5160 = vand.u32 %v1335, 4294901760
    %v5161 = vsub.f32 %v1335, %v5160
    %v5162 = vand.u32 %v5161, 4294901760
    %5163 = vmatmul.f32.gmra.mxu0 %v5162
    %v5164 = vpop.f32.mrf.mxu0
    %v5165 = vadd.f32 %v4785, %v5164
    %v5166 = vand.u32 %v1336, 4294901760
    %v5167 = vsub.f32 %v1336, %v5166
    %v5168 = vand.u32 %v5167, 4294901760
    %5169 = vmatmul.f32.gmra.mxu0 %v5168
    %v5170 = vpop.f32.mrf.mxu0
    %v5171 = vadd.f32 %v4790, %v5170
    %v5172 = vand.u32 %v1337, 4294901760
    %v5173 = vsub.f32 %v1337, %v5172
    %v5174 = vand.u32 %v5173, 4294901760
    %5175 = vmatmul.f32.gmra.mxu0 %v5174
    %v5176 = vpop.f32.mrf.mxu0
    %v5177 = vadd.f32 %v4795, %v5176
    %v5178 = vand.u32 %v1338, 4294901760
    %v5179 = vsub.f32 %v1338, %v5178
    %v5180 = vand.u32 %v5179, 4294901760
    %5181 = vmatmul.f32.gmra.mxu0 %v5180
    %v5182 = vpop.f32.mrf.mxu0
    %v5183 = vadd.f32 %v4800, %v5182
    %v5184 = vand.u32 %v1339, 4294901760
    %v5185 = vsub.f32 %v1339, %v5184
    %v5186 = vand.u32 %v5185, 4294901760
    %5187 = vmatmul.f32.gmra.mxu0 %v5186
    %v5188 = vpop.f32.mrf.mxu0
    %v5189 = vadd.f32 %v4805, %v5188
    %v5190 = vand.u32 %v1340, 4294901760
    %v5191 = vsub.f32 %v1340, %v5190
    %v5192 = vand.u32 %v5191, 4294901760
    %5193 = vmatmul.f32.gmra.mxu0 %v5192
    %v5194 = vpop.f32.mrf.mxu0
    %v5195 = vadd.f32 %v4810, %v5194
    %v5196 = vand.u32 %v1341, 4294901760
    %v5197 = vsub.f32 %v1341, %v5196
    %v5198 = vand.u32 %v5197, 4294901760
    %5199 = vmatmul.f32.gmra.mxu0 %v5198
    %v5200 = vpop.f32.mrf.mxu0
    %v5201 = vadd.f32 %v4815, %v5200
    %v5202 = vand.u32 %v1342, 4294901760
    %v5203 = vsub.f32 %v1342, %v5202
    %v5204 = vand.u32 %v5203, 4294901760
    %5205 = vmatmul.f32.gmra.mxu0 %v5204
    %v5206 = vpop.f32.mrf.mxu0
    %v5207 = vadd.f32 %v4820, %v5206
    %v5208 = vand.u32 %v1343, 4294901760
    %v5209 = vsub.f32 %v1343, %v5208
    %v5210 = vand.u32 %v5209, 4294901760
    %5211 = vmatmul.f32.gmra.mxu0 %v5210
    %v5212 = vpop.f32.mrf.mxu0
    %v5213 = vadd.f32 %v4825, %v5212
    %v5214 = vand.u32 %v1344, 4294901760
    %v5215 = vsub.f32 %v1344, %v5214
    %v5216 = vand.u32 %v5215, 4294901760
    %5217 = vmatmul.f32.gmra.mxu0 %v5216
    %v5218 = vpop.f32.mrf.mxu0
    %v5219 = vadd.f32 %v4830, %v5218
    %v5220 = vand.u32 %v1345, 4294901760
    %v5221 = vsub.f32 %v1345, %v5220
    %v5222 = vand.u32 %v5221, 4294901760
    %5223 = vmatmul.f32.gmra.mxu0 %v5222
    %v5224 = vpop.f32.mrf.mxu0
    %v5225 = vadd.f32 %v4835, %v5224
    %v5226 = vand.u32 %v1346, 4294901760
    %v5227 = vsub.f32 %v1346, %v5226
    %v5228 = vand.u32 %v5227, 4294901760
    %5229 = vmatmul.f32.gmra.mxu0 %v5228
    %v5230 = vpop.f32.mrf.mxu0
    %v5231 = vadd.f32 %v4840, %v5230
    %v5232 = vand.u32 %v1347, 4294901760
    %v5233 = vsub.f32 %v1347, %v5232
    %v5234 = vand.u32 %v5233, 4294901760
    %5235 = vmatmul.f32.gmra.mxu0 %v5234
    %v5236 = vpop.f32.mrf.mxu0
    %v5237 = vadd.f32 %v4845, %v5236
    %v5238 = vand.u32 %v1348, 4294901760
    %v5239 = vsub.f32 %v1348, %v5238
    %v5240 = vand.u32 %v5239, 4294901760
    %5241 = vmatmul.f32.gmra.mxu0 %v5240
    %v5242 = vpop.f32.mrf.mxu0
    %v5243 = vadd.f32 %v4850, %v5242
    %v5244 = vand.u32 %v1349, 4294901760
    %v5245 = vsub.f32 %v1349, %v5244
    %v5246 = vand.u32 %v5245, 4294901760
    %5247 = vmatmul.f32.gmra.mxu0 %v5246
    %v5248 = vpop.f32.mrf.mxu0
    %v5249 = vadd.f32 %v4855, %v5248
    %v5250 = vand.u32 %v1350, 4294901760
    %v5251 = vsub.f32 %v1350, %v5250
    %v5252 = vand.u32 %v5251, 4294901760
    %5253 = vmatmul.f32.gmra.mxu0 %v5252
    %v5254 = vpop.f32.mrf.mxu0
    %v5255 = vadd.f32 %v4860, %v5254
    %v5256 = vand.u32 %v1351, 4294901760
    %v5257 = vsub.f32 %v1351, %v5256
    %v5258 = vand.u32 %v5257, 4294901760
    %5259 = vmatmul.f32.gmra.mxu0 %v5258
    %v5260 = vpop.f32.mrf.mxu0
    %v5261 = vadd.f32 %v4865, %v5260
    %v5262 = vand.u32 %v1352, 4294901760
    %v5263 = vsub.f32 %v1352, %v5262
    %v5264 = vand.u32 %v5263, 4294901760
    %5265 = vmatmul.f32.gmra.mxu0 %v5264
    %v5266 = vpop.f32.mrf.mxu0
    %v5267 = vadd.f32 %v4870, %v5266
    %v5268 = vand.u32 %v1353, 4294901760
    %v5269 = vsub.f32 %v1353, %v5268
    %v5270 = vand.u32 %v5269, 4294901760
    %5271 = vmatmul.f32.gmra.mxu0 %v5270
    %v5272 = vpop.f32.mrf.mxu0
    %v5273 = vadd.f32 %v4875, %v5272
    %v5274 = vand.u32 %v1354, 4294901760
    %v5275 = vsub.f32 %v1354, %v5274
    %v5276 = vand.u32 %v5275, 4294901760
    %5277 = vmatmul.f32.gmra.mxu0 %v5276
    %v5278 = vpop.f32.mrf.mxu0
    %v5279 = vadd.f32 %v4880, %v5278
    %v5280 = vand.u32 %v1355, 4294901760
    %v5281 = vsub.f32 %v1355, %v5280
    %v5282 = vand.u32 %v5281, 4294901760
    %5283 = vmatmul.f32.gmra.mxu0 %v5282
    %v5284 = vpop.f32.mrf.mxu0
    %v5285 = vadd.f32 %v4885, %v5284
    %v5286 = vand.u32 %v1356, 4294901760
    %v5287 = vsub.f32 %v1356, %v5286
    %v5288 = vand.u32 %v5287, 4294901760
    %5289 = vmatmul.f32.gmra.mxu0 %v5288
    %v5290 = vpop.f32.mrf.mxu0
    %v5291 = vadd.f32 %v4890, %v5290
    %v5292 = vand.u32 %v1357, 4294901760
    %v5293 = vsub.f32 %v1357, %v5292
    %v5294 = vand.u32 %v5293, 4294901760
    %5295 = vmatmul.f32.gmra.mxu0 %v5294
    %v5296 = vpop.f32.mrf.mxu0
    %v5297 = vadd.f32 %v4895, %v5296
    %v5298 = vand.u32 %v1358, 4294901760
    %v5299 = vsub.f32 %v1358, %v5298
    %v5300 = vand.u32 %v5299, 4294901760
    %5301 = vmatmul.f32.gmra.mxu0 %v5300
    %v5302 = vpop.f32.mrf.mxu0
    %v5303 = vadd.f32 %v4900, %v5302
    %v5304 = vand.u32 %v1359, 4294901760
    %v5305 = vsub.f32 %v1359, %v5304
    %v5306 = vand.u32 %v5305, 4294901760
    %5307 = vmatmul.f32.gmra.mxu0 %v5306
    %v5308 = vpop.f32.mrf.mxu0
    %v5309 = vadd.f32 %v4905, %v5308
    %v5310 = vand.u32 %v1360, 4294901760
    %v5311 = vsub.f32 %v1360, %v5310
    %v5312 = vand.u32 %v5311, 4294901760
    %5313 = vmatmul.f32.gmra.mxu0 %v5312
    %v5314 = vpop.f32.mrf.mxu0
    %v5315 = vadd.f32 %v4910, %v5314
    %v5316 = vand.u32 %v1361, 4294901760
    %v5317 = vsub.f32 %v1361, %v5316
    %v5318 = vand.u32 %v5317, 4294901760
    %5319 = vmatmul.f32.gmra.mxu0 %v5318
    %v5320 = vpop.f32.mrf.mxu0
    %v5321 = vadd.f32 %v4915, %v5320
    %v5322 = vand.u32 %v1362, 4294901760
    %v5323 = vsub.f32 %v1362, %v5322
    %v5324 = vand.u32 %v5323, 4294901760
    %5325 = vmatmul.f32.gmra.mxu0 %v5324
    %v5326 = vpop.f32.mrf.mxu0
    %v5327 = vadd.f32 %v4920, %v5326
    %v5328 = vand.u32 %v1363, 4294901760
    %v5329 = vsub.f32 %v1363, %v5328
    %v5330 = vand.u32 %v5329, 4294901760
    %5331 = vmatmul.f32.gmra.mxu0 %v5330
    %v5332 = vpop.f32.mrf.mxu0
    %v5333 = vadd.f32 %v4925, %v5332
    %v5334 = vand.u32 %v1364, 4294901760
    %v5335 = vsub.f32 %v1364, %v5334
    %v5336 = vand.u32 %v5335, 4294901760
    %5337 = vmatmul.f32.gmra.mxu0 %v5336
    %v5338 = vpop.f32.mrf.mxu0
    %v5339 = vadd.f32 %v4930, %v5338
    %v5340 = vand.u32 %v1365, 4294901760
    %v5341 = vsub.f32 %v1365, %v5340
    %v5342 = vand.u32 %v5341, 4294901760
    %5343 = vmatmul.f32.gmra.mxu0 %v5342
    %v5344 = vpop.f32.mrf.mxu0
    %v5345 = vadd.f32 %v4935, %v5344
    %v5346 = vand.u32 %v1366, 4294901760
    %v5347 = vsub.f32 %v1366, %v5346
    %v5348 = vand.u32 %v5347, 4294901760
    %5349 = vmatmul.f32.gmra.mxu0 %v5348
    %v5350 = vpop.f32.mrf.mxu0
    %v5351 = vadd.f32 %v4940, %v5350
    %v5352 = vand.u32 %v1367, 4294901760
    %v5353 = vsub.f32 %v1367, %v5352
    %v5354 = vand.u32 %v5353, 4294901760
    %5355 = vmatmul.f32.gmra.mxu0 %v5354
    %v5356 = vpop.f32.mrf.mxu0
    %v5357 = vadd.f32 %v4945, %v5356
    %v5358 = vand.u32 %v1368, 4294901760
    %v5359 = vsub.f32 %v1368, %v5358
    %v5360 = vand.u32 %v5359, 4294901760
    %5361 = vmatmul.f32.gmra.mxu0 %v5360
    %v5362 = vpop.f32.mrf.mxu0
    %v5363 = vadd.f32 %v4950, %v5362
    %v5364 = vand.u32 %v1369, 4294901760
    %v5365 = vsub.f32 %v1369, %v5364
    %v5366 = vand.u32 %v5365, 4294901760
    %5367 = vmatmul.f32.gmra.mxu0 %v5366
    %v5368 = vpop.f32.mrf.mxu0
    %v5369 = vadd.f32 %v4955, %v5368
    %v5370 = vand.u32 %v1370, 4294901760
    %v5371 = vsub.f32 %v1370, %v5370
    %v5372 = vand.u32 %v5371, 4294901760
    %5373 = vmatmul.f32.gmra.mxu0 %v5372
    %v5374 = vpop.f32.mrf.mxu0
    %v5375 = vadd.f32 %v4960, %v5374
    %v5376 = vand.u32 %v1371, 4294901760
    %v5377 = vsub.f32 %v1371, %v5376
    %v5378 = vand.u32 %v5377, 4294901760
    %5379 = vmatmul.f32.gmra.mxu0 %v5378
    %v5380 = vpop.f32.mrf.mxu0
    %v5381 = vadd.f32 %v4965, %v5380
    %v5382 = vand.u32 %v1372, 4294901760
    %v5383 = vsub.f32 %v1372, %v5382
    %v5384 = vand.u32 %v5383, 4294901760
    %5385 = vmatmul.f32.gmra.mxu0 %v5384
    %v5386 = vpop.f32.mrf.mxu0
    %v5387 = vadd.f32 %v4970, %v5386
    %5388 = vdwg.mxu0
    %v5389 = vand.u32 %v1404, 4294901760
    %v5390 = vsub.f32 %v1404, %v5389
    %v5391 = vand.u32 %v5390, 4294901760
    %5392 = vmatpush.msra.mxu0 %v5391
    %v5393 = vand.u32 %v1402, 4294901760
    %v5394 = vsub.f32 %v1402, %v5393
    %v5395 = vand.u32 %v5394, 4294901760
    %5396 = vmatpush.msra.mxu0 %v5395
    %v5397 = vand.u32 %v1400, 4294901760
    %v5398 = vsub.f32 %v1400, %v5397
    %v5399 = vand.u32 %v5398, 4294901760
    %5400 = vmatpush.msra.mxu0 %v5399
    %v5401 = vand.u32 %v1398, 4294901760
    %v5402 = vsub.f32 %v1398, %v5401
    %v5403 = vand.u32 %v5402, 4294901760
    %5404 = vmatpush.msra.mxu0 %v5403
    %v5405 = vand.u32 %v1396, 4294901760
    %v5406 = vsub.f32 %v1396, %v5405
    %v5407 = vand.u32 %v5406, 4294901760
    %5408 = vmatpush.msra.mxu0 %v5407
    %v5409 = vand.u32 %v1394, 4294901760
    %v5410 = vsub.f32 %v1394, %v5409
    %v5411 = vand.u32 %v5410, 4294901760
    %5412 = vmatpush.msra.mxu0 %v5411
    %v5413 = vand.u32 %v1392, 4294901760
    %v5414 = vsub.f32 %v1392, %v5413
    %v5415 = vand.u32 %v5414, 4294901760
    %5416 = vmatpush.msra.mxu0 %v5415
    %v5417 = vand.u32 %v1390, 4294901760
    %v5418 = vsub.f32 %v1390, %v5417
    %v5419 = vand.u32 %v5418, 4294901760
    %5420 = vmatpush.msra.mxu0 %v5419
    %v5421 = vand.u32 %v1388, 4294901760
    %v5422 = vsub.f32 %v1388, %v5421
    %v5423 = vand.u32 %v5422, 4294901760
    %5424 = vmatpush.msra.mxu0 %v5423
    %v5425 = vand.u32 %v1386, 4294901760
    %v5426 = vsub.f32 %v1386, %v5425
    %v5427 = vand.u32 %v5426, 4294901760
    %5428 = vmatpush.msra.mxu0 %v5427
    %v5429 = vand.u32 %v1384, 4294901760
    %v5430 = vsub.f32 %v1384, %v5429
    %v5431 = vand.u32 %v5430, 4294901760
    %5432 = vmatpush.msra.mxu0 %v5431
    %v5433 = vand.u32 %v1382, 4294901760
    %v5434 = vsub.f32 %v1382, %v5433
    %v5435 = vand.u32 %v5434, 4294901760
    %5436 = vmatpush.msra.mxu0 %v5435
    %v5437 = vand.u32 %v1380, 4294901760
    %v5438 = vsub.f32 %v1380, %v5437
    %v5439 = vand.u32 %v5438, 4294901760
    %5440 = vmatpush.msra.mxu0 %v5439
    %v5441 = vand.u32 %v1378, 4294901760
    %v5442 = vsub.f32 %v1378, %v5441
    %v5443 = vand.u32 %v5442, 4294901760
    %5444 = vmatpush.msra.mxu0 %v5443
    %v5445 = vand.u32 %v1376, 4294901760
    %v5446 = vsub.f32 %v1376, %v5445
    %v5447 = vand.u32 %v5446, 4294901760
    %5448 = vmatpush.msra.mxu0 %v5447
    %v5449 = vand.u32 %v1374, 4294901760
    %v5450 = vsub.f32 %v1374, %v5449
    %v5451 = vand.u32 %v5450, 4294901760
    %5452 = vmatpush.msra.mxu0 %v5451
    %v5453 = vand.u32 %v1309, 4294901760
    %5454 = vmatmul.f32.gmra.mxu0 %v5453
    %v5455 = vpop.f32.mrf.mxu0
    %v5456 = vadd.f32 %v5009, %v5455
    %v5457 = vand.u32 %v1310, 4294901760
    %5458 = vmatmul.f32.gmra.mxu0 %v5457
    %v5459 = vpop.f32.mrf.mxu0
    %v5460 = vadd.f32 %v5015, %v5459
    %v5461 = vand.u32 %v1311, 4294901760
    %5462 = vmatmul.f32.gmra.mxu0 %v5461
    %v5463 = vpop.f32.mrf.mxu0
    %v5464 = vadd.f32 %v5021, %v5463
    %v5465 = vand.u32 %v1312, 4294901760
    %5466 = vmatmul.f32.gmra.mxu0 %v5465
    %v5467 = vpop.f32.mrf.mxu0
    %v5468 = vadd.f32 %v5027, %v5467
    %v5469 = vand.u32 %v1313, 4294901760
    %5470 = vmatmul.f32.gmra.mxu0 %v5469
    %v5471 = vpop.f32.mrf.mxu0
    %v5472 = vadd.f32 %v5033, %v5471
    %v5473 = vand.u32 %v1314, 4294901760
    %5474 = vmatmul.f32.gmra.mxu0 %v5473
    %v5475 = vpop.f32.mrf.mxu0
    %v5476 = vadd.f32 %v5039, %v5475
    %v5477 = vand.u32 %v1315, 4294901760
    %5478 = vmatmul.f32.gmra.mxu0 %v5477
    %v5479 = vpop.f32.mrf.mxu0
    %v5480 = vadd.f32 %v5045, %v5479
    %v5481 = vand.u32 %v1316, 4294901760
    %5482 = vmatmul.f32.gmra.mxu0 %v5481
    %v5483 = vpop.f32.mrf.mxu0
    %v5484 = vadd.f32 %v5051, %v5483
    %v5485 = vand.u32 %v1317, 4294901760
    %5486 = vmatmul.f32.gmra.mxu0 %v5485
    %v5487 = vpop.f32.mrf.mxu0
    %v5488 = vadd.f32 %v5057, %v5487
    %v5489 = vand.u32 %v1318, 4294901760
    %5490 = vmatmul.f32.gmra.mxu0 %v5489
    %v5491 = vpop.f32.mrf.mxu0
    %v5492 = vadd.f32 %v5063, %v5491
    %v5493 = vand.u32 %v1319, 4294901760
    %5494 = vmatmul.f32.gmra.mxu0 %v5493
    %v5495 = vpop.f32.mrf.mxu0
    %v5496 = vadd.f32 %v5069, %v5495
    %v5497 = vand.u32 %v1320, 4294901760
    %5498 = vmatmul.f32.gmra.mxu0 %v5497
    %v5499 = vpop.f32.mrf.mxu0
    %v5500 = vadd.f32 %v5075, %v5499
    %v5501 = vand.u32 %v1321, 4294901760
    %5502 = vmatmul.f32.gmra.mxu0 %v5501
    %v5503 = vpop.f32.mrf.mxu0
    %v5504 = vadd.f32 %v5081, %v5503
    %v5505 = vand.u32 %v1322, 4294901760
    %5506 = vmatmul.f32.gmra.mxu0 %v5505
    %v5507 = vpop.f32.mrf.mxu0
    %v5508 = vadd.f32 %v5087, %v5507
    %v5509 = vand.u32 %v1323, 4294901760
    %5510 = vmatmul.f32.gmra.mxu0 %v5509
    %v5511 = vpop.f32.mrf.mxu0
    %v5512 = vadd.f32 %v5093, %v5511
    %v5513 = vand.u32 %v1324, 4294901760
    %5514 = vmatmul.f32.gmra.mxu0 %v5513
    %v5515 = vpop.f32.mrf.mxu0
    %v5516 = vadd.f32 %v5099, %v5515
    %v5517 = vand.u32 %v1325, 4294901760
    %5518 = vmatmul.f32.gmra.mxu0 %v5517
    %v5519 = vpop.f32.mrf.mxu0
    %v5520 = vadd.f32 %v5105, %v5519
    %v5521 = vand.u32 %v1326, 4294901760
    %5522 = vmatmul.f32.gmra.mxu0 %v5521
    %v5523 = vpop.f32.mrf.mxu0
    %v5524 = vadd.f32 %v5111, %v5523
    %v5525 = vand.u32 %v1327, 4294901760
    %5526 = vmatmul.f32.gmra.mxu0 %v5525
    %v5527 = vpop.f32.mrf.mxu0
    %v5528 = vadd.f32 %v5117, %v5527
    %v5529 = vand.u32 %v1328, 4294901760
    %5530 = vmatmul.f32.gmra.mxu0 %v5529
    %v5531 = vpop.f32.mrf.mxu0
    %v5532 = vadd.f32 %v5123, %v5531
    %v5533 = vand.u32 %v1329, 4294901760
    %5534 = vmatmul.f32.gmra.mxu0 %v5533
    %v5535 = vpop.f32.mrf.mxu0
    %v5536 = vadd.f32 %v5129, %v5535
    %v5537 = vand.u32 %v1330, 4294901760
    %5538 = vmatmul.f32.gmra.mxu0 %v5537
    %v5539 = vpop.f32.mrf.mxu0
    %v5540 = vadd.f32 %v5135, %v5539
    %v5541 = vand.u32 %v1331, 4294901760
    %5542 = vmatmul.f32.gmra.mxu0 %v5541
    %v5543 = vpop.f32.mrf.mxu0
    %v5544 = vadd.f32 %v5141, %v5543
    %v5545 = vand.u32 %v1332, 4294901760
    %5546 = vmatmul.f32.gmra.mxu0 %v5545
    %v5547 = vpop.f32.mrf.mxu0
    %v5548 = vadd.f32 %v5147, %v5547
    %v5549 = vand.u32 %v1333, 4294901760
    %5550 = vmatmul.f32.gmra.mxu0 %v5549
    %v5551 = vpop.f32.mrf.mxu0
    %v5552 = vadd.f32 %v5153, %v5551
    %v5553 = vand.u32 %v1334, 4294901760
    %5554 = vmatmul.f32.gmra.mxu0 %v5553
    %v5555 = vpop.f32.mrf.mxu0
    %v5556 = vadd.f32 %v5159, %v5555
    %v5557 = vand.u32 %v1335, 4294901760
    %5558 = vmatmul.f32.gmra.mxu0 %v5557
    %v5559 = vpop.f32.mrf.mxu0
    %v5560 = vadd.f32 %v5165, %v5559
    %v5561 = vand.u32 %v1336, 4294901760
    %5562 = vmatmul.f32.gmra.mxu0 %v5561
    %v5563 = vpop.f32.mrf.mxu0
    %v5564 = vadd.f32 %v5171, %v5563
    %v5565 = vand.u32 %v1337, 4294901760
    %5566 = vmatmul.f32.gmra.mxu0 %v5565
    %v5567 = vpop.f32.mrf.mxu0
    %v5568 = vadd.f32 %v5177, %v5567
    %v5569 = vand.u32 %v1338, 4294901760
    %5570 = vmatmul.f32.gmra.mxu0 %v5569
    %v5571 = vpop.f32.mrf.mxu0
    %v5572 = vadd.f32 %v5183, %v5571
    %v5573 = vand.u32 %v1339, 4294901760
    %5574 = vmatmul.f32.gmra.mxu0 %v5573
    %v5575 = vpop.f32.mrf.mxu0
    %v5576 = vadd.f32 %v5189, %v5575
    %v5577 = vand.u32 %v1340, 4294901760
    %5578 = vmatmul.f32.gmra.mxu0 %v5577
    %v5579 = vpop.f32.mrf.mxu0
    %v5580 = vadd.f32 %v5195, %v5579
    %v5581 = vand.u32 %v1341, 4294901760
    %5582 = vmatmul.f32.gmra.mxu0 %v5581
    %v5583 = vpop.f32.mrf.mxu0
    %v5584 = vadd.f32 %v5201, %v5583
    %v5585 = vand.u32 %v1342, 4294901760
    %5586 = vmatmul.f32.gmra.mxu0 %v5585
    %v5587 = vpop.f32.mrf.mxu0
    %v5588 = vadd.f32 %v5207, %v5587
    %v5589 = vand.u32 %v1343, 4294901760
    %5590 = vmatmul.f32.gmra.mxu0 %v5589
    %v5591 = vpop.f32.mrf.mxu0
    %v5592 = vadd.f32 %v5213, %v5591
    %v5593 = vand.u32 %v1344, 4294901760
    %5594 = vmatmul.f32.gmra.mxu0 %v5593
    %v5595 = vpop.f32.mrf.mxu0
    %v5596 = vadd.f32 %v5219, %v5595
    %v5597 = vand.u32 %v1345, 4294901760
    %5598 = vmatmul.f32.gmra.mxu0 %v5597
    %v5599 = vpop.f32.mrf.mxu0
    %v5600 = vadd.f32 %v5225, %v5599
    %v5601 = vand.u32 %v1346, 4294901760
    %5602 = vmatmul.f32.gmra.mxu0 %v5601
    %v5603 = vpop.f32.mrf.mxu0
    %v5604 = vadd.f32 %v5231, %v5603
    %v5605 = vand.u32 %v1347, 4294901760
    %5606 = vmatmul.f32.gmra.mxu0 %v5605
    %v5607 = vpop.f32.mrf.mxu0
    %v5608 = vadd.f32 %v5237, %v5607
    %v5609 = vand.u32 %v1348, 4294901760
    %5610 = vmatmul.f32.gmra.mxu0 %v5609
    %v5611 = vpop.f32.mrf.mxu0
    %v5612 = vadd.f32 %v5243, %v5611
    %v5613 = vand.u32 %v1349, 4294901760
    %5614 = vmatmul.f32.gmra.mxu0 %v5613
    %v5615 = vpop.f32.mrf.mxu0
    %v5616 = vadd.f32 %v5249, %v5615
    %v5617 = vand.u32 %v1350, 4294901760
    %5618 = vmatmul.f32.gmra.mxu0 %v5617
    %v5619 = vpop.f32.mrf.mxu0
    %v5620 = vadd.f32 %v5255, %v5619
    %v5621 = vand.u32 %v1351, 4294901760
    %5622 = vmatmul.f32.gmra.mxu0 %v5621
    %v5623 = vpop.f32.mrf.mxu0
    %v5624 = vadd.f32 %v5261, %v5623
    %v5625 = vand.u32 %v1352, 4294901760
    %5626 = vmatmul.f32.gmra.mxu0 %v5625
    %v5627 = vpop.f32.mrf.mxu0
    %v5628 = vadd.f32 %v5267, %v5627
    %v5629 = vand.u32 %v1353, 4294901760
    %5630 = vmatmul.f32.gmra.mxu0 %v5629
    %v5631 = vpop.f32.mrf.mxu0
    %v5632 = vadd.f32 %v5273, %v5631
    %v5633 = vand.u32 %v1354, 4294901760
    %5634 = vmatmul.f32.gmra.mxu0 %v5633
    %v5635 = vpop.f32.mrf.mxu0
    %v5636 = vadd.f32 %v5279, %v5635
    %v5637 = vand.u32 %v1355, 4294901760
    %5638 = vmatmul.f32.gmra.mxu0 %v5637
    %v5639 = vpop.f32.mrf.mxu0
    %v5640 = vadd.f32 %v5285, %v5639
    %v5641 = vand.u32 %v1356, 4294901760
    %5642 = vmatmul.f32.gmra.mxu0 %v5641
    %v5643 = vpop.f32.mrf.mxu0
    %v5644 = vadd.f32 %v5291, %v5643
    %v5645 = vand.u32 %v1357, 4294901760
    %5646 = vmatmul.f32.gmra.mxu0 %v5645
    %v5647 = vpop.f32.mrf.mxu0
    %v5648 = vadd.f32 %v5297, %v5647
    %v5649 = vand.u32 %v1358, 4294901760
    %5650 = vmatmul.f32.gmra.mxu0 %v5649
    %v5651 = vpop.f32.mrf.mxu0
    %v5652 = vadd.f32 %v5303, %v5651
    %v5653 = vand.u32 %v1359, 4294901760
    %5654 = vmatmul.f32.gmra.mxu0 %v5653
    %v5655 = vpop.f32.mrf.mxu0
    %v5656 = vadd.f32 %v5309, %v5655
    %v5657 = vand.u32 %v1360, 4294901760
    %5658 = vmatmul.f32.gmra.mxu0 %v5657
    %v5659 = vpop.f32.mrf.mxu0
    %v5660 = vadd.f32 %v5315, %v5659
    %v5661 = vand.u32 %v1361, 4294901760
    %5662 = vmatmul.f32.gmra.mxu0 %v5661
    %v5663 = vpop.f32.mrf.mxu0
    %v5664 = vadd.f32 %v5321, %v5663
    %v5665 = vand.u32 %v1362, 4294901760
    %5666 = vmatmul.f32.gmra.mxu0 %v5665
    %v5667 = vpop.f32.mrf.mxu0
    %v5668 = vadd.f32 %v5327, %v5667
    %v5669 = vand.u32 %v1363, 4294901760
    %5670 = vmatmul.f32.gmra.mxu0 %v5669
    %v5671 = vpop.f32.mrf.mxu0
    %v5672 = vadd.f32 %v5333, %v5671
    %v5673 = vand.u32 %v1364, 4294901760
    %5674 = vmatmul.f32.gmra.mxu0 %v5673
    %v5675 = vpop.f32.mrf.mxu0
    %v5676 = vadd.f32 %v5339, %v5675
    %v5677 = vand.u32 %v1365, 4294901760
    %5678 = vmatmul.f32.gmra.mxu0 %v5677
    %v5679 = vpop.f32.mrf.mxu0
    %v5680 = vadd.f32 %v5345, %v5679
    %v5681 = vand.u32 %v1366, 4294901760
    %5682 = vmatmul.f32.gmra.mxu0 %v5681
    %v5683 = vpop.f32.mrf.mxu0
    %v5684 = vadd.f32 %v5351, %v5683
    %v5685 = vand.u32 %v1367, 4294901760
    %5686 = vmatmul.f32.gmra.mxu0 %v5685
    %v5687 = vpop.f32.mrf.mxu0
    %v5688 = vadd.f32 %v5357, %v5687
    %v5689 = vand.u32 %v1368, 4294901760
    %5690 = vmatmul.f32.gmra.mxu0 %v5689
    %v5691 = vpop.f32.mrf.mxu0
    %v5692 = vadd.f32 %v5363, %v5691
    %v5693 = vand.u32 %v1369, 4294901760
    %5694 = vmatmul.f32.gmra.mxu0 %v5693
    %v5695 = vpop.f32.mrf.mxu0
    %v5696 = vadd.f32 %v5369, %v5695
    %v5697 = vand.u32 %v1370, 4294901760
    %5698 = vmatmul.f32.gmra.mxu0 %v5697
    %v5699 = vpop.f32.mrf.mxu0
    %v5700 = vadd.f32 %v5375, %v5699
    %v5701 = vand.u32 %v1371, 4294901760
    %5702 = vmatmul.f32.gmra.mxu0 %v5701
    %v5703 = vpop.f32.mrf.mxu0
    %v5704 = vadd.f32 %v5381, %v5703
    %v5705 = vand.u32 %v1372, 4294901760
    %5706 = vmatmul.f32.gmra.mxu0 %v5705
    %v5707 = vpop.f32.mrf.mxu0
    %v5708 = vadd.f32 %v5387, %v5707
    %5709 = vdwg.mxu0
    %v5710 = vand.u32 %v1404, 4294901760
    %5711 = vmatpush.msra.mxu0 %v5710
    %v5712 = vand.u32 %v1402, 4294901760
    %5713 = vmatpush.msra.mxu0 %v5712
    %v5714 = vand.u32 %v1400, 4294901760
    %5715 = vmatpush.msra.mxu0 %v5714
    %v5716 = vand.u32 %v1398, 4294901760
    %5717 = vmatpush.msra.mxu0 %v5716
    %v5718 = vand.u32 %v1396, 4294901760
    %5719 = vmatpush.msra.mxu0 %v5718
    %v5720 = vand.u32 %v1394, 4294901760
    %5721 = vmatpush.msra.mxu0 %v5720
    %v5722 = vand.u32 %v1392, 4294901760
    %5723 = vmatpush.msra.mxu0 %v5722
    %v5724 = vand.u32 %v1390, 4294901760
    %5725 = vmatpush.msra.mxu0 %v5724
    %v5726 = vand.u32 %v1388, 4294901760
    %5727 = vmatpush.msra.mxu0 %v5726
    %v5728 = vand.u32 %v1386, 4294901760
    %5729 = vmatpush.msra.mxu0 %v5728
    %v5730 = vand.u32 %v1384, 4294901760
    %5731 = vmatpush.msra.mxu0 %v5730
    %v5732 = vand.u32 %v1382, 4294901760
    %5733 = vmatpush.msra.mxu0 %v5732
    %v5734 = vand.u32 %v1380, 4294901760
    %5735 = vmatpush.msra.mxu0 %v5734
    %v5736 = vand.u32 %v1378, 4294901760
    %5737 = vmatpush.msra.mxu0 %v5736
    %v5738 = vand.u32 %v1376, 4294901760
    %5739 = vmatpush.msra.mxu0 %v5738
    %v5740 = vand.u32 %v1374, 4294901760
    %5741 = vmatpush.msra.mxu0 %v5740
    %v5742 = vand.u32 %v1309, 4294901760
    %5743 = vmatmul.f32.gmra.mxu0 %v5742
    %v5744 = vpop.f32.mrf.mxu0
    %v5745 = vadd.f32 %v5456, %v5744
    %v5746 = vand.u32 %v1310, 4294901760
    %5747 = vmatmul.f32.gmra.mxu0 %v5746
    %v5748 = vpop.f32.mrf.mxu0
    %v5749 = vadd.f32 %v5460, %v5748
    %v5750 = vand.u32 %v1311, 4294901760
    %5751 = vmatmul.f32.gmra.mxu0 %v5750
    %v5752 = vpop.f32.mrf.mxu0
    %v5753 = vadd.f32 %v5464, %v5752
    %v5754 = vand.u32 %v1312, 4294901760
    %5755 = vmatmul.f32.gmra.mxu0 %v5754
    %v5756 = vpop.f32.mrf.mxu0
    %v5757 = vadd.f32 %v5468, %v5756
    %v5758 = vand.u32 %v1313, 4294901760
    %5759 = vmatmul.f32.gmra.mxu0 %v5758
    %v5760 = vpop.f32.mrf.mxu0
    %v5761 = vadd.f32 %v5472, %v5760
    %v5762 = vand.u32 %v1314, 4294901760
    %5763 = vmatmul.f32.gmra.mxu0 %v5762
    %v5764 = vpop.f32.mrf.mxu0
    %v5765 = vadd.f32 %v5476, %v5764
    %v5766 = vand.u32 %v1315, 4294901760
    %5767 = vmatmul.f32.gmra.mxu0 %v5766
    %v5768 = vpop.f32.mrf.mxu0
    %v5769 = vadd.f32 %v5480, %v5768
    %v5770 = vand.u32 %v1316, 4294901760
    %5771 = vmatmul.f32.gmra.mxu0 %v5770
    %v5772 = vpop.f32.mrf.mxu0
    %v5773 = vadd.f32 %v5484, %v5772
    %v5774 = vand.u32 %v1317, 4294901760
    %5775 = vmatmul.f32.gmra.mxu0 %v5774
    %v5776 = vpop.f32.mrf.mxu0
    %v5777 = vadd.f32 %v5488, %v5776
    %v5778 = vand.u32 %v1318, 4294901760
    %5779 = vmatmul.f32.gmra.mxu0 %v5778
    %v5780 = vpop.f32.mrf.mxu0
    %v5781 = vadd.f32 %v5492, %v5780
    %v5782 = vand.u32 %v1319, 4294901760
    %5783 = vmatmul.f32.gmra.mxu0 %v5782
    %v5784 = vpop.f32.mrf.mxu0
    %v5785 = vadd.f32 %v5496, %v5784
    %v5786 = vand.u32 %v1320, 4294901760
    %5787 = vmatmul.f32.gmra.mxu0 %v5786
    %v5788 = vpop.f32.mrf.mxu0
    %v5789 = vadd.f32 %v5500, %v5788
    %v5790 = vand.u32 %v1321, 4294901760
    %5791 = vmatmul.f32.gmra.mxu0 %v5790
    %v5792 = vpop.f32.mrf.mxu0
    %v5793 = vadd.f32 %v5504, %v5792
    %v5794 = vand.u32 %v1322, 4294901760
    %5795 = vmatmul.f32.gmra.mxu0 %v5794
    %v5796 = vpop.f32.mrf.mxu0
    %v5797 = vadd.f32 %v5508, %v5796
    %v5798 = vand.u32 %v1323, 4294901760
    %5799 = vmatmul.f32.gmra.mxu0 %v5798
    %v5800 = vpop.f32.mrf.mxu0
    %v5801 = vadd.f32 %v5512, %v5800
    %v5802 = vand.u32 %v1324, 4294901760
    %5803 = vmatmul.f32.gmra.mxu0 %v5802
    %v5804 = vpop.f32.mrf.mxu0
    %v5805 = vadd.f32 %v5516, %v5804
    %v5806 = vand.u32 %v1325, 4294901760
    %5807 = vmatmul.f32.gmra.mxu0 %v5806
    %v5808 = vpop.f32.mrf.mxu0
    %v5809 = vadd.f32 %v5520, %v5808
    %v5810 = vand.u32 %v1326, 4294901760
    %5811 = vmatmul.f32.gmra.mxu0 %v5810
    %v5812 = vpop.f32.mrf.mxu0
    %v5813 = vadd.f32 %v5524, %v5812
    %v5814 = vand.u32 %v1327, 4294901760
    %5815 = vmatmul.f32.gmra.mxu0 %v5814
    %v5816 = vpop.f32.mrf.mxu0
    %v5817 = vadd.f32 %v5528, %v5816
    %v5818 = vand.u32 %v1328, 4294901760
    %5819 = vmatmul.f32.gmra.mxu0 %v5818
    %v5820 = vpop.f32.mrf.mxu0
    %v5821 = vadd.f32 %v5532, %v5820
    %v5822 = vand.u32 %v1329, 4294901760
    %5823 = vmatmul.f32.gmra.mxu0 %v5822
    %v5824 = vpop.f32.mrf.mxu0
    %v5825 = vadd.f32 %v5536, %v5824
    %v5826 = vand.u32 %v1330, 4294901760
    %5827 = vmatmul.f32.gmra.mxu0 %v5826
    %v5828 = vpop.f32.mrf.mxu0
    %v5829 = vadd.f32 %v5540, %v5828
    %v5830 = vand.u32 %v1331, 4294901760
    %5831 = vmatmul.f32.gmra.mxu0 %v5830
    %v5832 = vpop.f32.mrf.mxu0
    %v5833 = vadd.f32 %v5544, %v5832
    %v5834 = vand.u32 %v1332, 4294901760
    %5835 = vmatmul.f32.gmra.mxu0 %v5834
    %v5836 = vpop.f32.mrf.mxu0
    %v5837 = vadd.f32 %v5548, %v5836
    %v5838 = vand.u32 %v1333, 4294901760
    %5839 = vmatmul.f32.gmra.mxu0 %v5838
    %v5840 = vpop.f32.mrf.mxu0
    %v5841 = vadd.f32 %v5552, %v5840
    %v5842 = vand.u32 %v1334, 4294901760
    %5843 = vmatmul.f32.gmra.mxu0 %v5842
    %v5844 = vpop.f32.mrf.mxu0
    %v5845 = vadd.f32 %v5556, %v5844
    %v5846 = vand.u32 %v1335, 4294901760
    %5847 = vmatmul.f32.gmra.mxu0 %v5846
    %v5848 = vpop.f32.mrf.mxu0
    %v5849 = vadd.f32 %v5560, %v5848
    %v5850 = vand.u32 %v1336, 4294901760
    %5851 = vmatmul.f32.gmra.mxu0 %v5850
    %v5852 = vpop.f32.mrf.mxu0
    %v5853 = vadd.f32 %v5564, %v5852
    %v5854 = vand.u32 %v1337, 4294901760
    %5855 = vmatmul.f32.gmra.mxu0 %v5854
    %v5856 = vpop.f32.mrf.mxu0
    %v5857 = vadd.f32 %v5568, %v5856
    %v5858 = vand.u32 %v1338, 4294901760
    %5859 = vmatmul.f32.gmra.mxu0 %v5858
    %v5860 = vpop.f32.mrf.mxu0
    %v5861 = vadd.f32 %v5572, %v5860
    %v5862 = vand.u32 %v1339, 4294901760
    %5863 = vmatmul.f32.gmra.mxu0 %v5862
    %v5864 = vpop.f32.mrf.mxu0
    %v5865 = vadd.f32 %v5576, %v5864
    %v5866 = vand.u32 %v1340, 4294901760
    %5867 = vmatmul.f32.gmra.mxu0 %v5866
    %v5868 = vpop.f32.mrf.mxu0
    %v5869 = vadd.f32 %v5580, %v5868
    %v5870 = vand.u32 %v1341, 4294901760
    %5871 = vmatmul.f32.gmra.mxu0 %v5870
    %v5872 = vpop.f32.mrf.mxu0
    %v5873 = vadd.f32 %v5584, %v5872
    %v5874 = vand.u32 %v1342, 4294901760
    %5875 = vmatmul.f32.gmra.mxu0 %v5874
    %v5876 = vpop.f32.mrf.mxu0
    %v5877 = vadd.f32 %v5588, %v5876
    %v5878 = vand.u32 %v1343, 4294901760
    %5879 = vmatmul.f32.gmra.mxu0 %v5878
    %v5880 = vpop.f32.mrf.mxu0
    %v5881 = vadd.f32 %v5592, %v5880
    %v5882 = vand.u32 %v1344, 4294901760
    %5883 = vmatmul.f32.gmra.mxu0 %v5882
    %v5884 = vpop.f32.mrf.mxu0
    %v5885 = vadd.f32 %v5596, %v5884
    %v5886 = vand.u32 %v1345, 4294901760
    %5887 = vmatmul.f32.gmra.mxu0 %v5886
    %v5888 = vpop.f32.mrf.mxu0
    %v5889 = vadd.f32 %v5600, %v5888
    %v5890 = vand.u32 %v1346, 4294901760
    %5891 = vmatmul.f32.gmra.mxu0 %v5890
    %v5892 = vpop.f32.mrf.mxu0
    %v5893 = vadd.f32 %v5604, %v5892
    %v5894 = vand.u32 %v1347, 4294901760
    %5895 = vmatmul.f32.gmra.mxu0 %v5894
    %v5896 = vpop.f32.mrf.mxu0
    %v5897 = vadd.f32 %v5608, %v5896
    %v5898 = vand.u32 %v1348, 4294901760
    %5899 = vmatmul.f32.gmra.mxu0 %v5898
    %v5900 = vpop.f32.mrf.mxu0
    %v5901 = vadd.f32 %v5612, %v5900
    %v5902 = vand.u32 %v1349, 4294901760
    %5903 = vmatmul.f32.gmra.mxu0 %v5902
    %v5904 = vpop.f32.mrf.mxu0
    %v5905 = vadd.f32 %v5616, %v5904
    %v5906 = vand.u32 %v1350, 4294901760
    %5907 = vmatmul.f32.gmra.mxu0 %v5906
    %v5908 = vpop.f32.mrf.mxu0
    %v5909 = vadd.f32 %v5620, %v5908
    %v5910 = vand.u32 %v1351, 4294901760
    %5911 = vmatmul.f32.gmra.mxu0 %v5910
    %v5912 = vpop.f32.mrf.mxu0
    %v5913 = vadd.f32 %v5624, %v5912
    %v5914 = vand.u32 %v1352, 4294901760
    %5915 = vmatmul.f32.gmra.mxu0 %v5914
    %v5916 = vpop.f32.mrf.mxu0
    %v5917 = vadd.f32 %v5628, %v5916
    %v5918 = vand.u32 %v1353, 4294901760
    %5919 = vmatmul.f32.gmra.mxu0 %v5918
    %v5920 = vpop.f32.mrf.mxu0
    %v5921 = vadd.f32 %v5632, %v5920
    %v5922 = vand.u32 %v1354, 4294901760
    %5923 = vmatmul.f32.gmra.mxu0 %v5922
    %v5924 = vpop.f32.mrf.mxu0
    %v5925 = vadd.f32 %v5636, %v5924
    %v5926 = vand.u32 %v1355, 4294901760
    %5927 = vmatmul.f32.gmra.mxu0 %v5926
    %v5928 = vpop.f32.mrf.mxu0
    %v5929 = vadd.f32 %v5640, %v5928
    %v5930 = vand.u32 %v1356, 4294901760
    %5931 = vmatmul.f32.gmra.mxu0 %v5930
    %v5932 = vpop.f32.mrf.mxu0
    %v5933 = vadd.f32 %v5644, %v5932
    %v5934 = vand.u32 %v1357, 4294901760
    %5935 = vmatmul.f32.gmra.mxu0 %v5934
    %v5936 = vpop.f32.mrf.mxu0
    %v5937 = vadd.f32 %v5648, %v5936
    %v5938 = vand.u32 %v1358, 4294901760
    %5939 = vmatmul.f32.gmra.mxu0 %v5938
    %v5940 = vpop.f32.mrf.mxu0
    %v5941 = vadd.f32 %v5652, %v5940
    %v5942 = vand.u32 %v1359, 4294901760
    %5943 = vmatmul.f32.gmra.mxu0 %v5942
    %v5944 = vpop.f32.mrf.mxu0
    %v5945 = vadd.f32 %v5656, %v5944
    %v5946 = vand.u32 %v1360, 4294901760
    %5947 = vmatmul.f32.gmra.mxu0 %v5946
    %v5948 = vpop.f32.mrf.mxu0
    %v5949 = vadd.f32 %v5660, %v5948
    %v5950 = vand.u32 %v1361, 4294901760
    %5951 = vmatmul.f32.gmra.mxu0 %v5950
    %v5952 = vpop.f32.mrf.mxu0
    %v5953 = vadd.f32 %v5664, %v5952
    %v5954 = vand.u32 %v1362, 4294901760
    %5955 = vmatmul.f32.gmra.mxu0 %v5954
    %v5956 = vpop.f32.mrf.mxu0
    %v5957 = vadd.f32 %v5668, %v5956
    %v5958 = vand.u32 %v1363, 4294901760
    %5959 = vmatmul.f32.gmra.mxu0 %v5958
    %v5960 = vpop.f32.mrf.mxu0
    %v5961 = vadd.f32 %v5672, %v5960
    %v5962 = vand.u32 %v1364, 4294901760
    %5963 = vmatmul.f32.gmra.mxu0 %v5962
    %v5964 = vpop.f32.mrf.mxu0
    %v5965 = vadd.f32 %v5676, %v5964
    %v5966 = vand.u32 %v1365, 4294901760
    %5967 = vmatmul.f32.gmra.mxu0 %v5966
    %v5968 = vpop.f32.mrf.mxu0
    %v5969 = vadd.f32 %v5680, %v5968
    %v5970 = vand.u32 %v1366, 4294901760
    %5971 = vmatmul.f32.gmra.mxu0 %v5970
    %v5972 = vpop.f32.mrf.mxu0
    %v5973 = vadd.f32 %v5684, %v5972
    %v5974 = vand.u32 %v1367, 4294901760
    %5975 = vmatmul.f32.gmra.mxu0 %v5974
    %v5976 = vpop.f32.mrf.mxu0
    %v5977 = vadd.f32 %v5688, %v5976
    %v5978 = vand.u32 %v1368, 4294901760
    %5979 = vmatmul.f32.gmra.mxu0 %v5978
    %v5980 = vpop.f32.mrf.mxu0
    %v5981 = vadd.f32 %v5692, %v5980
    %v5982 = vand.u32 %v1369, 4294901760
    %5983 = vmatmul.f32.gmra.mxu0 %v5982
    %v5984 = vpop.f32.mrf.mxu0
    %v5985 = vadd.f32 %v5696, %v5984
    %v5986 = vand.u32 %v1370, 4294901760
    %5987 = vmatmul.f32.gmra.mxu0 %v5986
    %v5988 = vpop.f32.mrf.mxu0
    %v5989 = vadd.f32 %v5700, %v5988
    %v5990 = vand.u32 %v1371, 4294901760
    %5991 = vmatmul.f32.gmra.mxu0 %v5990
    %v5992 = vpop.f32.mrf.mxu0
    %v5993 = vadd.f32 %v5704, %v5992
    %v5994 = vand.u32 %v1372, 4294901760
    %5995 = vmatmul.f32.gmra.mxu0 %v5994
    %v5996 = vpop.f32.mrf.mxu0
    %v5997 = vadd.f32 %v5708, %v5996
    %5998 = vdwg.mxu0
    %v5999 = vmax.f32 %v3451, 0.0
    %v6000 = vmax.f32 %v5745, 0.0
    %v6001 = vmax.f32 %v3455, 0.0
    %v6002 = vmax.f32 %v5749, 0.0
    %v6003 = vmax.f32 %v3459, 0.0
    %v6004 = vmax.f32 %v5753, 0.0
    %v6005 = vmax.f32 %v3463, 0.0
    %v6006 = vmax.f32 %v5757, 0.0
    %v6007 = vmax.f32 %v3467, 0.0
    %v6008 = vmax.f32 %v5761, 0.0
    %v6009 = vmax.f32 %v3471, 0.0
    %v6010 = vmax.f32 %v5765, 0.0
    %v6011 = vmax.f32 %v3475, 0.0
    %v6012 = vmax.f32 %v5769, 0.0
    %v6013 = vmax.f32 %v3479, 0.0
    %v6014 = vmax.f32 %v5773, 0.0
    %v6015 = vmax.f32 %v3483, 0.0
    %v6016 = vmax.f32 %v5777, 0.0
    %v6017 = vmax.f32 %v3487, 0.0
    %v6018 = vmax.f32 %v5781, 0.0
    %v6019 = vmax.f32 %v3491, 0.0
    %v6020 = vmax.f32 %v5785, 0.0
    %v6021 = vmax.f32 %v3495, 0.0
    %v6022 = vmax.f32 %v5789, 0.0
    %v6023 = vmax.f32 %v3499, 0.0
    %v6024 = vmax.f32 %v5793, 0.0
    %v6025 = vmax.f32 %v3503, 0.0
    %v6026 = vmax.f32 %v5797, 0.0
    %v6027 = vmax.f32 %v3507, 0.0
    %v6028 = vmax.f32 %v5801, 0.0
    %v6029 = vmax.f32 %v3511, 0.0
    %v6030 = vmax.f32 %v5805, 0.0
    %v6031 = vmax.f32 %v3515, 0.0
    %v6032 = vmax.f32 %v5809, 0.0
    %v6033 = vmax.f32 %v3519, 0.0
    %v6034 = vmax.f32 %v5813, 0.0
    %v6035 = vmax.f32 %v3523, 0.0
    %v6036 = vmax.f32 %v5817, 0.0
    %v6037 = vmax.f32 %v3527, 0.0
    %v6038 = vmax.f32 %v5821, 0.0
    %v6039 = vmax.f32 %v3531, 0.0
    %v6040 = vmax.f32 %v5825, 0.0
    %v6041 = vmax.f32 %v3535, 0.0
    %v6042 = vmax.f32 %v5829, 0.0
    %v6043 = vmax.f32 %v3539, 0.0
    %v6044 = vmax.f32 %v5833, 0.0
    %v6045 = vmax.f32 %v3543, 0.0
    %v6046 = vmax.f32 %v5837, 0.0
    %v6047 = vmax.f32 %v3547, 0.0
    %v6048 = vmax.f32 %v5841, 0.0
    %v6049 = vmax.f32 %v3551, 0.0
    %v6050 = vmax.f32 %v5845, 0.0
    %v6051 = vmax.f32 %v3555, 0.0
    %v6052 = vmax.f32 %v5849, 0.0
    %v6053 = vmax.f32 %v3559, 0.0
    %v6054 = vmax.f32 %v5853, 0.0
    %v6055 = vmax.f32 %v3563, 0.0
    %v6056 = vmax.f32 %v5857, 0.0
    %v6057 = vmax.f32 %v3567, 0.0
    %v6058 = vmax.f32 %v5861, 0.0
    %v6059 = vmax.f32 %v3571, 0.0
    %v6060 = vmax.f32 %v5865, 0.0
    %v6061 = vmax.f32 %v3575, 0.0
    %v6062 = vmax.f32 %v5869, 0.0
    %v6063 = vmax.f32 %v3579, 0.0
    %v6064 = vmax.f32 %v5873, 0.0
    %v6065 = vmax.f32 %v3583, 0.0
    %v6066 = vmax.f32 %v5877, 0.0
    %v6067 = vmax.f32 %v3587, 0.0
    %v6068 = vmax.f32 %v5881, 0.0
    %v6069 = vmax.f32 %v3591, 0.0
    %v6070 = vmax.f32 %v5885, 0.0
    %v6071 = vmax.f32 %v3595, 0.0
    %v6072 = vmax.f32 %v5889, 0.0
    %v6073 = vmax.f32 %v3599, 0.0
    %v6074 = vmax.f32 %v5893, 0.0
    %v6075 = vmax.f32 %v3603, 0.0
    %v6076 = vmax.f32 %v5897, 0.0
    %v6077 = vmax.f32 %v3607, 0.0
    %v6078 = vmax.f32 %v5901, 0.0
    %v6079 = vmax.f32 %v3611, 0.0
    %v6080 = vmax.f32 %v5905, 0.0
    %v6081 = vmax.f32 %v3615, 0.0
    %v6082 = vmax.f32 %v5909, 0.0
    %v6083 = vmax.f32 %v3619, 0.0
    %v6084 = vmax.f32 %v5913, 0.0
    %v6085 = vmax.f32 %v3623, 0.0
    %v6086 = vmax.f32 %v5917, 0.0
    %v6087 = vmax.f32 %v3627, 0.0
    %v6088 = vmax.f32 %v5921, 0.0
    %v6089 = vmax.f32 %v3631, 0.0
    %v6090 = vmax.f32 %v5925, 0.0
    %v6091 = vmax.f32 %v3635, 0.0
    %v6092 = vmax.f32 %v5929, 0.0
    %v6093 = vmax.f32 %v3639, 0.0
    %v6094 = vmax.f32 %v5933, 0.0
    %v6095 = vmax.f32 %v3643, 0.0
    %v6096 = vmax.f32 %v5937, 0.0
    %v6097 = vmax.f32 %v3647, 0.0
    %v6098 = vmax.f32 %v5941, 0.0
    %v6099 = vmax.f32 %v3651, 0.0
    %v6100 = vmax.f32 %v5945, 0.0
    %v6101 = vmax.f32 %v3655, 0.0
    %v6102 = vmax.f32 %v5949, 0.0
    %v6103 = vmax.f32 %v3659, 0.0
    %v6104 = vmax.f32 %v5953, 0.0
    %v6105 = vmax.f32 %v3663, 0.0
    %v6106 = vmax.f32 %v5957, 0.0
    %v6107 = vmax.f32 %v3667, 0.0
    %v6108 = vmax.f32 %v5961, 0.0
    %v6109 = vmax.f32 %v3671, 0.0
    %v6110 = vmax.f32 %v5965, 0.0
    %v6111 = vmax.f32 %v3675, 0.0
    %v6112 = vmax.f32 %v5969, 0.0
    %v6113 = vmax.f32 %v3679, 0.0
    %v6114 = vmax.f32 %v5973, 0.0
    %v6115 = vmax.f32 %v3683, 0.0
    %v6116 = vmax.f32 %v5977, 0.0
    %v6117 = vmax.f32 %v3687, 0.0
    %v6118 = vmax.f32 %v5981, 0.0
    %v6119 = vmax.f32 %v3691, 0.0
    %v6120 = vmax.f32 %v5985, 0.0
    %v6121 = vmax.f32 %v3695, 0.0
    %v6122 = vmax.f32 %v5989, 0.0
    %v6123 = vmax.f32 %v3699, 0.0
    %v6124 = vmax.f32 %v5993, 0.0
    %v6125 = vmax.f32 %v3703, 0.0
    %v6126 = vmax.f32 %v5997, 0.0
    %6127 = vst [vmem:[#allocation2] sm:$0xff] %v5999
    %6128 = vst [vmem:[#allocation2 + $0x8] sm:$0xff] %v6000
    %6129 = vst [vmem:[#allocation2 + $0x10] sm:$0xff] %v6001
    %6130 = vst [vmem:[#allocation2 + $0x18] sm:$0xff] %v6002
    %6131 = vst [vmem:[#allocation2 + $0x20] sm:$0xff] %v6003
    %6132 = vst [vmem:[#allocation2 + $0x28] sm:$0xff] %v6004
    %6133 = vst [vmem:[#allocation2 + $0x30] sm:$0xff] %v6005
    %6134 = vst [vmem:[#allocation2 + $0x38] sm:$0xff] %v6006
    %6135 = vst [vmem:[#allocation2 + $0x40] sm:$0xff] %v6007
    %6136 = vst [vmem:[#allocation2 + $0x48] sm:$0xff] %v6008
    %6137 = vst [vmem:[#allocation2 + $0x50] sm:$0xff] %v6009
    %6138 = vst [vmem:[#allocation2 + $0x58] sm:$0xff] %v6010
    %6139 = vst [vmem:[#allocation2 + $0x60] sm:$0xff] %v6011
    %6140 = vst [vmem:[#allocation2 + $0x68] sm:$0xff] %v6012
    %6141 = vst [vmem:[#allocation2 + $0x70] sm:$0xff] %v6013
    %6142 = vst [vmem:[#allocation2 + $0x78] sm:$0xff] %v6014
    %6143 = vst [vmem:[#allocation2 + $0x80] sm:$0xff] %v6015
    %6144 = vst [vmem:[#allocation2 + $0x88] sm:$0xff] %v6016
    %6145 = vst [vmem:[#allocation2 + $0x90] sm:$0xff] %v6017
    %6146 = vst [vmem:[#allocation2 + $0x98] sm:$0xff] %v6018
    %6147 = vst [vmem:[#allocation2 + $0xa0] sm:$0xff] %v6019
    %6148 = vst [vmem:[#allocation2 + $0xa8] sm:$0xff] %v6020
    %6149 = vst [vmem:[#allocation2 + $0xb0] sm:$0xff] %v6021
    %6150 = vst [vmem:[#allocation2 + $0xb8] sm:$0xff] %v6022
    %6151 = vst [vmem:[#allocation2 + $0xc0] sm:$0xff] %v6023
    %6152 = vst [vmem:[#allocation2 + $0xc8] sm:$0xff] %v6024
    %6153 = vst [vmem:[#allocation2 + $0xd0] sm:$0xff] %v6025
    %6154 = vst [vmem:[#allocation2 + $0xd8] sm:$0xff] %v6026
    %6155 = vst [vmem:[#allocation2 + $0xe0] sm:$0xff] %v6027
    %6156 = vst [vmem:[#allocation2 + $0xe8] sm:$0xff] %v6028
    %6157 = vst [vmem:[#allocation2 + $0xf0] sm:$0xff] %v6029
    %6158 = vst [vmem:[#allocation2 + $0xf8] sm:$0xff] %v6030
    %6159 = vst [vmem:[#allocation2 + $0x100] sm:$0xff] %v6031
    %6160 = vst [vmem:[#allocation2 + $0x108] sm:$0xff] %v6032
    %6161 = vst [vmem:[#allocation2 + $0x110] sm:$0xff] %v6033
    %6162 = vst [vmem:[#allocation2 + $0x118] sm:$0xff] %v6034
    %6163 = vst [vmem:[#allocation2 + $0x120] sm:$0xff] %v6035
    %6164 = vst [vmem:[#allocation2 + $0x128] sm:$0xff] %v6036
    %6165 = vst [vmem:[#allocation2 + $0x130] sm:$0xff] %v6037
    %6166 = vst [vmem:[#allocation2 + $0x138] sm:$0xff] %v6038
    %6167 = vst [vmem:[#allocation2 + $0x140] sm:$0xff] %v6039
    %6168 = vst [vmem:[#allocation2 + $0x148] sm:$0xff] %v6040
    %6169 = vst [vmem:[#allocation2 + $0x150] sm:$0xff] %v6041
    %6170 = vst [vmem:[#allocation2 + $0x158] sm:$0xff] %v6042
    %6171 = vst [vmem:[#allocation2 + $0x160] sm:$0xff] %v6043
    %6172 = vst [vmem:[#allocation2 + $0x168] sm:$0xff] %v6044
    %6173 = vst [vmem:[#allocation2 + $0x170] sm:$0xff] %v6045
    %6174 = vst [vmem:[#allocation2 + $0x178] sm:$0xff] %v6046
    %6175 = vst [vmem:[#allocation2 + $0x180] sm:$0xff] %v6047
    %6176 = vst [vmem:[#allocation2 + $0x188] sm:$0xff] %v6048
    %6177 = vst [vmem:[#allocation2 + $0x190] sm:$0xff] %v6049
    %6178 = vst [vmem:[#allocation2 + $0x198] sm:$0xff] %v6050
    %6179 = vst [vmem:[#allocation2 + $0x1a0] sm:$0xff] %v6051
    %6180 = vst [vmem:[#allocation2 + $0x1a8] sm:$0xff] %v6052
    %6181 = vst [vmem:[#allocation2 + $0x1b0] sm:$0xff] %v6053
    %6182 = vst [vmem:[#allocation2 + $0x1b8] sm:$0xff] %v6054
    %6183 = vst [vmem:[#allocation2 + $0x1c0] sm:$0xff] %v6055
    %6184 = vst [vmem:[#allocation2 + $0x1c8] sm:$0xff] %v6056
    %6185 = vst [vmem:[#allocation2 + $0x1d0] sm:$0xff] %v6057
    %6186 = vst [vmem:[#allocation2 + $0x1d8] sm:$0xff] %v6058
    %6187 = vst [vmem:[#allocation2 + $0x1e0] sm:$0xff] %v6059
    %6188 = vst [vmem:[#allocation2 + $0x1e8] sm:$0xff] %v6060
    %6189 = vst [vmem:[#allocation2 + $0x1f0] sm:$0xff] %v6061
    %6190 = vst [vmem:[#allocation2 + $0x1f8] sm:$0xff] %v6062
    %6191 = vst [vmem:[#allocation2 + $0x200] sm:$0xff] %v6063
    %6192 = vst [vmem:[#allocation2 + $0x208] sm:$0xff] %v6064
    %6193 = vst [vmem:[#allocation2 + $0x210] sm:$0xff] %v6065
    %6194 = vst [vmem:[#allocation2 + $0x218] sm:$0xff] %v6066
    %6195 = vst [vmem:[#allocation2 + $0x220] sm:$0xff] %v6067
    %6196 = vst [vmem:[#allocation2 + $0x228] sm:$0xff] %v6068
    %6197 = vst [vmem:[#allocation2 + $0x230] sm:$0xff] %v6069
    %6198 = vst [vmem:[#allocation2 + $0x238] sm:$0xff] %v6070
    %6199 = vst [vmem:[#allocation2 + $0x240] sm:$0xff] %v6071
    %6200 = vst [vmem:[#allocation2 + $0x248] sm:$0xff] %v6072
    %6201 = vst [vmem:[#allocation2 + $0x250] sm:$0xff] %v6073
    %6202 = vst [vmem:[#allocation2 + $0x258] sm:$0xff] %v6074
    %6203 = vst [vmem:[#allocation2 + $0x260] sm:$0xff] %v6075
    %6204 = vst [vmem:[#allocation2 + $0x268] sm:$0xff] %v6076
    %6205 = vst [vmem:[#allocation2 + $0x270] sm:$0xff] %v6077
    %6206 = vst [vmem:[#allocation2 + $0x278] sm:$0xff] %v6078
    %6207 = vst [vmem:[#allocation2 + $0x280] sm:$0xff] %v6079
    %6208 = vst [vmem:[#allocation2 + $0x288] sm:$0xff] %v6080
    %6209 = vst [vmem:[#allocation2 + $0x290] sm:$0xff] %v6081
    %6210 = vst [vmem:[#allocation2 + $0x298] sm:$0xff] %v6082
    %6211 = vst [vmem:[#allocation2 + $0x2a0] sm:$0xff] %v6083
    %6212 = vst [vmem:[#allocation2 + $0x2a8] sm:$0xff] %v6084
    %6213 = vst [vmem:[#allocation2 + $0x2b0] sm:$0xff] %v6085
    %6214 = vst [vmem:[#allocation2 + $0x2b8] sm:$0xff] %v6086
    %6215 = vst [vmem:[#allocation2 + $0x2c0] sm:$0xff] %v6087
    %6216 = vst [vmem:[#allocation2 + $0x2c8] sm:$0xff] %v6088
    %6217 = vst [vmem:[#allocation2 + $0x2d0] sm:$0xff] %v6089
    %6218 = vst [vmem:[#allocation2 + $0x2d8] sm:$0xff] %v6090
    %6219 = vst [vmem:[#allocation2 + $0x2e0] sm:$0xff] %v6091
    %6220 = vst [vmem:[#allocation2 + $0x2e8] sm:$0xff] %v6092
    %6221 = vst [vmem:[#allocation2 + $0x2f0] sm:$0xff] %v6093
    %6222 = vst [vmem:[#allocation2 + $0x2f8] sm:$0xff] %v6094
    %6223 = vst [vmem:[#allocation2 + $0x300] sm:$0xff] %v6095
    %6224 = vst [vmem:[#allocation2 + $0x308] sm:$0xff] %v6096
    %6225 = vst [vmem:[#allocation2 + $0x310] sm:$0xff] %v6097
    %6226 = vst [vmem:[#allocation2 + $0x318] sm:$0xff] %v6098
    %6227 = vst [vmem:[#allocation2 + $0x320] sm:$0xff] %v6099
    %6228 = vst [vmem:[#allocation2 + $0x328] sm:$0xff] %v6100
    %6229 = vst [vmem:[#allocation2 + $0x330] sm:$0xff] %v6101
    %6230 = vst [vmem:[#allocation2 + $0x338] sm:$0xff] %v6102
    %6231 = vst [vmem:[#allocation2 + $0x340] sm:$0xff] %v6103
    %6232 = vst [vmem:[#allocation2 + $0x348] sm:$0xff] %v6104
    %6233 = vst [vmem:[#allocation2 + $0x350] sm:$0xff] %v6105
    %6234 = vst [vmem:[#allocation2 + $0x358] sm:$0xff] %v6106
    %6235 = vst [vmem:[#allocation2 + $0x360] sm:$0xff] %v6107
    %6236 = vst [vmem:[#allocation2 + $0x368] sm:$0xff] %v6108
    %6237 = vst [vmem:[#allocation2 + $0x370] sm:$0xff] %v6109
    %6238 = vst [vmem:[#allocation2 + $0x378] sm:$0xff] %v6110
    %6239 = vst [vmem:[#allocation2 + $0x380] sm:$0xff] %v6111
    %6240 = vst [vmem:[#allocation2 + $0x388] sm:$0xff] %v6112
    %6241 = vst [vmem:[#allocation2 + $0x390] sm:$0xff] %v6113
    %6242 = vst [vmem:[#allocation2 + $0x398] sm:$0xff] %v6114
    %6243 = vst [vmem:[#allocation2 + $0x3a0] sm:$0xff] %v6115
    %6244 = vst [vmem:[#allocation2 + $0x3a8] sm:$0xff] %v6116
    %6245 = vst [vmem:[#allocation2 + $0x3b0] sm:$0xff] %v6117
    %6246 = vst [vmem:[#allocation2 + $0x3b8] sm:$0xff] %v6118
    %6247 = vst [vmem:[#allocation2 + $0x3c0] sm:$0xff] %v6119
    %6248 = vst [vmem:[#allocation2 + $0x3c8] sm:$0xff] %v6120
    %6249 = vst [vmem:[#allocation2 + $0x3d0] sm:$0xff] %v6121
    %6250 = vst [vmem:[#allocation2 + $0x3d8] sm:$0xff] %v6122
    %6251 = vst [vmem:[#allocation2 + $0x3e0] sm:$0xff] %v6123
    %6252 = vst [vmem:[#allocation2 + $0x3e8] sm:$0xff] %v6124
    %6253 = vst [vmem:[#allocation2 + $0x3f0] sm:$0xff] %v6125
    %6254 = vst [vmem:[#allocation2 + $0x3f8] sm:$0xff] %v6126
    // Predicated region
    $region22: #{clinical_feature_encoder.1} parent=1 // pred_check
      _
    $region23: #{clinical_feature_encoder.1} parent=1 // pred_check_branch
      %6256 = sbr.rel (0) target = $region25
    $region24: #{clinical_feature_encoder.1} parent=1 // pred_region
      %6258 = vsyncadd [#allocation3], 0
      %s6259 = sshll.u32 [#allocation2], 4
      %s6260 = int_to_ptr.vmem [resolvable:$true] %s6259
      %s6261 = sshll.u32 %s5, 4
      %s6262 = int_to_ptr.hbm [resolvable:$true] %s6261
      %6267 = dma.vmem_to_hbm [thread:$0]  %s6260, 16384, %s6262, [#allocation3], 256, 256, 16
    $region25: #{clinical_feature_encoder.1} parent=1 // pred_fallthru
      _
    // Predicated region
    $region26: #{clinical_feature_encoder.1} parent=1 // pred_check
      _
    $region27: #{clinical_feature_encoder.1} parent=1 // pred_check_branch
      %6269 = sbr.rel (0) target = $region29
    $region28: #{clinical_feature_encoder.1} parent=1 // pred_region
      %6271 = dma.done [#allocation3], 16384
    $region29: #{clinical_feature_encoder.1} parent=1 // pred_fallthru
      _
    %6272 = vsyncpa [#allocation3], 1

</llo_original>
